<compile_context>
chip_gen: v7x
topology: tpu7x:2x2x1
jax: 0.10.0
libtpu: 0.0.40
codegen_flags: <defaults>
</compile_context>

<pallas_src>
import functools

import jax
import jax.numpy as jnp
from jax.experimental import pallas as pl
from jax.experimental.pallas import tpu as pltpu


def _attention_kernel(x_cn_ref, x_q_ref, wq_ref, wk_ref, wv_ref, wout_ref,
                      bout_ref, o_ref, *, heads):
    """One grid step == (batch element b, query tile qi).

    x_cn_ref : (1, C, N)         input, channels on sublanes / pixels on lanes
    x_q_ref  : (1, TQ, C)        query-tile slice of the input, pixel-major
    wq_ref   : (heads, C, dh)    per-head q projection (softmax scale folded in)
    wk_ref   : (heads, dh, C)    per-head k projection
    wv_ref   : (heads, dh, C)    per-head v projection
    wout_ref : (heads, C, dh)    per-head slice of the output projection
    bout_ref : (C, 1)            output-projection bias
    o_ref    : (1, C, TQ)        output tile (lane-dense store)
    """
    f32 = jnp.float32
    bf16 = jnp.bfloat16

    x_cn = x_cn_ref[0]                       # (C, N)  f32
    x_q = x_q_ref[0]                         # (TQ, C) f32
    c_out, tq = o_ref.shape[1], o_ref.shape[2]

    def head_body(h, y):
        # --- per-head 1x1-conv projections (contraction over the C channels) ---
        q = jnp.dot(x_q, wq_ref[h], preferred_element_type=f32)        # (TQ, dh)
        k = jnp.dot(wk_ref[h], x_cn, preferred_element_type=f32)       # (dh, N)
        v = jnp.dot(wv_ref[h], x_cn, preferred_element_type=f32)       # (dh, N)

        # bf16 MXU operands, f32 accumulation (perf review item #2).
        q_bf = q.astype(bf16)
        k_bf = k.astype(bf16)
        v_bf = v.astype(bf16)

        # sim[i, j] = sum_d q[i, d] * k[d, j]                        -> (TQ, N)
        sim = jnp.dot(q_bf, k_bf, preferred_element_type=f32)
        # numerically stable softmax; exp and normalization kept in f32 (v5e).
        sim = sim - jnp.max(sim, axis=-1, keepdims=True)
        p = jnp.exp(sim)
        inv_l = pl.reciprocal(jnp.sum(p, axis=-1, keepdims=True), approx=True)
        p_bf = (p * inv_l).astype(bf16)                               # (TQ, N)

        # head_out[d, i] = sum_j v[d, j] * attn[i, j]   (d-major so the final
        # projection directly produces a lane-dense (C, TQ) tile).
        head_out = jax.lax.dot_general(
            v_bf, p_bf, (((1,), (1,)), ((), ())),
            preferred_element_type=f32)                               # (dh, TQ)

        # Fold this head's slice of the 1x1 output conv: (C, dh) @ (dh, TQ).
        return y + jnp.dot(wout_ref[h], head_out, preferred_element_type=f32)

    y0 = jnp.zeros((c_out, tq), f32)
    y = jax.lax.fori_loop(0, heads, head_body, y0, unroll=True)
    o_ref[0] = (y + bout_ref[...]).astype(o_ref.dtype)


def attention_pallas(x_nchw, wqkv, wout, bout, *, heads, dim_head):
    """x_nchw: (B, C, H, W); wqkv: (3*hidden, C, 1, 1); wout: (C, hidden, 1, 1)."""
    b, c, h, w = x_nchw.shape
    n = h * w
    scale = float(dim_head) ** -0.5

    # Pixels on lanes: (B, C, N).  No output-side transpose needed anymore.
    x_cn = x_nchw.reshape(b, c, n)
    # Small pixel-major copy, used only for the Q projection.
    x_nc = jnp.transpose(x_cn, (0, 2, 1))                     # (B, N, C)

    # Head-major weight prep (perf review item: never slice 3*hidden in-kernel).
    w3 = wqkv.reshape(3, heads, dim_head, c)                  # (3, H, dh, C)
    wq_t = jnp.transpose(w3[0], (0, 2, 1)) * scale            # (H, C, dh), scale folded
    wk_h = w3[1]                                              # (H, dh, C)
    wv_h = w3[2]                                              # (H, dh, C)
    wout_h = jnp.transpose(wout.reshape(c, heads, dim_head), (1, 0, 2))  # (H, C, dh)
    bout_2d = bout.reshape(c, 1)

    # Query-tile size: lane-aligned (multiple of 128) when tiling, else full N.
    if n % 256 == 0:
        tq = 256
    elif n % 128 == 0:
        tq = 128
    else:
        tq = n
    n_qt = n // tq

    kernel = functools.partial(_attention_kernel, heads=heads)

    out = pl.pallas_call(
        kernel,
        out_shape=jax.ShapeDtypeStruct((b, c, n), x_nchw.dtype),
        grid_spec=pltpu.PrefetchScalarGridSpec(
            num_scalar_prefetch=0,
            grid=(b, n_qt),
            in_specs=[
                pl.BlockSpec((1, c, n), lambda bi, qi: (bi, 0, 0)),          # x (C, N)
                pl.BlockSpec((1, tq, c), lambda bi, qi: (bi, qi, 0)),        # x q-tile
                pl.BlockSpec((heads, c, dim_head), lambda bi, qi: (0, 0, 0)),  # wq
                pl.BlockSpec((heads, dim_head, c), lambda bi, qi: (0, 0, 0)),  # wk
                pl.BlockSpec((heads, dim_head, c), lambda bi, qi: (0, 0, 0)),  # wv
                pl.BlockSpec((heads, c, dim_head), lambda bi, qi: (0, 0, 0)),  # wout
                pl.BlockSpec((c, 1), lambda bi, qi: (0, 0)),                   # bias
            ],
            out_specs=pl.BlockSpec((1, c, tq), lambda bi, qi: (bi, 0, qi)),
        ),
        compiler_params=pltpu.CompilerParams(
            dimension_semantics=("parallel", "parallel")),
    )(x_cn, x_nc, wq_t, wk_h, wv_h, wout_h, bout_2d)

    # (B, C, N) -> NCHW is a pure reshape (no transpose).
    return out.reshape(b, c, h, w)


def attention_ref(x_nchw, wqkv, wout, bout, *, heads, dim_head):
    """Pure-JAX reference mirroring the PyTorch forward exactly."""
    b, c, h, w = x_nchw.shape
    n = h * w
    hidden = heads * dim_head
    scale = float(dim_head) ** -0.5
    hp = jax.lax.Precision.HIGHEST

    x = x_nchw.reshape(b, c, n)
    qkv = jnp.einsum('oc,bcn->bon', wqkv.reshape(3 * hidden, c), x, precision=hp)
    q, k, v = jnp.split(qkv, 3, axis=1)
    r1 = lambda t: t.reshape(b, heads, dim_head, n)
    q, k, v = r1(q) * scale, r1(k), r1(v)
    sim = jnp.einsum('bhdi,bhdj->bhij', q, k, precision=hp)
    attn = jax.nn.softmax(sim, axis=-1)
    out = jnp.einsum('bhij,bhdj->bhid', attn, v, precision=hp)
    out = jnp.transpose(out, (0, 1, 3, 2)).reshape(b, hidden, n)
    y = jnp.einsum('oc,bcn->bon', wout.reshape(c, hidden), out, precision=hp)
    y = y + bout[None, :, None]
    return y.reshape(b, c, h, w)


if __name__ == "__main__":
    B, C, H, W = 2, 4, 16, 16
    HEADS, DIM_HEAD = 4, 32
    HIDDEN = HEADS * DIM_HEAD

    key = jax.random.PRNGKey(0)
    k1, k2, k3, k4 = jax.random.split(key, 4)

    # Deterministic synthetic parameters (shapes match the nn.Conv2d weights).
    x = jax.random.normal(k1, (B, C, H, W), jnp.float32)
    wqkv = jax.random.normal(k2, (3 * HIDDEN, C, 1, 1), jnp.float32) / jnp.sqrt(C)
    wout = jax.random.normal(k3, (C, HIDDEN, 1, 1), jnp.float32) / jnp.sqrt(HIDDEN)
    bout = jax.random.normal(k4, (C,), jnp.float32) * 0.01

    y = attention_pallas(x, wqkv, wout, bout, heads=HEADS, dim_head=DIM_HEAD)
    jax.block_until_ready(y)

    y_ref = attention_ref(x, wqkv, wout, bout, heads=HEADS, dim_head=DIM_HEAD)
    assert y.shape == (B, C, H, W)
    assert jnp.allclose(y, y_ref, atol=2e-2, rtol=2e-2), "mismatch vs reference"

    print("KERNEL_OK")
</pallas_src>

<mosaic_0001>
module attributes {stable_mosaic.version = 11 : i64} {
  func.func @_attention_kernel(%arg0: i32, %arg1: i32, %arg2: memref<1x4x256xf32, #tpu.memory_space<vmem>>, %arg3: memref<1x256x4xf32, #tpu.memory_space<vmem>>, %arg4: memref<4x4x32xf32, #tpu.memory_space<vmem>>, %arg5: memref<4x32x4xf32, #tpu.memory_space<vmem>>, %arg6: memref<4x32x4xf32, #tpu.memory_space<vmem>>, %arg7: memref<4x4x32xf32, #tpu.memory_space<vmem>>, %arg8: memref<4x1xf32, #tpu.memory_space<vmem>>, %arg9: memref<1x4x256xf32, #tpu.memory_space<vmem>>) attributes {dimension_semantics = [#tpu.dimension_semantics<parallel>, #tpu.dimension_semantics<parallel>], iteration_bounds = array<i64: 2, 1>, scalar_prefetch = 0 : i64, scratch_operands = 0 : i64, tpu.core_type = #tpu.core_type<tc>, window_params = [{transform_indices = @transform_0, window_bounds = array<i64: 1, 4, 256>}, {transform_indices = @transform_1, window_bounds = array<i64: 1, 256, 4>}, {pipeline_mode = #tpu.pipeline_mode<synchronous>, transform_indices = @transform_2, window_bounds = array<i64: 4, 4, 32>}, {pipeline_mode = #tpu.pipeline_mode<synchronous>, transform_indices = @transform_3, window_bounds = array<i64: 4, 32, 4>}, {pipeline_mode = #tpu.pipeline_mode<synchronous>, transform_indices = @transform_4, window_bounds = array<i64: 4, 32, 4>}, {pipeline_mode = #tpu.pipeline_mode<synchronous>, transform_indices = @transform_5, window_bounds = array<i64: 4, 4, 32>}, {pipeline_mode = #tpu.pipeline_mode<synchronous>, transform_indices = @transform_6, window_bounds = array<i64: 4, 1>}, {transform_indices = @transform_7, window_bounds = array<i64: 1, 4, 256>}]} {
    %c0 = arith.constant 0 : index
    %c0_0 = arith.constant 0 : index
    %c0_1 = arith.constant 0 : index
    %0 = vector.load %arg2[%c0, %c0_0, %c0_1] : memref<1x4x256xf32, #tpu.memory_space<vmem>>, vector<1x4x256xf32>
    %1 = vector.shape_cast %0 : vector<1x4x256xf32> to vector<4x256xf32>
    %c0_2 = arith.constant 0 : index
    %c0_3 = arith.constant 0 : index
    %c0_4 = arith.constant 0 : index
    %2 = vector.load %arg3[%c0_2, %c0_3, %c0_4] : memref<1x256x4xf32, #tpu.memory_space<vmem>>, vector<1x256x4xf32>
    %3 = vector.shape_cast %2 : vector<1x256x4xf32> to vector<256x4xf32>
    %cst = arith.constant 0.000000e+00 : f32
    %4 = vector.broadcast %cst : f32 to vector<4x256xf32>
    %c0_i32 = arith.constant 0 : i32
    %5 = arith.index_cast %c0_i32 : i32 to index
    %c0_5 = arith.constant 0 : index
    %c0_6 = arith.constant 0 : index
    %6 = vector.load %arg4[%5, %c0_5, %c0_6] : memref<4x4x32xf32, #tpu.memory_space<vmem>>, vector<1x4x32xf32>
    %7 = vector.shape_cast %6 : vector<1x4x32xf32> to vector<4x32xf32>
    %cst_7 = arith.constant dense<0.000000e+00> : vector<256x32xf32>
    %8 = tpu.matmul %3, %7, %cst_7 {dimension_numbers = #tpu.dot_dimension_numbers<[1], [0], [0], [1], [0, 0, 1, 1], [], []>} : vector<256x4xf32>, vector<4x32xf32>, vector<256x32xf32> -> vector<256x32xf32>
    %9 = arith.index_cast %c0_i32 : i32 to index
    %c0_8 = arith.constant 0 : index
    %c0_9 = arith.constant 0 : index
    %10 = vector.load %arg5[%9, %c0_8, %c0_9] : memref<4x32x4xf32, #tpu.memory_space<vmem>>, vector<1x32x4xf32>
    %11 = vector.shape_cast %10 : vector<1x32x4xf32> to vector<32x4xf32>
    %cst_10 = arith.constant dense<0.000000e+00> : vector<32x256xf32>
    %12 = tpu.matmul %11, %1, %cst_10 {dimension_numbers = #tpu.dot_dimension_numbers<[1], [0], [0], [1], [0, 0, 1, 1], [], []>} : vector<32x4xf32>, vector<4x256xf32>, vector<32x256xf32> -> vector<32x256xf32>
    %13 = arith.index_cast %c0_i32 : i32 to index
    %c0_11 = arith.constant 0 : index
    %c0_12 = arith.constant 0 : index
    %14 = vector.load %arg6[%13, %c0_11, %c0_12] : memref<4x32x4xf32, #tpu.memory_space<vmem>>, vector<1x32x4xf32>
    %15 = vector.shape_cast %14 : vector<1x32x4xf32> to vector<32x4xf32>
    %cst_13 = arith.constant dense<0.000000e+00> : vector<32x256xf32>
    %16 = tpu.matmul %15, %1, %cst_13 {dimension_numbers = #tpu.dot_dimension_numbers<[1], [0], [0], [1], [0, 0, 1, 1], [], []>} : vector<32x4xf32>, vector<4x256xf32>, vector<32x256xf32> -> vector<32x256xf32>
    %17 = arith.truncf %8 : vector<256x32xf32> to vector<256x32xbf16>
    %18 = arith.truncf %12 : vector<32x256xf32> to vector<32x256xbf16>
    %19 = arith.truncf %16 : vector<32x256xf32> to vector<32x256xbf16>
    %cst_14 = arith.constant dense<0.000000e+00> : vector<256x256xf32>
    %20 = tpu.matmul %17, %18, %cst_14 {dimension_numbers = #tpu.dot_dimension_numbers<[1], [0], [0], [1], [0, 0, 1, 1], [], []>} : vector<256x32xbf16>, vector<32x256xbf16>, vector<256x256xf32> -> vector<256x256xf32>
    %cst_15 = arith.constant dense<0xFF800000> : vector<256xf32>
    %21 = vector.multi_reduction <maximumf>, %20, %cst_15 [1] : vector<256x256xf32> to vector<256xf32>
    %22 = vector.shape_cast %21 : vector<256xf32> to vector<256x1xf32>
    %23 = vector.broadcast %22 : vector<256x1xf32> to vector<256x256xf32>
    %24 = arith.subf %20, %23 : vector<256x256xf32>
    %25 = math.exp %24 : vector<256x256xf32>
    %cst_16 = arith.constant dense<0.000000e+00> : vector<256xf32>
    %26 = vector.multi_reduction <add>, %25, %cst_16 [1] : vector<256x256xf32> to vector<256xf32>
    %27 = vector.shape_cast %26 : vector<256xf32> to vector<256x1xf32>
    %28 = tpu.reciprocal %27 {approx = true} : vector<256x1xf32> -> vector<256x1xf32>
    %29 = vector.broadcast %28 : vector<256x1xf32> to vector<256x256xf32>
    %30 = arith.mulf %25, %29 : vector<256x256xf32>
    %31 = arith.truncf %30 : vector<256x256xf32> to vector<256x256xbf16>
    %cst_17 = arith.constant dense<0.000000e+00> : vector<32x256xf32>
    %32 = tpu.matmul %19, %31, %cst_17 {dimension_numbers = #tpu.dot_dimension_numbers<[1], [1], [0], [0], [0, 0, 1, 0], [], []>} : vector<32x256xbf16>, vector<256x256xbf16>, vector<32x256xf32> -> vector<32x256xf32>
    %33 = arith.index_cast %c0_i32 : i32 to index
    %c0_18 = arith.constant 0 : index
    %c0_19 = arith.constant 0 : index
    %34 = vector.load %arg7[%33, %c0_18, %c0_19] : memref<4x4x32xf32, #tpu.memory_space<vmem>>, vector<1x4x32xf32>
    %35 = vector.shape_cast %34 : vector<1x4x32xf32> to vector<4x32xf32>
    %cst_20 = arith.constant dense<0.000000e+00> : vector<4x256xf32>
    %36 = tpu.matmul %35, %32, %cst_20 {dimension_numbers = #tpu.dot_dimension_numbers<[1], [0], [0], [1], [0, 0, 1, 1], [], []>} : vector<4x32xf32>, vector<32x256xf32>, vector<4x256xf32> -> vector<4x256xf32>
    %37 = arith.addf %4, %36 : vector<4x256xf32>
    %c1_i32 = arith.constant 1 : i32
    %38 = arith.index_cast %c1_i32 : i32 to index
    %c0_21 = arith.constant 0 : index
    %c0_22 = arith.constant 0 : index
    %39 = vector.load %arg4[%38, %c0_21, %c0_22] : memref<4x4x32xf32, #tpu.memory_space<vmem>>, vector<1x4x32xf32>
    %40 = vector.shape_cast %39 : vector<1x4x32xf32> to vector<4x32xf32>
    %cst_23 = arith.constant dense<0.000000e+00> : vector<256x32xf32>
    %41 = tpu.matmul %3, %40, %cst_23 {dimension_numbers = #tpu.dot_dimension_numbers<[1], [0], [0], [1], [0, 0, 1, 1], [], []>} : vector<256x4xf32>, vector<4x32xf32>, vector<256x32xf32> -> vector<256x32xf32>
    %42 = arith.index_cast %c1_i32 : i32 to index
    %c0_24 = arith.constant 0 : index
    %c0_25 = arith.constant 0 : index
    %43 = vector.load %arg5[%42, %c0_24, %c0_25] : memref<4x32x4xf32, #tpu.memory_space<vmem>>, vector<1x32x4xf32>
    %44 = vector.shape_cast %43 : vector<1x32x4xf32> to vector<32x4xf32>
    %cst_26 = arith.constant dense<0.000000e+00> : vector<32x256xf32>
    %45 = tpu.matmul %44, %1, %cst_26 {dimension_numbers = #tpu.dot_dimension_numbers<[1], [0], [0], [1], [0, 0, 1, 1], [], []>} : vector<32x4xf32>, vector<4x256xf32>, vector<32x256xf32> -> vector<32x256xf32>
    %46 = arith.index_cast %c1_i32 : i32 to index
    %c0_27 = arith.constant 0 : index
    %c0_28 = arith.constant 0 : index
    %47 = vector.load %arg6[%46, %c0_27, %c0_28] : memref<4x32x4xf32, #tpu.memory_space<vmem>>, vector<1x32x4xf32>
    %48 = vector.shape_cast %47 : vector<1x32x4xf32> to vector<32x4xf32>
    %cst_29 = arith.constant dense<0.000000e+00> : vector<32x256xf32>
    %49 = tpu.matmul %48, %1, %cst_29 {dimension_numbers = #tpu.dot_dimension_numbers<[1], [0], [0], [1], [0, 0, 1, 1], [], []>} : vector<32x4xf32>, vector<4x256xf32>, vector<32x256xf32> -> vector<32x256xf32>
    %50 = arith.truncf %41 : vector<256x32xf32> to vector<256x32xbf16>
    %51 = arith.truncf %45 : vector<32x256xf32> to vector<32x256xbf16>
    %52 = arith.truncf %49 : vector<32x256xf32> to vector<32x256xbf16>
    %cst_30 = arith.constant dense<0.000000e+00> : vector<256x256xf32>
    %53 = tpu.matmul %50, %51, %cst_30 {dimension_numbers = #tpu.dot_dimension_numbers<[1], [0], [0], [1], [0, 0, 1, 1], [], []>} : vector<256x32xbf16>, vector<32x256xbf16>, vector<256x256xf32> -> vector<256x256xf32>
    %cst_31 = arith.constant dense<0xFF800000> : vector<256xf32>
    %54 = vector.multi_reduction <maximumf>, %53, %cst_31 [1] : vector<256x256xf32> to vector<256xf32>
    %55 = vector.shape_cast %54 : vector<256xf32> to vector<256x1xf32>
    %56 = vector.broadcast %55 : vector<256x1xf32> to vector<256x256xf32>
    %57 = arith.subf %53, %56 : vector<256x256xf32>
    %58 = math.exp %57 : vector<256x256xf32>
    %cst_32 = arith.constant dense<0.000000e+00> : vector<256xf32>
    %59 = vector.multi_reduction <add>, %58, %cst_32 [1] : vector<256x256xf32> to vector<256xf32>
    %60 = vector.shape_cast %59 : vector<256xf32> to vector<256x1xf32>
    %61 = tpu.reciprocal %60 {approx = true} : vector<256x1xf32> -> vector<256x1xf32>
    %62 = vector.broadcast %61 : vector<256x1xf32> to vector<256x256xf32>
    %63 = arith.mulf %58, %62 : vector<256x256xf32>
    %64 = arith.truncf %63 : vector<256x256xf32> to vector<256x256xbf16>
    %cst_33 = arith.constant dense<0.000000e+00> : vector<32x256xf32>
    %65 = tpu.matmul %52, %64, %cst_33 {dimension_numbers = #tpu.dot_dimension_numbers<[1], [1], [0], [0], [0, 0, 1, 0], [], []>} : vector<32x256xbf16>, vector<256x256xbf16>, vector<32x256xf32> -> vector<32x256xf32>
    %66 = arith.index_cast %c1_i32 : i32 to index
    %c0_34 = arith.constant 0 : index
    %c0_35 = arith.constant 0 : index
    %67 = vector.load %arg7[%66, %c0_34, %c0_35] : memref<4x4x32xf32, #tpu.memory_space<vmem>>, vector<1x4x32xf32>
    %68 = vector.shape_cast %67 : vector<1x4x32xf32> to vector<4x32xf32>
    %cst_36 = arith.constant dense<0.000000e+00> : vector<4x256xf32>
    %69 = tpu.matmul %68, %65, %cst_36 {dimension_numbers = #tpu.dot_dimension_numbers<[1], [0], [0], [1], [0, 0, 1, 1], [], []>} : vector<4x32xf32>, vector<32x256xf32>, vector<4x256xf32> -> vector<4x256xf32>
    %70 = arith.addf %37, %69 : vector<4x256xf32>
    %c2_i32 = arith.constant 2 : i32
    %71 = arith.index_cast %c2_i32 : i32 to index
    %c0_37 = arith.constant 0 : index
    %c0_38 = arith.constant 0 : index
    %72 = vector.load %arg4[%71, %c0_37, %c0_38] : memref<4x4x32xf32, #tpu.memory_space<vmem>>, vector<1x4x32xf32>
    %73 = vector.shape_cast %72 : vector<1x4x32xf32> to vector<4x32xf32>
    %cst_39 = arith.constant dense<0.000000e+00> : vector<256x32xf32>
    %74 = tpu.matmul %3, %73, %cst_39 {dimension_numbers = #tpu.dot_dimension_numbers<[1], [0], [0], [1], [0, 0, 1, 1], [], []>} : vector<256x4xf32>, vector<4x32xf32>, vector<256x32xf32> -> vector<256x32xf32>
    %75 = arith.index_cast %c2_i32 : i32 to index
    %c0_40 = arith.constant 0 : index
    %c0_41 = arith.constant 0 : index
    %76 = vector.load %arg5[%75, %c0_40, %c0_41] : memref<4x32x4xf32, #tpu.memory_space<vmem>>, vector<1x32x4xf32>
    %77 = vector.shape_cast %76 : vector<1x32x4xf32> to vector<32x4xf32>
    %cst_42 = arith.constant dense<0.000000e+00> : vector<32x256xf32>
    %78 = tpu.matmul %77, %1, %cst_42 {dimension_numbers = #tpu.dot_dimension_numbers<[1], [0], [0], [1], [0, 0, 1, 1], [], []>} : vector<32x4xf32>, vector<4x256xf32>, vector<32x256xf32> -> vector<32x256xf32>
    %79 = arith.index_cast %c2_i32 : i32 to index
    %c0_43 = arith.constant 0 : index
    %c0_44 = arith.constant 0 : index
    %80 = vector.load %arg6[%79, %c0_43, %c0_44] : memref<4x32x4xf32, #tpu.memory_space<vmem>>, vector<1x32x4xf32>
    %81 = vector.shape_cast %80 : vector<1x32x4xf32> to vector<32x4xf32>
    %cst_45 = arith.constant dense<0.000000e+00> : vector<32x256xf32>
    %82 = tpu.matmul %81, %1, %cst_45 {dimension_numbers = #tpu.dot_dimension_numbers<[1], [0], [0], [1], [0, 0, 1, 1], [], []>} : vector<32x4xf32>, vector<4x256xf32>, vector<32x256xf32> -> vector<32x256xf32>
    %83 = arith.truncf %74 : vector<256x32xf32> to vector<256x32xbf16>
    %84 = arith.truncf %78 : vector<32x256xf32> to vector<32x256xbf16>
    %85 = arith.truncf %82 : vector<32x256xf32> to vector<32x256xbf16>
    %cst_46 = arith.constant dense<0.000000e+00> : vector<256x256xf32>
    %86 = tpu.matmul %83, %84, %cst_46 {dimension_numbers = #tpu.dot_dimension_numbers<[1], [0], [0], [1], [0, 0, 1, 1], [], []>} : vector<256x32xbf16>, vector<32x256xbf16>, vector<256x256xf32> -> vector<256x256xf32>
    %cst_47 = arith.constant dense<0xFF800000> : vector<256xf32>
    %87 = vector.multi_reduction <maximumf>, %86, %cst_47 [1] : vector<256x256xf32> to vector<256xf32>
    %88 = vector.shape_cast %87 : vector<256xf32> to vector<256x1xf32>
    %89 = vector.broadcast %88 : vector<256x1xf32> to vector<256x256xf32>
    %90 = arith.subf %86, %89 : vector<256x256xf32>
    %91 = math.exp %90 : vector<256x256xf32>
    %cst_48 = arith.constant dense<0.000000e+00> : vector<256xf32>
    %92 = vector.multi_reduction <add>, %91, %cst_48 [1] : vector<256x256xf32> to vector<256xf32>
    %93 = vector.shape_cast %92 : vector<256xf32> to vector<256x1xf32>
    %94 = tpu.reciprocal %93 {approx = true} : vector<256x1xf32> -> vector<256x1xf32>
    %95 = vector.broadcast %94 : vector<256x1xf32> to vector<256x256xf32>
    %96 = arith.mulf %91, %95 : vector<256x256xf32>
    %97 = arith.truncf %96 : vector<256x256xf32> to vector<256x256xbf16>
    %cst_49 = arith.constant dense<0.000000e+00> : vector<32x256xf32>
    %98 = tpu.matmul %85, %97, %cst_49 {dimension_numbers = #tpu.dot_dimension_numbers<[1], [1], [0], [0], [0, 0, 1, 0], [], []>} : vector<32x256xbf16>, vector<256x256xbf16>, vector<32x256xf32> -> vector<32x256xf32>
    %99 = arith.index_cast %c2_i32 : i32 to index
    %c0_50 = arith.constant 0 : index
    %c0_51 = arith.constant 0 : index
    %100 = vector.load %arg7[%99, %c0_50, %c0_51] : memref<4x4x32xf32, #tpu.memory_space<vmem>>, vector<1x4x32xf32>
    %101 = vector.shape_cast %100 : vector<1x4x32xf32> to vector<4x32xf32>
    %cst_52 = arith.constant dense<0.000000e+00> : vector<4x256xf32>
    %102 = tpu.matmul %101, %98, %cst_52 {dimension_numbers = #tpu.dot_dimension_numbers<[1], [0], [0], [1], [0, 0, 1, 1], [], []>} : vector<4x32xf32>, vector<32x256xf32>, vector<4x256xf32> -> vector<4x256xf32>
    %103 = arith.addf %70, %102 : vector<4x256xf32>
    %c3_i32 = arith.constant 3 : i32
    %104 = arith.index_cast %c3_i32 : i32 to index
    %c0_53 = arith.constant 0 : index
    %c0_54 = arith.constant 0 : index
    %105 = vector.load %arg4[%104, %c0_53, %c0_54] : memref<4x4x32xf32, #tpu.memory_space<vmem>>, vector<1x4x32xf32>
    %106 = vector.shape_cast %105 : vector<1x4x32xf32> to vector<4x32xf32>
    %cst_55 = arith.constant dense<0.000000e+00> : vector<256x32xf32>
    %107 = tpu.matmul %3, %106, %cst_55 {dimension_numbers = #tpu.dot_dimension_numbers<[1], [0], [0], [1], [0, 0, 1, 1], [], []>} : vector<256x4xf32>, vector<4x32xf32>, vector<256x32xf32> -> vector<256x32xf32>
    %108 = arith.index_cast %c3_i32 : i32 to index
    %c0_56 = arith.constant 0 : index
    %c0_57 = arith.constant 0 : index
    %109 = vector.load %arg5[%108, %c0_56, %c0_57] : memref<4x32x4xf32, #tpu.memory_space<vmem>>, vector<1x32x4xf32>
    %110 = vector.shape_cast %109 : vector<1x32x4xf32> to vector<32x4xf32>
    %cst_58 = arith.constant dense<0.000000e+00> : vector<32x256xf32>
    %111 = tpu.matmul %110, %1, %cst_58 {dimension_numbers = #tpu.dot_dimension_numbers<[1], [0], [0], [1], [0, 0, 1, 1], [], []>} : vector<32x4xf32>, vector<4x256xf32>, vector<32x256xf32> -> vector<32x256xf32>
    %112 = arith.index_cast %c3_i32 : i32 to index
    %c0_59 = arith.constant 0 : index
    %c0_60 = arith.constant 0 : index
    %113 = vector.load %arg6[%112, %c0_59, %c0_60] : memref<4x32x4xf32, #tpu.memory_space<vmem>>, vector<1x32x4xf32>
    %114 = vector.shape_cast %113 : vector<1x32x4xf32> to vector<32x4xf32>
    %cst_61 = arith.constant dense<0.000000e+00> : vector<32x256xf32>
    %115 = tpu.matmul %114, %1, %cst_61 {dimension_numbers = #tpu.dot_dimension_numbers<[1], [0], [0], [1], [0, 0, 1, 1], [], []>} : vector<32x4xf32>, vector<4x256xf32>, vector<32x256xf32> -> vector<32x256xf32>
    %116 = arith.truncf %107 : vector<256x32xf32> to vector<256x32xbf16>
    %117 = arith.truncf %111 : vector<32x256xf32> to vector<32x256xbf16>
    %118 = arith.truncf %115 : vector<32x256xf32> to vector<32x256xbf16>
    %cst_62 = arith.constant dense<0.000000e+00> : vector<256x256xf32>
    %119 = tpu.matmul %116, %117, %cst_62 {dimension_numbers = #tpu.dot_dimension_numbers<[1], [0], [0], [1], [0, 0, 1, 1], [], []>} : vector<256x32xbf16>, vector<32x256xbf16>, vector<256x256xf32> -> vector<256x256xf32>
    %cst_63 = arith.constant dense<0xFF800000> : vector<256xf32>
    %120 = vector.multi_reduction <maximumf>, %119, %cst_63 [1] : vector<256x256xf32> to vector<256xf32>
    %121 = vector.shape_cast %120 : vector<256xf32> to vector<256x1xf32>
    %122 = vector.broadcast %121 : vector<256x1xf32> to vector<256x256xf32>
    %123 = arith.subf %119, %122 : vector<256x256xf32>
    %124 = math.exp %123 : vector<256x256xf32>
    %cst_64 = arith.constant dense<0.000000e+00> : vector<256xf32>
    %125 = vector.multi_reduction <add>, %124, %cst_64 [1] : vector<256x256xf32> to vector<256xf32>
    %126 = vector.shape_cast %125 : vector<256xf32> to vector<256x1xf32>
    %127 = tpu.reciprocal %126 {approx = true} : vector<256x1xf32> -> vector<256x1xf32>
    %128 = vector.broadcast %127 : vector<256x1xf32> to vector<256x256xf32>
    %129 = arith.mulf %124, %128 : vector<256x256xf32>
    %130 = arith.truncf %129 : vector<256x256xf32> to vector<256x256xbf16>
    %cst_65 = arith.constant dense<0.000000e+00> : vector<32x256xf32>
    %131 = tpu.matmul %118, %130, %cst_65 {dimension_numbers = #tpu.dot_dimension_numbers<[1], [1], [0], [0], [0, 0, 1, 0], [], []>} : vector<32x256xbf16>, vector<256x256xbf16>, vector<32x256xf32> -> vector<32x256xf32>
    %132 = arith.index_cast %c3_i32 : i32 to index
    %c0_66 = arith.constant 0 : index
    %c0_67 = arith.constant 0 : index
    %133 = vector.load %arg7[%132, %c0_66, %c0_67] : memref<4x4x32xf32, #tpu.memory_space<vmem>>, vector<1x4x32xf32>
    %134 = vector.shape_cast %133 : vector<1x4x32xf32> to vector<4x32xf32>
    %cst_68 = arith.constant dense<0.000000e+00> : vector<4x256xf32>
    %135 = tpu.matmul %134, %131, %cst_68 {dimension_numbers = #tpu.dot_dimension_numbers<[1], [0], [0], [1], [0, 0, 1, 1], [], []>} : vector<4x32xf32>, vector<32x256xf32>, vector<4x256xf32> -> vector<4x256xf32>
    %136 = arith.addf %103, %135 : vector<4x256xf32>
    %c4_i32 = arith.constant 4 : i32
    %c0_69 = arith.constant 0 : index
    %c0_70 = arith.constant 0 : index
    %137 = vector.load %arg8[%c0_69, %c0_70] : memref<4x1xf32, #tpu.memory_space<vmem>>, vector<4x1xf32>
    %138 = vector.broadcast %137 : vector<4x1xf32> to vector<4x256xf32>
    %139 = arith.addf %136, %138 : vector<4x256xf32>
    %c0_71 = arith.constant 0 : index
    %c0_72 = arith.constant 0 : index
    %c0_73 = arith.constant 0 : index
    %140 = vector.load %arg9[%c0_71, %c0_72, %c0_73] : memref<1x4x256xf32, #tpu.memory_space<vmem>>, vector<1x4x256xf32>
    %141 = vector.shape_cast %140 : vector<1x4x256xf32> to vector<4x256xf32>
    %142 = vector.shape_cast %139 : vector<4x256xf32> to vector<1x4x256xf32>
    tpu.vector_store %arg9[%c0_71, %c0_72, %c0_73], %142 {strides = array<i32>} : memref<1x4x256xf32, #tpu.memory_space<vmem>>, vector<1x4x256xf32>,
    return
  }
  func.func @transform_0(%arg0: i32, %arg1: i32) -> (i32, i32, i32) {
    %c0_i32 = arith.constant 0 : i32
    %c0_i32_0 = arith.constant 0 : i32
    %c0_i32_1 = arith.constant 0 : i32
    return %arg0, %c0_i32, %c0_i32_0 : i32, i32, i32
  }
  func.func @transform_1(%arg0: i32, %arg1: i32) -> (i32, i32, i32) {
    %c0_i32 = arith.constant 0 : i32
    %c0_i32_0 = arith.constant 0 : i32
    return %arg0, %arg1, %c0_i32 : i32, i32, i32
  }
  func.func @transform_2(%arg0: i32, %arg1: i32) -> (i32, i32, i32) {
    %c0_i32 = arith.constant 0 : i32
    %c0_i32_0 = arith.constant 0 : i32
    %c0_i32_1 = arith.constant 0 : i32
    %c0_i32_2 = arith.constant 0 : i32
    return %c0_i32, %c0_i32_0, %c0_i32_1 : i32, i32, i32
  }
  func.func @transform_3(%arg0: i32, %arg1: i32) -> (i32, i32, i32) {
    %c0_i32 = arith.constant 0 : i32
    %c0_i32_0 = arith.constant 0 : i32
    %c0_i32_1 = arith.constant 0 : i32
    %c0_i32_2 = arith.constant 0 : i32
    return %c0_i32, %c0_i32_0, %c0_i32_1 : i32, i32, i32
  }
  func.func @transform_4(%arg0: i32, %arg1: i32) -> (i32, i32, i32) {
    %c0_i32 = arith.constant 0 : i32
    %c0_i32_0 = arith.constant 0 : i32
    %c0_i32_1 = arith.constant 0 : i32
    %c0_i32_2 = arith.constant 0 : i32
    return %c0_i32, %c0_i32_0, %c0_i32_1 : i32, i32, i32
  }
  func.func @transform_5(%arg0: i32, %arg1: i32) -> (i32, i32, i32) {
    %c0_i32 = arith.constant 0 : i32
    %c0_i32_0 = arith.constant 0 : i32
    %c0_i32_1 = arith.constant 0 : i32
    %c0_i32_2 = arith.constant 0 : i32
    return %c0_i32, %c0_i32_0, %c0_i32_1 : i32, i32, i32
  }
  func.func @transform_6(%arg0: i32, %arg1: i32) -> (i32, i32) {
    %c0_i32 = arith.constant 0 : i32
    %c0_i32_0 = arith.constant 0 : i32
    %c0_i32_1 = arith.constant 0 : i32
    return %c0_i32, %c0_i32_0 : i32, i32
  }
  func.func @transform_7(%arg0: i32, %arg1: i32) -> (i32, i32, i32) {
    %c0_i32 = arith.constant 0 : i32
    %c0_i32_0 = arith.constant 0 : i32
    return %arg0, %c0_i32, %arg1 : i32, i32, i32
  }
}

</mosaic_0001>

<llo_original>
// kernel: tpu_custom_call.1
$region0: #{tpu_custom_call.1}
  #allocation0 [shape = 'u32[]', space=smem, size = 0x4, offset = 0x4, fixed_abs, tag = 'smem constant byte address 0x4 - core index']
  #allocation1 [shape = 'u32[144,128]{1,0:T(1,128)}', space=vmem, size = 0x12000, scoped, tag = 'internal scratch']
  %s0 = inlined_call_operand.vmem [shape: f32[2,4,256], index: 0, kind: input, shape index: {}]
  %s1 = inlined_call_operand.vmem [shape: f32[2,256,4], index: 1, kind: input, shape index: {}]
  %s2 = inlined_call_operand.vmem [shape: f32[4,4,32], index: 2, kind: input, shape index: {}]
  %s3 = inlined_call_operand.vmem [shape: f32[4,32,4], index: 3, kind: input, shape index: {}]
  %s4 = inlined_call_operand.vmem [shape: f32[4,32,4], index: 4, kind: input, shape index: {}]
  %s5 = inlined_call_operand.vmem [shape: f32[4,4,32], index: 5, kind: input, shape index: {}]
  %s6 = inlined_call_operand.vmem [shape: f32[4,1], index: 6, kind: input, shape index: {}]
  %s7 = inlined_call_operand.hbm [shape: f32[2,4,256], index: 7, kind: output, shape index: {}]
  %s8 = sld [smem:[#allocation0]]
  $region61: #{tpu_custom_call.1} parent=0
    _
  %s10 = ssub.s32 1, %s8
  %s11 = scalar_select 0, %s10, %s8
  $region1: #{tpu_custom_call.1} parent=0
    #allocation2 [shape = 'u8[8192]{0}', space=vmem, size = 0x2000, scoped, tag = 'output window, operand 0']
    #allocation3 [shape = 's32[2]{0}', space=sflag, size = 0x8, scoped, tag = 'scoped memory for tpu_custom_call.1']
    %12 = vsyncpa [#allocation3], 0
    %s13 = scalar_lea.sflag [#allocation3], 1
    %14 = vsyncpa %s13, 0
    loop: start=0, step=1, limit=4
    $region2: #{tpu_custom_call.1} parent=1 // loop_pre_header
      _
    $region3: #{tpu_custom_call.1} parent=1 // loop_header
      %s16 = sphi 0, %s20
      %p17 = scmp.ge.s32.totalorder %s16, 4
      %s23 = sphi 0, %s35
      %s24 = sphi 0, %s31
      %s25 = sphi 0, %s23
      %s26 = sphi 0, %s24
      %s27 = sphi 0, %s25
      %s28 = sphi 0, %s26
      %s38 = sphi 0, %s40
      %s41 = sphi 0, %s38
      %s42 = sphi 0, %s41
      %s58 = sphi 0, %s42
      %s66 = sphi 0, %s68
      %s69 = sphi 0, %s66
      %s70 = sphi 0, %s69
      %s86 = sphi 0, %s70
      %s90 = sphi 0, %s90
      %s92 = sphi 0, %s90
      %s93 = sphi 0, %s92
      %s107 = sphi 0, %s93
      %s111 = sphi 0, %s111
      %s113 = sphi 0, %s111
      %s114 = sphi 0, %s113
      %s128 = sphi 0, %s114
      %s132 = sphi 0, %s132
      %s134 = sphi 0, %s132
      %s135 = sphi 0, %s134
      %s149 = sphi 0, %s135
      %s153 = sphi 0, %s153
      %s155 = sphi 0, %s153
      %s156 = sphi 0, %s155
      %s170 = sphi 0, %s156
      %s174 = sphi 0, %s174
      %s176 = sphi 0, %s174
      %s177 = sphi 0, %s176
      %s191 = sphi 0, %s177
      %s199 = sphi 0, %s201
      %s202 = sphi 0, %s199
      %s203 = sphi 0, %s202
      %s219 = sphi 0, %s203
    $region4: #{tpu_custom_call.1} parent=1 // loop_header_branch
      %19 = sbr.rel (%p17) target = $region8
    $region5: #{tpu_custom_call.1} parent=1 // loop_body
      %s21 = ssub.s32 %s16, 1
      %s22 = ssub.s32 %s16, 2
      %s29 = sadd.s32 1, %s24
      %p30 = scmp.ge.s32.totalorder %s29, 1
      %s31 = scalar_select %p30, 0, %s29
      %s32 = sadd.s32 1, %s23
      %s33 = scalar_select %p30, %s32, %s23
      %p34 = scmp.ge.s32.totalorder %s33, 2
      %s35 = scalar_select %p34, 0, %s33
      %s36 = ssub.s32 %s23, %s35
      %p37 = scmp.eq.s32.totalorder %s36, 0
      %s39 = sadd.s32 %s38, 1
      %s40 = scalar_select %p37, %s38, %s39
      %p43 = pneg %p37
      %p44 = scmp.eq.s32.totalorder %s16, 1
      %p45 = por %p43, %p44
      %p46 = scmp.ne.s32.totalorder %s38, %s41
      %p47 = scmp.eq.s32.totalorder %s16, 0
      %p48 = por %p46, %p47
      %p49 = scmp.ne.s32.totalorder %s38, %s41
      %p50 = scmp.eq.s32.totalorder %s21, 1
      %p51 = por %p49, %p50
      %p52 = scmp.ne.s32.totalorder %s41, %s42
      %p53 = scmp.eq.s32.totalorder %s21, 0
      %p54 = por %p52, %p53
      %p55 = scmp.ne.s32.totalorder %s41, %s42
      %p56 = scmp.eq.s32.totalorder %s22, 1
      %p57 = por %p55, %p56
      %p59 = scmp.ne.s32.totalorder %s42, %s58
      %p60 = scmp.eq.s32.totalorder %s22, 0
      %p61 = por %p59, %p60
      %s62 = ssub.s32 %s23, %s35
      %s63 = ssub.s32 %s24, %s31
      %s64 = sor.u32 %s62, %s63
      %p65 = scmp.eq.s32.totalorder %s64, 0
      %s67 = sadd.s32 %s66, 1
      %s68 = scalar_select %p65, %s66, %s67
      %p71 = pneg %p65
      %p72 = scmp.eq.s32.totalorder %s16, 1
      %p73 = por %p71, %p72
      %p74 = scmp.ne.s32.totalorder %s66, %s69
      %p75 = scmp.eq.s32.totalorder %s16, 0
      %p76 = por %p74, %p75
      %p77 = scmp.ne.s32.totalorder %s66, %s69
      %p78 = scmp.eq.s32.totalorder %s21, 1
      %p79 = por %p77, %p78
      %p80 = scmp.ne.s32.totalorder %s69, %s70
      %p81 = scmp.eq.s32.totalorder %s21, 0
      %p82 = por %p80, %p81
      %p83 = scmp.ne.s32.totalorder %s69, %s70
      %p84 = scmp.eq.s32.totalorder %s22, 1
      %p85 = por %p83, %p84
      %p87 = scmp.ne.s32.totalorder %s70, %s86
      %p88 = scmp.eq.s32.totalorder %s22, 0
      %p89 = por %p87, %p88
      %s91 = sadd.s32 %s90, 1
      %p94 = scmp.eq.s32.totalorder %s16, 1
      %p95 = scmp.ne.s32.totalorder %s90, %s92
      %p96 = scmp.eq.s32.totalorder %s16, 0
      %p97 = por %p95, %p96
      %p98 = scmp.ne.s32.totalorder %s90, %s92
      %p99 = scmp.eq.s32.totalorder %s21, 1
      %p100 = por %p98, %p99
      %p101 = scmp.ne.s32.totalorder %s92, %s93
      %p102 = scmp.eq.s32.totalorder %s21, 0
      %p103 = por %p101, %p102
      %p104 = scmp.ne.s32.totalorder %s92, %s93
      %p105 = scmp.eq.s32.totalorder %s22, 1
      %p106 = por %p104, %p105
      %p108 = scmp.ne.s32.totalorder %s93, %s107
      %p109 = scmp.eq.s32.totalorder %s22, 0
      %p110 = por %p108, %p109
      %s112 = sadd.s32 %s111, 1
      %p115 = scmp.eq.s32.totalorder %s16, 1
      %p116 = scmp.ne.s32.totalorder %s111, %s113
      %p117 = scmp.eq.s32.totalorder %s16, 0
      %p118 = por %p116, %p117
      %p119 = scmp.ne.s32.totalorder %s111, %s113
      %p120 = scmp.eq.s32.totalorder %s21, 1
      %p121 = por %p119, %p120
      %p122 = scmp.ne.s32.totalorder %s113, %s114
      %p123 = scmp.eq.s32.totalorder %s21, 0
      %p124 = por %p122, %p123
      %p125 = scmp.ne.s32.totalorder %s113, %s114
      %p126 = scmp.eq.s32.totalorder %s22, 1
      %p127 = por %p125, %p126
      %p129 = scmp.ne.s32.totalorder %s114, %s128
      %p130 = scmp.eq.s32.totalorder %s22, 0
      %p131 = por %p129, %p130
      %s133 = sadd.s32 %s132, 1
      %p136 = scmp.eq.s32.totalorder %s16, 1
      %p137 = scmp.ne.s32.totalorder %s132, %s134
      %p138 = scmp.eq.s32.totalorder %s16, 0
      %p139 = por %p137, %p138
      %p140 = scmp.ne.s32.totalorder %s132, %s134
      %p141 = scmp.eq.s32.totalorder %s21, 1
      %p142 = por %p140, %p141
      %p143 = scmp.ne.s32.totalorder %s134, %s135
      %p144 = scmp.eq.s32.totalorder %s21, 0
      %p145 = por %p143, %p144
      %p146 = scmp.ne.s32.totalorder %s134, %s135
      %p147 = scmp.eq.s32.totalorder %s22, 1
      %p148 = por %p146, %p147
      %p150 = scmp.ne.s32.totalorder %s135, %s149
      %p151 = scmp.eq.s32.totalorder %s22, 0
      %p152 = por %p150, %p151
      %s154 = sadd.s32 %s153, 1
      %p157 = scmp.eq.s32.totalorder %s16, 1
      %p158 = scmp.ne.s32.totalorder %s153, %s155
      %p159 = scmp.eq.s32.totalorder %s16, 0
      %p160 = por %p158, %p159
      %p161 = scmp.ne.s32.totalorder %s153, %s155
      %p162 = scmp.eq.s32.totalorder %s21, 1
      %p163 = por %p161, %p162
      %p164 = scmp.ne.s32.totalorder %s155, %s156
      %p165 = scmp.eq.s32.totalorder %s21, 0
      %p166 = por %p164, %p165
      %p167 = scmp.ne.s32.totalorder %s155, %s156
      %p168 = scmp.eq.s32.totalorder %s22, 1
      %p169 = por %p167, %p168
      %p171 = scmp.ne.s32.totalorder %s156, %s170
      %p172 = scmp.eq.s32.totalorder %s22, 0
      %p173 = por %p171, %p172
      %s175 = sadd.s32 %s174, 1
      %p178 = scmp.eq.s32.totalorder %s16, 1
      %p179 = scmp.ne.s32.totalorder %s174, %s176
      %p180 = scmp.eq.s32.totalorder %s16, 0
      %p181 = por %p179, %p180
      %p182 = scmp.ne.s32.totalorder %s174, %s176
      %p183 = scmp.eq.s32.totalorder %s21, 1
      %p184 = por %p182, %p183
      %p185 = scmp.ne.s32.totalorder %s176, %s177
      %p186 = scmp.eq.s32.totalorder %s21, 0
      %p187 = por %p185, %p186
      %p188 = scmp.ne.s32.totalorder %s176, %s177
      %p189 = scmp.eq.s32.totalorder %s22, 1
      %p190 = por %p188, %p189
      %p192 = scmp.ne.s32.totalorder %s177, %s191
      %p193 = scmp.eq.s32.totalorder %s22, 0
      %p194 = por %p192, %p193
      %s195 = ssub.s32 %s23, %s35
      %s196 = ssub.s32 %s24, %s31
      %s197 = sor.u32 %s195, %s196
      %p198 = scmp.eq.s32.totalorder %s197, 0
      %s200 = sadd.s32 %s199, 1
      %s201 = scalar_select %p198, %s199, %s200
      %p204 = pneg %p198
      %p205 = scmp.eq.s32.totalorder %s16, 1
      %p206 = por %p204, %p205
      %p207 = scmp.ne.s32.totalorder %s199, %s202
      %p208 = scmp.eq.s32.totalorder %s16, 0
      %p209 = por %p207, %p208
      %p210 = scmp.ne.s32.totalorder %s199, %s202
      %p211 = scmp.eq.s32.totalorder %s21, 1
      %p212 = por %p210, %p211
      %p213 = scmp.ne.s32.totalorder %s202, %s203
      %p214 = scmp.eq.s32.totalorder %s21, 0
      %p215 = por %p213, %p214
      %p216 = scmp.ne.s32.totalorder %s202, %s203
      %p217 = scmp.eq.s32.totalorder %s22, 1
      %p218 = por %p216, %p217
      %p220 = scmp.ne.s32.totalorder %s203, %s219
      %p221 = scmp.eq.s32.totalorder %s22, 0
      %p222 = por %p220, %p221
      %p223 = scmp.le.s32.totalorder 1, %s16
      %p224 = scmp.lt.s32.totalorder %s16, 3
      %p225 = pnand %p223, %p224
      %p226 = pneg %p225
      // Predicated region
      $region9: #{tpu_custom_call.1} parent=5 // pred_check
        _
      $region10: #{tpu_custom_call.1} parent=5 // pred_check_branch
        %228 = sbr.rel (%p225) target = $region12
      $region11: #{tpu_custom_call.1} parent=5 // pred_region
        %s229 = ssub.s32 %s16, 1
        // Predicated region
        $region13: #{tpu_custom_call.1} parent=11 // pred_check
          %p230 = pneg %p103
        $region14: #{tpu_custom_call.1} parent=11 // pred_check_branch
          %232 = sbr.rel (%p230) target = $region16
        $region15: #{tpu_custom_call.1} parent=11 // pred_region
          _
        $region16: #{tpu_custom_call.1} parent=11 // pred_fallthru
          _
        // Predicated region
        $region17: #{tpu_custom_call.1} parent=11 // pred_check
          %p233 = pneg %p124
        $region18: #{tpu_custom_call.1} parent=11 // pred_check_branch
          %235 = sbr.rel (%p233) target = $region20
        $region19: #{tpu_custom_call.1} parent=11 // pred_region
          _
        $region20: #{tpu_custom_call.1} parent=11 // pred_fallthru
          _
        // Predicated region
        $region21: #{tpu_custom_call.1} parent=11 // pred_check
          %p236 = pneg %p145
        $region22: #{tpu_custom_call.1} parent=11 // pred_check_branch
          %238 = sbr.rel (%p236) target = $region24
        $region23: #{tpu_custom_call.1} parent=11 // pred_region
          _
        $region24: #{tpu_custom_call.1} parent=11 // pred_fallthru
          _
        // Predicated region
        $region25: #{tpu_custom_call.1} parent=11 // pred_check
          %p239 = pneg %p166
        $region26: #{tpu_custom_call.1} parent=11 // pred_check_branch
          %241 = sbr.rel (%p239) target = $region28
        $region27: #{tpu_custom_call.1} parent=11 // pred_region
          _
        $region28: #{tpu_custom_call.1} parent=11 // pred_fallthru
          _
        // Predicated region
        $region29: #{tpu_custom_call.1} parent=11 // pred_check
          %p242 = pneg %p187
        $region30: #{tpu_custom_call.1} parent=11 // pred_check_branch
          %244 = sbr.rel (%p242) target = $region32
        $region31: #{tpu_custom_call.1} parent=11 // pred_region
          _
        $region32: #{tpu_custom_call.1} parent=11 // pred_fallthru
          _
      $region12: #{tpu_custom_call.1} parent=5 // pred_fallthru
        _
      %p245 = scmp.lt.s32.totalorder %s16, 2
      // Predicated region
      $region33: #{tpu_custom_call.1} parent=5 // pred_check
        %p246 = pneg %p245
      $region34: #{tpu_custom_call.1} parent=5 // pred_check_branch
        %248 = sbr.rel (%p246) target = $region36
      $region35: #{tpu_custom_call.1} parent=5 // pred_region
        // Predicated region
        $region37: #{tpu_custom_call.1} parent=35 // pred_check
          %p249 = pneg %p48
        $region38: #{tpu_custom_call.1} parent=35 // pred_check_branch
          %251 = sbr.rel (%p249) target = $region40
        $region39: #{tpu_custom_call.1} parent=35 // pred_region
          %p252 = scmp.lt.s32.totalorder %s23, 1
          %s253 = scalar_select %p252, %s23, 1
          %s254 = smul.addr %s253, 2
          %s255 = smul.addr %s254, 4
          %s256 = scalar_lea.vmem %s0, %s255
        $region40: #{tpu_custom_call.1} parent=35 // pred_fallthru
          _
        // Predicated region
        $region41: #{tpu_custom_call.1} parent=35 // pred_check
          %p257 = pneg %p76
        $region42: #{tpu_custom_call.1} parent=35 // pred_check_branch
          %259 = sbr.rel (%p257) target = $region44
        $region43: #{tpu_custom_call.1} parent=35 // pred_region
          %s260 = smul.u32 32, %s24
          %p261 = scmp.lt.s32.totalorder %s23, 1
          %s262 = scalar_select %p261, %s23, 1
          %p263 = scmp.lt.s32.totalorder %s260, 31
          %s264 = scalar_select %p263, %s260, 31
          %s265 = smul.addr %s262, 32
          %s266 = sadd.s32 %s264, %s265
          %s267 = smul.addr %s266, 8
          %s268 = scalar_lea.vmem %s1, %s267
          %s269 = smul.u32 32, %s24
        $region44: #{tpu_custom_call.1} parent=35 // pred_fallthru
          _
      $region36: #{tpu_custom_call.1} parent=5 // pred_fallthru
        _
      %p270 = scmp.le.s32.totalorder 1, %s16
      %p271 = scmp.lt.s32.totalorder %s16, 3
      %p272 = pnand %p270, %p271
      %p273 = pneg %p272
      // Predicated region
      $region45: #{tpu_custom_call.1} parent=5 // pred_check
        _
      $region46: #{tpu_custom_call.1} parent=5 // pred_check_branch
        %275 = sbr.rel (%p272) target = $region48
      $region47: #{tpu_custom_call.1} parent=5 // pred_region
        %s276 = ssub.s32 %s16, 1
        %p277 = scmp.lt.s32.totalorder %s25, 1
        %s278 = scalar_select %p277, %s25, 1
        %s279 = smul.addr %s278, 2
        %s280 = smul.addr %s279, 4
        %s281 = scalar_lea.vmem %s0, %s280
        %p282 = pneg %p54
        %p283 = pneg %p51
        %s284 = smul.u32 32, %s26
        %p285 = scmp.lt.s32.totalorder %s25, 1
        %s286 = scalar_select %p285, %s25, 1
        %p287 = scmp.lt.s32.totalorder %s284, 31
        %s288 = scalar_select %p287, %s284, 31
        %s289 = smul.addr %s286, 32
        %s290 = sadd.s32 %s288, %s289
        %s291 = smul.addr %s290, 8
        %s292 = scalar_lea.vmem %s1, %s291
        %p293 = pneg %p82
        %p294 = pneg %p79
        %p295 = pneg %p103
        %p296 = pneg %p100
        %p297 = pneg %p124
        %p298 = pneg %p121
        %p299 = pneg %p145
        %p300 = pneg %p142
        %p301 = pneg %p166
        %p302 = pneg %p163
        %p303 = pneg %p187
        %p304 = pneg %p184
        %p305 = pneg %p215
        %p306 = pneg %p212
        %s307 = sand.u32 %s202, 1
        %s308 = scalar_lea.sflag [#allocation3], %s307
        %s309 = sand.u32 %s202, 1
        %s310 = smul.addr %s309, 8
        %s311 = scalar_lea.vmem [#allocation2], %s310
        %p312 = scmp.lt.s32.totalorder %s25, 1
        %s313 = scalar_select %p312, %s25, 1
        %s314 = smul.addr %s313, 2
        %s315 = smul.addr %s314, 4
        %s316 = scalar_lea.vmem %s0, %s315
        %s317 = smul.u32 32, %s26
        %p318 = scmp.lt.s32.totalorder %s25, 1
        %s319 = scalar_select %p318, %s25, 1
        %p320 = scmp.lt.s32.totalorder %s317, 31
        %s321 = scalar_select %p320, %s317, 31
        %s322 = smul.addr %s319, 32
        %s323 = sadd.s32 %s321, %s322
        %s324 = smul.addr %s323, 8
        %s325 = scalar_lea.vmem %s1, %s324
        %s326 = smul.u32 32, %s26
        %s327 = smul.u32 2, %s26
        %v329 = vld [vmem:[%s316] sm:$0xff]
        %v330 = vld [vmem:[%s325] sm:$0xff]
        %v331 = vld [vmem:[%s325 + $0x8] sm:$0xff]
        %v332 = vld [vmem:[%s325 + $0x10] sm:$0xff]
        %v333 = vld [vmem:[%s325 + $0x18] sm:$0xff]
        %v334 = vld [vmem:[%s325 + $0x20] sm:$0xff]
        %v335 = vld [vmem:[%s325 + $0x28] sm:$0xff]
        %v336 = vld [vmem:[%s325 + $0x30] sm:$0xff]
        %v337 = vld [vmem:[%s325 + $0x38] sm:$0xff]
        %v338 = vld [vmem:[%s325 + $0x40] sm:$0xff]
        %v339 = vld [vmem:[%s325 + $0x48] sm:$0xff]
        %v340 = vld [vmem:[%s325 + $0x50] sm:$0xff]
        %v341 = vld [vmem:[%s325 + $0x58] sm:$0xff]
        %v342 = vld [vmem:[%s325 + $0x60] sm:$0xff]
        %v343 = vld [vmem:[%s325 + $0x68] sm:$0xff]
        %v344 = vld [vmem:[%s325 + $0x70] sm:$0xff]
        %v345 = vld [vmem:[%s325 + $0x78] sm:$0xff]
        %v346 = vld [vmem:[%s325 + $0x80] sm:$0xff]
        %v347 = vld [vmem:[%s325 + $0x88] sm:$0xff]
        %v348 = vld [vmem:[%s325 + $0x90] sm:$0xff]
        %v349 = vld [vmem:[%s325 + $0x98] sm:$0xff]
        %v350 = vld [vmem:[%s325 + $0xa0] sm:$0xff]
        %v351 = vld [vmem:[%s325 + $0xa8] sm:$0xff]
        %v352 = vld [vmem:[%s325 + $0xb0] sm:$0xff]
        %v353 = vld [vmem:[%s325 + $0xb8] sm:$0xff]
        %v354 = vld [vmem:[%s325 + $0xc0] sm:$0xff]
        %v355 = vld [vmem:[%s325 + $0xc8] sm:$0xff]
        %v356 = vld [vmem:[%s325 + $0xd0] sm:$0xff]
        %v357 = vld [vmem:[%s325 + $0xd8] sm:$0xff]
        %v358 = vld [vmem:[%s325 + $0xe0] sm:$0xff]
        %v359 = vld [vmem:[%s325 + $0xe8] sm:$0xff]
        %v360 = vld [vmem:[%s325 + $0xf0] sm:$0xff]
        %v361 = vld [vmem:[%s325 + $0xf8] sm:$0xff]
        %v362 = vld [vmem:[%s2] sm:$0xf]
        %vm363 = vcmask 31744
        %v365 = vsel %vm363, %v330, 0
        %v368 = vsel %vm363, %v331, 0
        %v371 = vsel %vm363, %v332, 0
        %v374 = vsel %vm363, %v333, 0
        %v377 = vsel %vm363, %v334, 0
        %v380 = vsel %vm363, %v335, 0
        %v383 = vsel %vm363, %v336, 0
        %v386 = vsel %vm363, %v337, 0
        %v389 = vsel %vm363, %v338, 0
        %v392 = vsel %vm363, %v339, 0
        %v395 = vsel %vm363, %v340, 0
        %v398 = vsel %vm363, %v341, 0
        %v401 = vsel %vm363, %v342, 0
        %v404 = vsel %vm363, %v343, 0
        %v407 = vsel %vm363, %v344, 0
        %v410 = vsel %vm363, %v345, 0
        %v413 = vsel %vm363, %v346, 0
        %v416 = vsel %vm363, %v347, 0
        %v419 = vsel %vm363, %v348, 0
        %v422 = vsel %vm363, %v349, 0
        %v425 = vsel %vm363, %v350, 0
        %v428 = vsel %vm363, %v351, 0
        %v431 = vsel %vm363, %v352, 0
        %v434 = vsel %vm363, %v353, 0
        %v437 = vsel %vm363, %v354, 0
        %v440 = vsel %vm363, %v355, 0
        %v443 = vsel %vm363, %v356, 0
        %v446 = vsel %vm363, %v357, 0
        %v449 = vsel %vm363, %v358, 0
        %v452 = vsel %vm363, %v359, 0
        %v455 = vsel %vm363, %v360, 0
        %v458 = vsel %vm363, %v361, 0
        %vm460 = vcmask 1043456
        %v462 = vsel %vm460, %v362, 0
        %464 = vmatprep.subr.mxu0 0.0
        %465 = vmatpush1.msra.mxu0 %v462
        %466 = vmatprep.subr.mxu0 0.0
        %467 = vmatpush1.msra.mxu0 0.0
        %468 = vmatprep.subr.mxu0 0.0
        %469 = vmatpush1.msra.mxu0 0.0
        %470 = vmatprep.subr.mxu0 0.0
        %471 = vmatpush1.msra.mxu0 0.0
        %472 = vmatprep.subr.mxu0 0.0
        %473 = vmatpush1.msra.mxu0 0.0
        %474 = vmatprep.subr.mxu0 0.0
        %475 = vmatpush1.msra.mxu0 0.0
        %476 = vmatprep.subr.mxu0 0.0
        %477 = vmatpush1.msra.mxu0 0.0
        %478 = vmatprep.subr.mxu0 0.0
        %479 = vmatpush1.msra.mxu0 0.0
        %480 = vmatprep.subr.mxu0 0.0
        %481 = vmatpush1.msra.mxu0 0.0
        %482 = vmatprep.subr.mxu0 0.0
        %483 = vmatpush1.msra.mxu0 0.0
        %484 = vmatprep.subr.mxu0 0.0
        %485 = vmatpush1.msra.mxu0 0.0
        %486 = vmatprep.subr.mxu0 0.0
        %487 = vmatpush1.msra.mxu0 0.0
        %488 = vmatprep.subr.mxu0 0.0
        %489 = vmatpush1.msra.mxu0 0.0
        %490 = vmatprep.subr.mxu0 0.0
        %491 = vmatpush1.msra.mxu0 0.0
        %492 = vmatprep.subr.mxu0 0.0
        %493 = vmatpush1.msra.mxu0 0.0
        %494 = vmatprep.subr.mxu0 0.0
        %495 = vmatpush1.msra.mxu0 0.0
        %496 = vmatprep.subr.mxu0 0.0
        %497 = vmatpush1.msra.mxu0 0.0
        %498 = vmatprep.subr.mxu0 0.0
        %499 = vmatpush1.msra.mxu0 0.0
        %500 = vmatprep.subr.mxu0 0.0
        %501 = vmatpush1.msra.mxu0 0.0
        %502 = vmatprep.subr.mxu0 0.0
        %503 = vmatpush1.msra.mxu0 0.0
        %504 = vmatprep.subr.mxu0 0.0
        %505 = vmatpush1.msra.mxu0 0.0
        %506 = vmatprep.subr.mxu0 0.0
        %507 = vmatpush1.msra.mxu0 0.0
        %508 = vmatprep.subr.mxu0 0.0
        %509 = vmatpush1.msra.mxu0 0.0
        %510 = vmatprep.subr.mxu0 0.0
        %511 = vmatpush1.msra.mxu0 0.0
        %512 = vmatprep.subr.mxu0 0.0
        %513 = vmatpush1.msra.mxu0 0.0
        %514 = vmatprep.subr.mxu0 0.0
        %515 = vmatpush1.msra.mxu0 0.0
        %516 = vmatprep.subr.mxu0 0.0
        %517 = vmatpush1.msra.mxu0 0.0
        %518 = vmatprep.subr.mxu0 0.0
        %519 = vmatpush1.msra.mxu0 0.0
        %520 = vmatprep.subr.mxu0 0.0
        %521 = vmatpush1.msra.mxu0 0.0
        %522 = vmatprep.subr.mxu0 0.0
        %523 = vmatpush1.msra.mxu0 0.0
        %524 = vmatprep.subr.mxu0 0.0
        %525 = vmatpush1.msra.mxu0 0.0
        %526 = vmatprep.subr.mxu0 0.0
        %527 = vmatpush1.msra.mxu0 0.0
        %528 = vmatprep.mubr.f32.mxu0 0.0
        %529 = vmatmul.mubr.f32.gmra.mrb[0].mxu0 %v365
        %v530 = vpop.f32.mrb[0].mxu0
        %v531 = vadd.f32 0.0, %v530
        %v532 = vpop.f32.mrb[0].mxu0
        %533 = vmatprep.mubr.f32.mxu0 0.0
        %534 = vmatmul.mubr.f32.gmra.mrb[0].mxu0 %v368
        %v535 = vpop.f32.mrb[0].mxu0
        %v536 = vadd.f32 0.0, %v535
        %v537 = vpop.f32.mrb[0].mxu0
        %538 = vmatprep.mubr.f32.mxu0 0.0
        %539 = vmatmul.mubr.f32.gmra.mrb[0].mxu0 %v371
        %v540 = vpop.f32.mrb[0].mxu0
        %v541 = vadd.f32 0.0, %v540
        %v542 = vpop.f32.mrb[0].mxu0
        %543 = vmatprep.mubr.f32.mxu0 0.0
        %544 = vmatmul.mubr.f32.gmra.mrb[0].mxu0 %v374
        %v545 = vpop.f32.mrb[0].mxu0
        %v546 = vadd.f32 0.0, %v545
        %v547 = vpop.f32.mrb[0].mxu0
        %548 = vmatprep.mubr.f32.mxu0 0.0
        %549 = vmatmul.mubr.f32.gmra.mrb[0].mxu0 %v377
        %v550 = vpop.f32.mrb[0].mxu0
        %v551 = vadd.f32 0.0, %v550
        %v552 = vpop.f32.mrb[0].mxu0
        %553 = vmatprep.mubr.f32.mxu0 0.0
        %554 = vmatmul.mubr.f32.gmra.mrb[0].mxu0 %v380
        %v555 = vpop.f32.mrb[0].mxu0
        %v556 = vadd.f32 0.0, %v555
        %v557 = vpop.f32.mrb[0].mxu0
        %558 = vmatprep.mubr.f32.mxu0 0.0
        %559 = vmatmul.mubr.f32.gmra.mrb[0].mxu0 %v383
        %v560 = vpop.f32.mrb[0].mxu0
        %v561 = vadd.f32 0.0, %v560
        %v562 = vpop.f32.mrb[0].mxu0
        %563 = vmatprep.mubr.f32.mxu0 0.0
        %564 = vmatmul.mubr.f32.gmra.mrb[0].mxu0 %v386
        %v565 = vpop.f32.mrb[0].mxu0
        %v566 = vadd.f32 0.0, %v565
        %v567 = vpop.f32.mrb[0].mxu0
        %568 = vmatprep.mubr.f32.mxu0 0.0
        %569 = vmatmul.mubr.f32.gmra.mrb[0].mxu0 %v389
        %v570 = vpop.f32.mrb[0].mxu0
        %v571 = vadd.f32 0.0, %v570
        %v572 = vpop.f32.mrb[0].mxu0
        %573 = vmatprep.mubr.f32.mxu0 0.0
        %574 = vmatmul.mubr.f32.gmra.mrb[0].mxu0 %v392
        %v575 = vpop.f32.mrb[0].mxu0
        %v576 = vadd.f32 0.0, %v575
        %v577 = vpop.f32.mrb[0].mxu0
        %578 = vmatprep.mubr.f32.mxu0 0.0
        %579 = vmatmul.mubr.f32.gmra.mrb[0].mxu0 %v395
        %v580 = vpop.f32.mrb[0].mxu0
        %v581 = vadd.f32 0.0, %v580
        %v582 = vpop.f32.mrb[0].mxu0
        %583 = vmatprep.mubr.f32.mxu0 0.0
        %584 = vmatmul.mubr.f32.gmra.mrb[0].mxu0 %v398
        %v585 = vpop.f32.mrb[0].mxu0
        %v586 = vadd.f32 0.0, %v585
        %v587 = vpop.f32.mrb[0].mxu0
        %588 = vmatprep.mubr.f32.mxu0 0.0
        %589 = vmatmul.mubr.f32.gmra.mrb[0].mxu0 %v401
        %v590 = vpop.f32.mrb[0].mxu0
        %v591 = vadd.f32 0.0, %v590
        %v592 = vpop.f32.mrb[0].mxu0
        %593 = vmatprep.mubr.f32.mxu0 0.0
        %594 = vmatmul.mubr.f32.gmra.mrb[0].mxu0 %v404
        %v595 = vpop.f32.mrb[0].mxu0
        %v596 = vadd.f32 0.0, %v595
        %v597 = vpop.f32.mrb[0].mxu0
        %598 = vmatprep.mubr.f32.mxu0 0.0
        %599 = vmatmul.mubr.f32.gmra.mrb[0].mxu0 %v407
        %v600 = vpop.f32.mrb[0].mxu0
        %v601 = vadd.f32 0.0, %v600
        %v602 = vpop.f32.mrb[0].mxu0
        %603 = vmatprep.mubr.f32.mxu0 0.0
        %604 = vmatmul.mubr.f32.gmra.mrb[0].mxu0 %v410
        %v605 = vpop.f32.mrb[0].mxu0
        %v606 = vadd.f32 0.0, %v605
        %v607 = vpop.f32.mrb[0].mxu0
        %608 = vmatprep.mubr.f32.mxu0 0.0
        %609 = vmatmul.mubr.f32.gmra.mrb[0].mxu0 %v413
        %v610 = vpop.f32.mrb[0].mxu0
        %v611 = vadd.f32 0.0, %v610
        %v612 = vpop.f32.mrb[0].mxu0
        %613 = vmatprep.mubr.f32.mxu0 0.0
        %614 = vmatmul.mubr.f32.gmra.mrb[0].mxu0 %v416
        %v615 = vpop.f32.mrb[0].mxu0
        %v616 = vadd.f32 0.0, %v615
        %v617 = vpop.f32.mrb[0].mxu0
        %618 = vmatprep.mubr.f32.mxu0 0.0
        %619 = vmatmul.mubr.f32.gmra.mrb[0].mxu0 %v419
        %v620 = vpop.f32.mrb[0].mxu0
        %v621 = vadd.f32 0.0, %v620
        %v622 = vpop.f32.mrb[0].mxu0
        %623 = vmatprep.mubr.f32.mxu0 0.0
        %624 = vmatmul.mubr.f32.gmra.mrb[0].mxu0 %v422
        %v625 = vpop.f32.mrb[0].mxu0
        %v626 = vadd.f32 0.0, %v625
        %v627 = vpop.f32.mrb[0].mxu0
        %628 = vmatprep.mubr.f32.mxu0 0.0
        %629 = vmatmul.mubr.f32.gmra.mrb[0].mxu0 %v425
        %v630 = vpop.f32.mrb[0].mxu0
        %v631 = vadd.f32 0.0, %v630
        %v632 = vpop.f32.mrb[0].mxu0
        %633 = vmatprep.mubr.f32.mxu0 0.0
        %634 = vmatmul.mubr.f32.gmra.mrb[0].mxu0 %v428
        %v635 = vpop.f32.mrb[0].mxu0
        %v636 = vadd.f32 0.0, %v635
        %v637 = vpop.f32.mrb[0].mxu0
        %638 = vmatprep.mubr.f32.mxu0 0.0
        %639 = vmatmul.mubr.f32.gmra.mrb[0].mxu0 %v431
        %v640 = vpop.f32.mrb[0].mxu0
        %v641 = vadd.f32 0.0, %v640
        %v642 = vpop.f32.mrb[0].mxu0
        %643 = vmatprep.mubr.f32.mxu0 0.0
        %644 = vmatmul.mubr.f32.gmra.mrb[0].mxu0 %v434
        %v645 = vpop.f32.mrb[0].mxu0
        %v646 = vadd.f32 0.0, %v645
        %v647 = vpop.f32.mrb[0].mxu0
        %648 = vmatprep.mubr.f32.mxu0 0.0
        %649 = vmatmul.mubr.f32.gmra.mrb[0].mxu0 %v437
        %v650 = vpop.f32.mrb[0].mxu0
        %v651 = vadd.f32 0.0, %v650
        %v652 = vpop.f32.mrb[0].mxu0
        %653 = vmatprep.mubr.f32.mxu0 0.0
        %654 = vmatmul.mubr.f32.gmra.mrb[0].mxu0 %v440
        %v655 = vpop.f32.mrb[0].mxu0
        %v656 = vadd.f32 0.0, %v655
        %v657 = vpop.f32.mrb[0].mxu0
        %658 = vmatprep.mubr.f32.mxu0 0.0
        %659 = vmatmul.mubr.f32.gmra.mrb[0].mxu0 %v443
        %v660 = vpop.f32.mrb[0].mxu0
        %v661 = vadd.f32 0.0, %v660
        %v662 = vpop.f32.mrb[0].mxu0
        %663 = vmatprep.mubr.f32.mxu0 0.0
        %664 = vmatmul.mubr.f32.gmra.mrb[0].mxu0 %v446
        %v665 = vpop.f32.mrb[0].mxu0
        %v666 = vadd.f32 0.0, %v665
        %v667 = vpop.f32.mrb[0].mxu0
        %668 = vmatprep.mubr.f32.mxu0 0.0
        %669 = vmatmul.mubr.f32.gmra.mrb[0].mxu0 %v449
        %v670 = vpop.f32.mrb[0].mxu0
        %v671 = vadd.f32 0.0, %v670
        %v672 = vpop.f32.mrb[0].mxu0
        %673 = vmatprep.mubr.f32.mxu0 0.0
        %674 = vmatmul.mubr.f32.gmra.mrb[0].mxu0 %v452
        %v675 = vpop.f32.mrb[0].mxu0
        %v676 = vadd.f32 0.0, %v675
        %v677 = vpop.f32.mrb[0].mxu0
        %678 = vmatprep.mubr.f32.mxu0 0.0
        %679 = vmatmul.mubr.f32.gmra.mrb[0].mxu0 %v455
        %v680 = vpop.f32.mrb[0].mxu0
        %v681 = vadd.f32 0.0, %v680
        %v682 = vpop.f32.mrb[0].mxu0
        %683 = vmatprep.mubr.f32.mxu0 0.0
        %684 = vmatmul.mubr.f32.gmra.mrb[0].mxu0 %v458
        %v685 = vpop.f32.mrb[0].mxu0
        %v686 = vadd.f32 0.0, %v685
        %v687 = vpop.f32.mrb[0].mxu0
        %688 = vdwg.mxu0
        %v689 = vld [vmem:[%s3] sm:$0xff]
        %v690 = vld [vmem:[%s3 + $0x8] sm:$0xff]
        %v691 = vld [vmem:[%s3 + $0x10] sm:$0xff]
        %v692 = vld [vmem:[%s3 + $0x18] sm:$0xff]
        %v694 = vcombine.high %v329, %v329
        %v696 = vsel %vm363, %v689, 0
        %v699 = vsel %vm363, %v690, 0
        %v702 = vsel %vm363, %v691, 0
        %v705 = vsel %vm363, %v692, 0
        %v707 = vsel %vm460, %v329, 0
        %v709 = vsel %vm460, %v694, 0
        %711 = vmatprep.subr.mxu0 %v709
        %712 = vmatpush1.msra.mxu0 %v707
        %713 = vmatprep.subr.mxu0 0.0
        %714 = vmatpush1.msra.mxu0 0.0
        %715 = vmatprep.subr.mxu0 0.0
        %716 = vmatpush1.msra.mxu0 0.0
        %717 = vmatprep.subr.mxu0 0.0
        %718 = vmatpush1.msra.mxu0 0.0
        %719 = vmatprep.subr.mxu0 0.0
        %720 = vmatpush1.msra.mxu0 0.0
        %721 = vmatprep.subr.mxu0 0.0
        %722 = vmatpush1.msra.mxu0 0.0
        %723 = vmatprep.subr.mxu0 0.0
        %724 = vmatpush1.msra.mxu0 0.0
        %725 = vmatprep.subr.mxu0 0.0
        %726 = vmatpush1.msra.mxu0 0.0
        %727 = vmatprep.subr.mxu0 0.0
        %728 = vmatpush1.msra.mxu0 0.0
        %729 = vmatprep.subr.mxu0 0.0
        %730 = vmatpush1.msra.mxu0 0.0
        %731 = vmatprep.subr.mxu0 0.0
        %732 = vmatpush1.msra.mxu0 0.0
        %733 = vmatprep.subr.mxu0 0.0
        %734 = vmatpush1.msra.mxu0 0.0
        %735 = vmatprep.subr.mxu0 0.0
        %736 = vmatpush1.msra.mxu0 0.0
        %737 = vmatprep.subr.mxu0 0.0
        %738 = vmatpush1.msra.mxu0 0.0
        %739 = vmatprep.subr.mxu0 0.0
        %740 = vmatpush1.msra.mxu0 0.0
        %741 = vmatprep.subr.mxu0 0.0
        %742 = vmatpush1.msra.mxu0 0.0
        %743 = vmatprep.subr.mxu0 0.0
        %744 = vmatpush1.msra.mxu0 0.0
        %745 = vmatprep.subr.mxu0 0.0
        %746 = vmatpush1.msra.mxu0 0.0
        %747 = vmatprep.subr.mxu0 0.0
        %748 = vmatpush1.msra.mxu0 0.0
        %749 = vmatprep.subr.mxu0 0.0
        %750 = vmatpush1.msra.mxu0 0.0
        %751 = vmatprep.subr.mxu0 0.0
        %752 = vmatpush1.msra.mxu0 0.0
        %753 = vmatprep.subr.mxu0 0.0
        %754 = vmatpush1.msra.mxu0 0.0
        %755 = vmatprep.subr.mxu0 0.0
        %756 = vmatpush1.msra.mxu0 0.0
        %757 = vmatprep.subr.mxu0 0.0
        %758 = vmatpush1.msra.mxu0 0.0
        %759 = vmatprep.subr.mxu0 0.0
        %760 = vmatpush1.msra.mxu0 0.0
        %761 = vmatprep.subr.mxu0 0.0
        %762 = vmatpush1.msra.mxu0 0.0
        %763 = vmatprep.subr.mxu0 0.0
        %764 = vmatpush1.msra.mxu0 0.0
        %765 = vmatprep.subr.mxu0 0.0
        %766 = vmatpush1.msra.mxu0 0.0
        %767 = vmatprep.subr.mxu0 0.0
        %768 = vmatpush1.msra.mxu0 0.0
        %769 = vmatprep.subr.mxu0 0.0
        %770 = vmatpush1.msra.mxu0 0.0
        %771 = vmatprep.subr.mxu0 0.0
        %772 = vmatpush1.msra.mxu0 0.0
        %773 = vmatprep.subr.mxu0 0.0
        %774 = vmatpush1.msra.mxu0 0.0
        %775 = vmatprep.mubr.f32.mxu0 0.0
        %776 = vmatmul.mubr.f32.gmra.mrb[0].mxu0 %v696
        %v777 = vpop.f32.mrb[0].mxu0
        %v778 = vadd.f32 0.0, %v777
        %v779 = vpop.f32.mrb[0].mxu0
        %v780 = vadd.f32 0.0, %v779
        %781 = vmatprep.mubr.f32.mxu0 0.0
        %782 = vmatmul.mubr.f32.gmra.mrb[0].mxu0 %v699
        %v783 = vpop.f32.mrb[0].mxu0
        %v784 = vadd.f32 0.0, %v783
        %v785 = vpop.f32.mrb[0].mxu0
        %v786 = vadd.f32 0.0, %v785
        %787 = vmatprep.mubr.f32.mxu0 0.0
        %788 = vmatmul.mubr.f32.gmra.mrb[0].mxu0 %v702
        %v789 = vpop.f32.mrb[0].mxu0
        %v790 = vadd.f32 0.0, %v789
        %v791 = vpop.f32.mrb[0].mxu0
        %v792 = vadd.f32 0.0, %v791
        %793 = vmatprep.mubr.f32.mxu0 0.0
        %794 = vmatmul.mubr.f32.gmra.mrb[0].mxu0 %v705
        %v795 = vpop.f32.mrb[0].mxu0
        %v796 = vadd.f32 0.0, %v795
        %v797 = vpop.f32.mrb[0].mxu0
        %v798 = vadd.f32 0.0, %v797
        %799 = vdwg.mxu0
        %v800 = vld [vmem:[%s4] sm:$0xff]
        %v801 = vld [vmem:[%s4 + $0x8] sm:$0xff]
        %v802 = vld [vmem:[%s4 + $0x10] sm:$0xff]
        %v803 = vld [vmem:[%s4 + $0x18] sm:$0xff]
        %v805 = vsel %vm363, %v800, 0
        %v808 = vsel %vm363, %v801, 0
        %v811 = vsel %vm363, %v802, 0
        %v814 = vsel %vm363, %v803, 0
        %816 = vmatprep.subr.mxu0 %v709
        %817 = vmatpush1.msra.mxu0 %v707
        %818 = vmatprep.subr.mxu0 0.0
        %819 = vmatpush1.msra.mxu0 0.0
        %820 = vmatprep.subr.mxu0 0.0
        %821 = vmatpush1.msra.mxu0 0.0
        %822 = vmatprep.subr.mxu0 0.0
        %823 = vmatpush1.msra.mxu0 0.0
        %824 = vmatprep.subr.mxu0 0.0
        %825 = vmatpush1.msra.mxu0 0.0
        %826 = vmatprep.subr.mxu0 0.0
        %827 = vmatpush1.msra.mxu0 0.0
        %828 = vmatprep.subr.mxu0 0.0
        %829 = vmatpush1.msra.mxu0 0.0
        %830 = vmatprep.subr.mxu0 0.0
        %831 = vmatpush1.msra.mxu0 0.0
        %832 = vmatprep.subr.mxu0 0.0
        %833 = vmatpush1.msra.mxu0 0.0
        %834 = vmatprep.subr.mxu0 0.0
        %835 = vmatpush1.msra.mxu0 0.0
        %836 = vmatprep.subr.mxu0 0.0
        %837 = vmatpush1.msra.mxu0 0.0
        %838 = vmatprep.subr.mxu0 0.0
        %839 = vmatpush1.msra.mxu0 0.0
        %840 = vmatprep.subr.mxu0 0.0
        %841 = vmatpush1.msra.mxu0 0.0
        %842 = vmatprep.subr.mxu0 0.0
        %843 = vmatpush1.msra.mxu0 0.0
        %844 = vmatprep.subr.mxu0 0.0
        %845 = vmatpush1.msra.mxu0 0.0
        %846 = vmatprep.subr.mxu0 0.0
        %847 = vmatpush1.msra.mxu0 0.0
        %848 = vmatprep.subr.mxu0 0.0
        %849 = vmatpush1.msra.mxu0 0.0
        %850 = vmatprep.subr.mxu0 0.0
        %851 = vmatpush1.msra.mxu0 0.0
        %852 = vmatprep.subr.mxu0 0.0
        %853 = vmatpush1.msra.mxu0 0.0
        %854 = vmatprep.subr.mxu0 0.0
        %855 = vmatpush1.msra.mxu0 0.0
        %856 = vmatprep.subr.mxu0 0.0
        %857 = vmatpush1.msra.mxu0 0.0
        %858 = vmatprep.subr.mxu0 0.0
        %859 = vmatpush1.msra.mxu0 0.0
        %860 = vmatprep.subr.mxu0 0.0
        %861 = vmatpush1.msra.mxu0 0.0
        %862 = vmatprep.subr.mxu0 0.0
        %863 = vmatpush1.msra.mxu0 0.0
        %864 = vmatprep.subr.mxu0 0.0
        %865 = vmatpush1.msra.mxu0 0.0
        %866 = vmatprep.subr.mxu0 0.0
        %867 = vmatpush1.msra.mxu0 0.0
        %868 = vmatprep.subr.mxu0 0.0
        %869 = vmatpush1.msra.mxu0 0.0
        %870 = vmatprep.subr.mxu0 0.0
        %871 = vmatpush1.msra.mxu0 0.0
        %872 = vmatprep.subr.mxu0 0.0
        %873 = vmatpush1.msra.mxu0 0.0
        %874 = vmatprep.subr.mxu0 0.0
        %875 = vmatpush1.msra.mxu0 0.0
        %876 = vmatprep.subr.mxu0 0.0
        %877 = vmatpush1.msra.mxu0 0.0
        %878 = vmatprep.subr.mxu0 0.0
        %879 = vmatpush1.msra.mxu0 0.0
        %880 = vmatprep.mubr.f32.mxu0 0.0
        %881 = vmatmul.mubr.f32.gmra.mrb[0].mxu0 %v805
        %v882 = vpop.f32.mrb[0].mxu0
        %v883 = vadd.f32 0.0, %v882
        %v884 = vpop.f32.mrb[0].mxu0
        %v885 = vadd.f32 0.0, %v884
        %886 = vmatprep.mubr.f32.mxu0 0.0
        %887 = vmatmul.mubr.f32.gmra.mrb[0].mxu0 %v808
        %v888 = vpop.f32.mrb[0].mxu0
        %v889 = vadd.f32 0.0, %v888
        %v890 = vpop.f32.mrb[0].mxu0
        %v891 = vadd.f32 0.0, %v890
        %892 = vmatprep.mubr.f32.mxu0 0.0
        %893 = vmatmul.mubr.f32.gmra.mrb[0].mxu0 %v811
        %v894 = vpop.f32.mrb[0].mxu0
        %v895 = vadd.f32 0.0, %v894
        %v896 = vpop.f32.mrb[0].mxu0
        %v897 = vadd.f32 0.0, %v896
        %898 = vmatprep.mubr.f32.mxu0 0.0
        %899 = vmatmul.mubr.f32.gmra.mrb[0].mxu0 %v814
        %v900 = vpop.f32.mrb[0].mxu0
        %v901 = vadd.f32 0.0, %v900
        %v902 = vpop.f32.mrb[0].mxu0
        %v903 = vadd.f32 0.0, %v902
        %904 = vdwg.mxu0
        %v905 = vpack.c.bf16 %v536, %v531
        %v906 = vpack.c.bf16 %v546, %v541
        %v907 = vpack.c.bf16 %v556, %v551
        %v908 = vpack.c.bf16 %v566, %v561
        %v909 = vpack.c.bf16 %v576, %v571
        %v910 = vpack.c.bf16 %v586, %v581
        %v911 = vpack.c.bf16 %v596, %v591
        %v912 = vpack.c.bf16 %v606, %v601
        %v913 = vpack.c.bf16 %v616, %v611
        %v914 = vpack.c.bf16 %v626, %v621
        %v915 = vpack.c.bf16 %v636, %v631
        %v916 = vpack.c.bf16 %v646, %v641
        %v917 = vpack.c.bf16 %v656, %v651
        %v918 = vpack.c.bf16 %v666, %v661
        %v919 = vpack.c.bf16 %v676, %v671
        %v920 = vpack.c.bf16 %v686, %v681
        %v921 = vpack.c.bf16 %v784, %v778
        %v922 = vpack.c.bf16 %v786, %v780
        %v923 = vpack.c.bf16 %v796, %v790
        %v924 = vpack.c.bf16 %v798, %v792
        %v925 = vpack.c.bf16 %v889, %v883
        %v926 = vpack.c.bf16 %v891, %v885
        %v927 = vpack.c.bf16 %v901, %v895
        %v928 = vpack.c.bf16 %v903, %v897
        %vm929 = vcmask 261120
        %v931 = vsel %vm929, %v905, 0
        %v934 = vsel %vm929, %v906, 0
        %v937 = vsel %vm929, %v907, 0
        %v940 = vsel %vm929, %v908, 0
        %v943 = vsel %vm929, %v909, 0
        %v946 = vsel %vm929, %v910, 0
        %v949 = vsel %vm929, %v911, 0
        %v952 = vsel %vm929, %v912, 0
        %v955 = vsel %vm929, %v913, 0
        %v958 = vsel %vm929, %v914, 0
        %v961 = vsel %vm929, %v915, 0
        %v964 = vsel %vm929, %v916, 0
        %v967 = vsel %vm929, %v917, 0
        %v970 = vsel %vm929, %v918, 0
        %v973 = vsel %vm929, %v919, 0
        %v976 = vsel %vm929, %v920, 0
        %978 = vmatprep.subr.bf16.mxu0 %v922
        %979 = vmatpush1.bf16.msra.mxu0 %v921
        %980 = vmatprep.subr.bf16.mxu0 %v924
        %981 = vmatpush1.bf16.msra.mxu0 %v923
        %982 = vmatprep.subr.bf16.mxu0 0
        %983 = vmatpush1.bf16.msra.mxu0 0
        %984 = vmatprep.subr.bf16.mxu0 0
        %985 = vmatpush1.bf16.msra.mxu0 0
        %986 = vmatprep.subr.bf16.mxu0 0
        %987 = vmatpush1.bf16.msra.mxu0 0
        %988 = vmatprep.subr.bf16.mxu0 0
        %989 = vmatpush1.bf16.msra.mxu0 0
        %990 = vmatprep.subr.bf16.mxu0 0
        %991 = vmatpush1.bf16.msra.mxu0 0
        %992 = vmatprep.subr.bf16.mxu0 0
        %993 = vmatpush1.bf16.msra.mxu0 0
        %994 = vmatprep.subr.bf16.mxu0 0
        %995 = vmatpush1.bf16.msra.mxu0 0
        %996 = vmatprep.subr.bf16.mxu0 0
        %997 = vmatpush1.bf16.msra.mxu0 0
        %998 = vmatprep.subr.bf16.mxu0 0
        %999 = vmatpush1.bf16.msra.mxu0 0
        %1000 = vmatprep.subr.bf16.mxu0 0
        %1001 = vmatpush1.bf16.msra.mxu0 0
        %1002 = vmatprep.subr.bf16.mxu0 0
        %1003 = vmatpush1.bf16.msra.mxu0 0
        %1004 = vmatprep.subr.bf16.mxu0 0
        %1005 = vmatpush1.bf16.msra.mxu0 0
        %1006 = vmatprep.subr.bf16.mxu0 0
        %1007 = vmatpush1.bf16.msra.mxu0 0
        %1008 = vmatprep.subr.bf16.mxu0 0
        %1009 = vmatpush1.bf16.msra.mxu0 0
        %1010 = vmatprep.mubr.bf16.mxu0 0
        %1011 = vmatmul.mubr.bf16.gmra.mrb[0].mxu0 %v931
        %v1012 = vpop.f32.mrb[0].mxu0
        %v1013 = vadd.f32 0.0, %v1012
        %v1014 = vpop.f32.mrb[0].mxu0
        %v1015 = vadd.f32 0.0, %v1014
        %v1016 = vpop.f32.mrb[0].mxu0
        %v1017 = vadd.f32 0.0, %v1016
        %v1018 = vpop.f32.mrb[0].mxu0
        %v1019 = vadd.f32 0.0, %v1018
        %1020 = vmatprep.mubr.bf16.mxu0 0
        %1021 = vmatmul.mubr.bf16.gmra.mrb[0].mxu0 %v934
        %v1022 = vpop.f32.mrb[0].mxu0
        %v1023 = vadd.f32 0.0, %v1022
        %v1024 = vpop.f32.mrb[0].mxu0
        %v1025 = vadd.f32 0.0, %v1024
        %v1026 = vpop.f32.mrb[0].mxu0
        %v1027 = vadd.f32 0.0, %v1026
        %v1028 = vpop.f32.mrb[0].mxu0
        %v1029 = vadd.f32 0.0, %v1028
        %1030 = vmatprep.mubr.bf16.mxu0 0
        %1031 = vmatmul.mubr.bf16.gmra.mrb[0].mxu0 %v937
        %v1032 = vpop.f32.mrb[0].mxu0
        %v1033 = vadd.f32 0.0, %v1032
        %v1034 = vpop.f32.mrb[0].mxu0
        %v1035 = vadd.f32 0.0, %v1034
        %v1036 = vpop.f32.mrb[0].mxu0
        %v1037 = vadd.f32 0.0, %v1036
        %v1038 = vpop.f32.mrb[0].mxu0
        %v1039 = vadd.f32 0.0, %v1038
        %1040 = vmatprep.mubr.bf16.mxu0 0
        %1041 = vmatmul.mubr.bf16.gmra.mrb[0].mxu0 %v940
        %v1042 = vpop.f32.mrb[0].mxu0
        %v1043 = vadd.f32 0.0, %v1042
        %v1044 = vpop.f32.mrb[0].mxu0
        %v1045 = vadd.f32 0.0, %v1044
        %v1046 = vpop.f32.mrb[0].mxu0
        %v1047 = vadd.f32 0.0, %v1046
        %v1048 = vpop.f32.mrb[0].mxu0
        %v1049 = vadd.f32 0.0, %v1048
        %1050 = vmatprep.mubr.bf16.mxu0 0
        %1051 = vmatmul.mubr.bf16.gmra.mrb[0].mxu0 %v943
        %v1052 = vpop.f32.mrb[0].mxu0
        %v1053 = vadd.f32 0.0, %v1052
        %v1054 = vpop.f32.mrb[0].mxu0
        %v1055 = vadd.f32 0.0, %v1054
        %v1056 = vpop.f32.mrb[0].mxu0
        %v1057 = vadd.f32 0.0, %v1056
        %v1058 = vpop.f32.mrb[0].mxu0
        %v1059 = vadd.f32 0.0, %v1058
        %1060 = vmatprep.mubr.bf16.mxu0 0
        %1061 = vmatmul.mubr.bf16.gmra.mrb[0].mxu0 %v946
        %v1062 = vpop.f32.mrb[0].mxu0
        %v1063 = vadd.f32 0.0, %v1062
        %v1064 = vpop.f32.mrb[0].mxu0
        %v1065 = vadd.f32 0.0, %v1064
        %v1066 = vpop.f32.mrb[0].mxu0
        %v1067 = vadd.f32 0.0, %v1066
        %v1068 = vpop.f32.mrb[0].mxu0
        %v1069 = vadd.f32 0.0, %v1068
        %1070 = vmatprep.mubr.bf16.mxu0 0
        %1071 = vmatmul.mubr.bf16.gmra.mrb[0].mxu0 %v949
        %v1072 = vpop.f32.mrb[0].mxu0
        %v1073 = vadd.f32 0.0, %v1072
        %v1074 = vpop.f32.mrb[0].mxu0
        %v1075 = vadd.f32 0.0, %v1074
        %v1076 = vpop.f32.mrb[0].mxu0
        %v1077 = vadd.f32 0.0, %v1076
        %v1078 = vpop.f32.mrb[0].mxu0
        %v1079 = vadd.f32 0.0, %v1078
        %1080 = vmatprep.mubr.bf16.mxu0 0
        %1081 = vmatmul.mubr.bf16.gmra.mrb[0].mxu0 %v952
        %v1082 = vpop.f32.mrb[0].mxu0
        %v1083 = vadd.f32 0.0, %v1082
        %v1084 = vpop.f32.mrb[0].mxu0
        %v1085 = vadd.f32 0.0, %v1084
        %v1086 = vpop.f32.mrb[0].mxu0
        %v1087 = vadd.f32 0.0, %v1086
        %v1088 = vpop.f32.mrb[0].mxu0
        %v1089 = vadd.f32 0.0, %v1088
        %1090 = vmatprep.mubr.bf16.mxu0 0
        %1091 = vmatmul.mubr.bf16.gmra.mrb[0].mxu0 %v955
        %v1092 = vpop.f32.mrb[0].mxu0
        %v1093 = vadd.f32 0.0, %v1092
        %v1094 = vpop.f32.mrb[0].mxu0
        %v1095 = vadd.f32 0.0, %v1094
        %v1096 = vpop.f32.mrb[0].mxu0
        %v1097 = vadd.f32 0.0, %v1096
        %v1098 = vpop.f32.mrb[0].mxu0
        %v1099 = vadd.f32 0.0, %v1098
        %1100 = vmatprep.mubr.bf16.mxu0 0
        %1101 = vmatmul.mubr.bf16.gmra.mrb[0].mxu0 %v958
        %v1102 = vpop.f32.mrb[0].mxu0
        %v1103 = vadd.f32 0.0, %v1102
        %v1104 = vpop.f32.mrb[0].mxu0
        %v1105 = vadd.f32 0.0, %v1104
        %v1106 = vpop.f32.mrb[0].mxu0
        %v1107 = vadd.f32 0.0, %v1106
        %v1108 = vpop.f32.mrb[0].mxu0
        %v1109 = vadd.f32 0.0, %v1108
        %1110 = vmatprep.mubr.bf16.mxu0 0
        %1111 = vmatmul.mubr.bf16.gmra.mrb[0].mxu0 %v961
        %v1112 = vpop.f32.mrb[0].mxu0
        %v1113 = vadd.f32 0.0, %v1112
        %v1114 = vpop.f32.mrb[0].mxu0
        %v1115 = vadd.f32 0.0, %v1114
        %v1116 = vpop.f32.mrb[0].mxu0
        %v1117 = vadd.f32 0.0, %v1116
        %v1118 = vpop.f32.mrb[0].mxu0
        %v1119 = vadd.f32 0.0, %v1118
        %1120 = vmatprep.mubr.bf16.mxu0 0
        %1121 = vmatmul.mubr.bf16.gmra.mrb[0].mxu0 %v964
        %v1122 = vpop.f32.mrb[0].mxu0
        %v1123 = vadd.f32 0.0, %v1122
        %v1124 = vpop.f32.mrb[0].mxu0
        %v1125 = vadd.f32 0.0, %v1124
        %v1126 = vpop.f32.mrb[0].mxu0
        %v1127 = vadd.f32 0.0, %v1126
        %v1128 = vpop.f32.mrb[0].mxu0
        %v1129 = vadd.f32 0.0, %v1128
        %1130 = vmatprep.mubr.bf16.mxu0 0
        %1131 = vmatmul.mubr.bf16.gmra.mrb[0].mxu0 %v967
        %v1132 = vpop.f32.mrb[0].mxu0
        %v1133 = vadd.f32 0.0, %v1132
        %v1134 = vpop.f32.mrb[0].mxu0
        %v1135 = vadd.f32 0.0, %v1134
        %v1136 = vpop.f32.mrb[0].mxu0
        %v1137 = vadd.f32 0.0, %v1136
        %v1138 = vpop.f32.mrb[0].mxu0
        %v1139 = vadd.f32 0.0, %v1138
        %1140 = vmatprep.mubr.bf16.mxu0 0
        %1141 = vmatmul.mubr.bf16.gmra.mrb[0].mxu0 %v970
        %v1142 = vpop.f32.mrb[0].mxu0
        %v1143 = vadd.f32 0.0, %v1142
        %v1144 = vpop.f32.mrb[0].mxu0
        %v1145 = vadd.f32 0.0, %v1144
        %v1146 = vpop.f32.mrb[0].mxu0
        %v1147 = vadd.f32 0.0, %v1146
        %v1148 = vpop.f32.mrb[0].mxu0
        %v1149 = vadd.f32 0.0, %v1148
        %1150 = vmatprep.mubr.bf16.mxu0 0
        %1151 = vmatmul.mubr.bf16.gmra.mrb[0].mxu0 %v973
        %v1152 = vpop.f32.mrb[0].mxu0
        %v1153 = vadd.f32 0.0, %v1152
        %v1154 = vpop.f32.mrb[0].mxu0
        %v1155 = vadd.f32 0.0, %v1154
        %v1156 = vpop.f32.mrb[0].mxu0
        %v1157 = vadd.f32 0.0, %v1156
        %v1158 = vpop.f32.mrb[0].mxu0
        %v1159 = vadd.f32 0.0, %v1158
        %1160 = vmatprep.mubr.bf16.mxu0 0
        %1161 = vmatmul.mubr.bf16.gmra.mrb[0].mxu0 %v976
        %v1162 = vpop.f32.mrb[0].mxu0
        %v1163 = vadd.f32 0.0, %v1162
        %v1164 = vpop.f32.mrb[0].mxu0
        %v1165 = vadd.f32 0.0, %v1164
        %v1166 = vpop.f32.mrb[0].mxu0
        %v1167 = vadd.f32 0.0, %v1166
        %v1168 = vpop.f32.mrb[0].mxu0
        %v1169 = vadd.f32 0.0, %v1168
        %1170 = vdwg.mxu0
        %v1171 = vmax.f32 %v1013, %v1015
        %1172 = vmax.xlane.f32.xlu0 %v1171
        %v1173 = vpop.xlane.xlu0 %1172
        %v1174 = vmax.f32 %v1017, %v1019
        %1175 = vmax.xlane.f32.xlu0 %v1174
        %v1176 = vpop.xlane.xlu0 %1175
        %v1177 = vmax.f32 %v1023, %v1025
        %1178 = vmax.xlane.f32.xlu0 %v1177
        %v1179 = vpop.xlane.xlu0 %1178
        %v1180 = vmax.f32 %v1027, %v1029
        %1181 = vmax.xlane.f32.xlu0 %v1180
        %v1182 = vpop.xlane.xlu0 %1181
        %v1183 = vmax.f32 %v1033, %v1035
        %1184 = vmax.xlane.f32.xlu0 %v1183
        %v1185 = vpop.xlane.xlu0 %1184
        %v1186 = vmax.f32 %v1037, %v1039
        %1187 = vmax.xlane.f32.xlu0 %v1186
        %v1188 = vpop.xlane.xlu0 %1187
        %v1189 = vmax.f32 %v1043, %v1045
        %1190 = vmax.xlane.f32.xlu0 %v1189
        %v1191 = vpop.xlane.xlu0 %1190
        %v1192 = vmax.f32 %v1047, %v1049
        %1193 = vmax.xlane.f32.xlu0 %v1192
        %v1194 = vpop.xlane.xlu0 %1193
        %v1195 = vmax.f32 %v1053, %v1055
        %1196 = vmax.xlane.f32.xlu0 %v1195
        %v1197 = vpop.xlane.xlu0 %1196
        %v1198 = vmax.f32 %v1057, %v1059
        %1199 = vmax.xlane.f32.xlu0 %v1198
        %v1200 = vpop.xlane.xlu0 %1199
        %v1201 = vmax.f32 %v1063, %v1065
        %1202 = vmax.xlane.f32.xlu0 %v1201
        %v1203 = vpop.xlane.xlu0 %1202
        %v1204 = vmax.f32 %v1067, %v1069
        %1205 = vmax.xlane.f32.xlu0 %v1204
        %v1206 = vpop.xlane.xlu0 %1205
        %v1207 = vmax.f32 %v1073, %v1075
        %1208 = vmax.xlane.f32.xlu0 %v1207
        %v1209 = vpop.xlane.xlu0 %1208
        %v1210 = vmax.f32 %v1077, %v1079
        %1211 = vmax.xlane.f32.xlu0 %v1210
        %v1212 = vpop.xlane.xlu0 %1211
        %v1213 = vmax.f32 %v1083, %v1085
        %1214 = vmax.xlane.f32.xlu0 %v1213
        %v1215 = vpop.xlane.xlu0 %1214
        %v1216 = vmax.f32 %v1087, %v1089
        %1217 = vmax.xlane.f32.xlu0 %v1216
        %v1218 = vpop.xlane.xlu0 %1217
        %v1219 = vmax.f32 %v1093, %v1095
        %1220 = vmax.xlane.f32.xlu0 %v1219
        %v1221 = vpop.xlane.xlu0 %1220
        %v1222 = vmax.f32 %v1097, %v1099
        %1223 = vmax.xlane.f32.xlu0 %v1222
        %v1224 = vpop.xlane.xlu0 %1223
        %v1225 = vmax.f32 %v1103, %v1105
        %1226 = vmax.xlane.f32.xlu0 %v1225
        %v1227 = vpop.xlane.xlu0 %1226
        %v1228 = vmax.f32 %v1107, %v1109
        %1229 = vmax.xlane.f32.xlu0 %v1228
        %v1230 = vpop.xlane.xlu0 %1229
        %v1231 = vmax.f32 %v1113, %v1115
        %1232 = vmax.xlane.f32.xlu0 %v1231
        %v1233 = vpop.xlane.xlu0 %1232
        %v1234 = vmax.f32 %v1117, %v1119
        %1235 = vmax.xlane.f32.xlu0 %v1234
        %v1236 = vpop.xlane.xlu0 %1235
        %v1237 = vmax.f32 %v1123, %v1125
        %1238 = vmax.xlane.f32.xlu0 %v1237
        %v1239 = vpop.xlane.xlu0 %1238
        %v1240 = vmax.f32 %v1127, %v1129
        %1241 = vmax.xlane.f32.xlu0 %v1240
        %v1242 = vpop.xlane.xlu0 %1241
        %v1243 = vmax.f32 %v1133, %v1135
        %1244 = vmax.xlane.f32.xlu0 %v1243
        %v1245 = vpop.xlane.xlu0 %1244
        %v1246 = vmax.f32 %v1137, %v1139
        %1247 = vmax.xlane.f32.xlu0 %v1246
        %v1248 = vpop.xlane.xlu0 %1247
        %v1249 = vmax.f32 %v1143, %v1145
        %1250 = vmax.xlane.f32.xlu0 %v1249
        %v1251 = vpop.xlane.xlu0 %1250
        %v1252 = vmax.f32 %v1147, %v1149
        %1253 = vmax.xlane.f32.xlu0 %v1252
        %v1254 = vpop.xlane.xlu0 %1253
        %v1255 = vmax.f32 %v1153, %v1155
        %1256 = vmax.xlane.f32.xlu0 %v1255
        %v1257 = vpop.xlane.xlu0 %1256
        %v1258 = vmax.f32 %v1157, %v1159
        %1259 = vmax.xlane.f32.xlu0 %v1258
        %v1260 = vpop.xlane.xlu0 %1259
        %v1261 = vmax.f32 %v1163, %v1165
        %1262 = vmax.xlane.f32.xlu0 %v1261
        %v1263 = vpop.xlane.xlu0 %1262
        %v1264 = vmax.f32 %v1167, %v1169
        %1265 = vmax.xlane.f32.xlu0 %v1264
        %v1266 = vpop.xlane.xlu0 %1265
        %v1267 = vsub.f32 %v1013, %v1173
        %v1268 = vsub.f32 %v1015, %v1173
        %v1269 = vsub.f32 %v1017, %v1176
        %v1270 = vsub.f32 %v1019, %v1176
        %v1271 = vsub.f32 %v1023, %v1179
        %v1272 = vsub.f32 %v1025, %v1179
        %v1273 = vsub.f32 %v1027, %v1182
        %v1274 = vsub.f32 %v1029, %v1182
        %v1275 = vsub.f32 %v1033, %v1185
        %v1276 = vsub.f32 %v1035, %v1185
        %v1277 = vsub.f32 %v1037, %v1188
        %v1278 = vsub.f32 %v1039, %v1188
        %v1279 = vsub.f32 %v1043, %v1191
        %v1280 = vsub.f32 %v1045, %v1191
        %v1281 = vsub.f32 %v1047, %v1194
        %v1282 = vsub.f32 %v1049, %v1194
        %v1283 = vsub.f32 %v1053, %v1197
        %v1284 = vsub.f32 %v1055, %v1197
        %v1285 = vsub.f32 %v1057, %v1200
        %v1286 = vsub.f32 %v1059, %v1200
        %v1287 = vsub.f32 %v1063, %v1203
        %v1288 = vsub.f32 %v1065, %v1203
        %v1289 = vsub.f32 %v1067, %v1206
        %v1290 = vsub.f32 %v1069, %v1206
        %v1291 = vsub.f32 %v1073, %v1209
        %v1292 = vsub.f32 %v1075, %v1209
        %v1293 = vsub.f32 %v1077, %v1212
        %v1294 = vsub.f32 %v1079, %v1212
        %v1295 = vsub.f32 %v1083, %v1215
        %v1296 = vsub.f32 %v1085, %v1215
        %v1297 = vsub.f32 %v1087, %v1218
        %v1298 = vsub.f32 %v1089, %v1218
        %v1299 = vsub.f32 %v1093, %v1221
        %v1300 = vsub.f32 %v1095, %v1221
        %v1301 = vsub.f32 %v1097, %v1224
        %v1302 = vsub.f32 %v1099, %v1224
        %v1303 = vsub.f32 %v1103, %v1227
        %v1304 = vsub.f32 %v1105, %v1227
        %v1305 = vsub.f32 %v1107, %v1230
        %v1306 = vsub.f32 %v1109, %v1230
        %v1307 = vsub.f32 %v1113, %v1233
        %v1308 = vsub.f32 %v1115, %v1233
        %v1309 = vsub.f32 %v1117, %v1236
        %v1310 = vsub.f32 %v1119, %v1236
        %v1311 = vsub.f32 %v1123, %v1239
        %v1312 = vsub.f32 %v1125, %v1239
        %v1313 = vsub.f32 %v1127, %v1242
        %v1314 = vsub.f32 %v1129, %v1242
        %v1315 = vsub.f32 %v1133, %v1245
        %v1316 = vsub.f32 %v1135, %v1245
        %v1317 = vsub.f32 %v1137, %v1248
        %v1318 = vsub.f32 %v1139, %v1248
        %v1319 = vsub.f32 %v1143, %v1251
        %v1320 = vsub.f32 %v1145, %v1251
        %v1321 = vsub.f32 %v1147, %v1254
        %v1322 = vsub.f32 %v1149, %v1254
        %v1323 = vsub.f32 %v1153, %v1257
        %v1324 = vsub.f32 %v1155, %v1257
        %v1325 = vsub.f32 %v1157, %v1260
        %v1326 = vsub.f32 %v1159, %v1260
        %v1327 = vsub.f32 %v1163, %v1263
        %v1328 = vsub.f32 %v1165, %v1263
        %v1329 = vsub.f32 %v1167, %v1266
        %v1330 = vsub.f32 %v1169, %v1266
        %v1331 = vmul.f32 %v1267, 1.442695
        %v1332 = vpow.pop %v1331
        %v1333 = vmul.f32 %v1268, 1.442695
        %v1334 = vpow.pop %v1333
        %v1335 = vmul.f32 %v1269, 1.442695
        %v1336 = vpow.pop %v1335
        %v1337 = vmul.f32 %v1270, 1.442695
        %v1338 = vpow.pop %v1337
        %v1339 = vmul.f32 %v1271, 1.442695
        %v1340 = vpow.pop %v1339
        %v1341 = vmul.f32 %v1272, 1.442695
        %v1342 = vpow.pop %v1341
        %v1343 = vmul.f32 %v1273, 1.442695
        %v1344 = vpow.pop %v1343
        %v1345 = vmul.f32 %v1274, 1.442695
        %v1346 = vpow.pop %v1345
        %v1347 = vmul.f32 %v1275, 1.442695
        %v1348 = vpow.pop %v1347
        %v1349 = vmul.f32 %v1276, 1.442695
        %v1350 = vpow.pop %v1349
        %v1351 = vmul.f32 %v1277, 1.442695
        %v1352 = vpow.pop %v1351
        %v1353 = vmul.f32 %v1278, 1.442695
        %v1354 = vpow.pop %v1353
        %v1355 = vmul.f32 %v1279, 1.442695
        %v1356 = vpow.pop %v1355
        %v1357 = vmul.f32 %v1280, 1.442695
        %v1358 = vpow.pop %v1357
        %v1359 = vmul.f32 %v1281, 1.442695
        %v1360 = vpow.pop %v1359
        %v1361 = vmul.f32 %v1282, 1.442695
        %v1362 = vpow.pop %v1361
        %v1363 = vmul.f32 %v1283, 1.442695
        %v1364 = vpow.pop %v1363
        %v1365 = vmul.f32 %v1284, 1.442695
        %v1366 = vpow.pop %v1365
        %v1367 = vmul.f32 %v1285, 1.442695
        %v1368 = vpow.pop %v1367
        %v1369 = vmul.f32 %v1286, 1.442695
        %v1370 = vpow.pop %v1369
        %v1371 = vmul.f32 %v1287, 1.442695
        %v1372 = vpow.pop %v1371
        %v1373 = vmul.f32 %v1288, 1.442695
        %v1374 = vpow.pop %v1373
        %v1375 = vmul.f32 %v1289, 1.442695
        %v1376 = vpow.pop %v1375
        %v1377 = vmul.f32 %v1290, 1.442695
        %v1378 = vpow.pop %v1377
        %v1379 = vmul.f32 %v1291, 1.442695
        %v1380 = vpow.pop %v1379
        %v1381 = vmul.f32 %v1292, 1.442695
        %v1382 = vpow.pop %v1381
        %v1383 = vmul.f32 %v1293, 1.442695
        %v1384 = vpow.pop %v1383
        %v1385 = vmul.f32 %v1294, 1.442695
        %v1386 = vpow.pop %v1385
        %v1387 = vmul.f32 %v1295, 1.442695
        %v1388 = vpow.pop %v1387
        %v1389 = vmul.f32 %v1296, 1.442695
        %v1390 = vpow.pop %v1389
        %v1391 = vmul.f32 %v1297, 1.442695
        %v1392 = vpow.pop %v1391
        %v1393 = vmul.f32 %v1298, 1.442695
        %v1394 = vpow.pop %v1393
        %v1395 = vmul.f32 %v1299, 1.442695
        %v1396 = vpow.pop %v1395
        %v1397 = vmul.f32 %v1300, 1.442695
        %v1398 = vpow.pop %v1397
        %v1399 = vmul.f32 %v1301, 1.442695
        %v1400 = vpow.pop %v1399
        %v1401 = vmul.f32 %v1302, 1.442695
        %v1402 = vpow.pop %v1401
        %v1403 = vmul.f32 %v1303, 1.442695
        %v1404 = vpow.pop %v1403
        %v1405 = vmul.f32 %v1304, 1.442695
        %v1406 = vpow.pop %v1405
        %v1407 = vmul.f32 %v1305, 1.442695
        %v1408 = vpow.pop %v1407
        %v1409 = vmul.f32 %v1306, 1.442695
        %v1410 = vpow.pop %v1409
        %v1411 = vmul.f32 %v1307, 1.442695
        %v1412 = vpow.pop %v1411
        %v1413 = vmul.f32 %v1308, 1.442695
        %v1414 = vpow.pop %v1413
        %v1415 = vmul.f32 %v1309, 1.442695
        %v1416 = vpow.pop %v1415
        %v1417 = vmul.f32 %v1310, 1.442695
        %v1418 = vpow.pop %v1417
        %v1419 = vmul.f32 %v1311, 1.442695
        %v1420 = vpow.pop %v1419
        %v1421 = vmul.f32 %v1312, 1.442695
        %v1422 = vpow.pop %v1421
        %v1423 = vmul.f32 %v1313, 1.442695
        %v1424 = vpow.pop %v1423
        %v1425 = vmul.f32 %v1314, 1.442695
        %v1426 = vpow.pop %v1425
        %v1427 = vmul.f32 %v1315, 1.442695
        %v1428 = vpow.pop %v1427
        %v1429 = vmul.f32 %v1316, 1.442695
        %v1430 = vpow.pop %v1429
        %v1431 = vmul.f32 %v1317, 1.442695
        %v1432 = vpow.pop %v1431
        %v1433 = vmul.f32 %v1318, 1.442695
        %v1434 = vpow.pop %v1433
        %v1435 = vmul.f32 %v1319, 1.442695
        %v1436 = vpow.pop %v1435
        %v1437 = vmul.f32 %v1320, 1.442695
        %v1438 = vpow.pop %v1437
        %v1439 = vmul.f32 %v1321, 1.442695
        %v1440 = vpow.pop %v1439
        %v1441 = vmul.f32 %v1322, 1.442695
        %v1442 = vpow.pop %v1441
        %v1443 = vmul.f32 %v1323, 1.442695
        %v1444 = vpow.pop %v1443
        %v1445 = vmul.f32 %v1324, 1.442695
        %v1446 = vpow.pop %v1445
        %v1447 = vmul.f32 %v1325, 1.442695
        %v1448 = vpow.pop %v1447
        %v1449 = vmul.f32 %v1326, 1.442695
        %v1450 = vpow.pop %v1449
        %v1451 = vmul.f32 %v1327, 1.442695
        %v1452 = vpow.pop %v1451
        %v1453 = vmul.f32 %v1328, 1.442695
        %v1454 = vpow.pop %v1453
        %v1455 = vmul.f32 %v1329, 1.442695
        %v1456 = vpow.pop %v1455
        %v1457 = vmul.f32 %v1330, 1.442695
        %v1458 = vpow.pop %v1457
        %v1459 = vadd.f32 %v1332, %v1334
        %1460 = vadd.xlane.f32.xlu0 %v1459
        %v1461 = vpop.xlane.xlu0 %1460
        %v1462 = vadd.f32 %v1336, %v1338
        %1463 = vadd.xlane.f32.xlu0 %v1462
        %v1464 = vpop.xlane.xlu0 %1463
        %v1465 = vadd.f32 %v1340, %v1342
        %1466 = vadd.xlane.f32.xlu0 %v1465
        %v1467 = vpop.xlane.xlu0 %1466
        %v1468 = vadd.f32 %v1344, %v1346
        %1469 = vadd.xlane.f32.xlu0 %v1468
        %v1470 = vpop.xlane.xlu0 %1469
        %v1471 = vadd.f32 %v1348, %v1350
        %1472 = vadd.xlane.f32.xlu0 %v1471
        %v1473 = vpop.xlane.xlu0 %1472
        %v1474 = vadd.f32 %v1352, %v1354
        %1475 = vadd.xlane.f32.xlu0 %v1474
        %v1476 = vpop.xlane.xlu0 %1475
        %v1477 = vadd.f32 %v1356, %v1358
        %1478 = vadd.xlane.f32.xlu0 %v1477
        %v1479 = vpop.xlane.xlu0 %1478
        %v1480 = vadd.f32 %v1360, %v1362
        %1481 = vadd.xlane.f32.xlu0 %v1480
        %v1482 = vpop.xlane.xlu0 %1481
        %v1483 = vadd.f32 %v1364, %v1366
        %1484 = vadd.xlane.f32.xlu0 %v1483
        %v1485 = vpop.xlane.xlu0 %1484
        %v1486 = vadd.f32 %v1368, %v1370
        %1487 = vadd.xlane.f32.xlu0 %v1486
        %v1488 = vpop.xlane.xlu0 %1487
        %v1489 = vadd.f32 %v1372, %v1374
        %1490 = vadd.xlane.f32.xlu0 %v1489
        %v1491 = vpop.xlane.xlu0 %1490
        %v1492 = vadd.f32 %v1376, %v1378
        %1493 = vadd.xlane.f32.xlu0 %v1492
        %v1494 = vpop.xlane.xlu0 %1493
        %v1495 = vadd.f32 %v1380, %v1382
        %1496 = vadd.xlane.f32.xlu0 %v1495
        %v1497 = vpop.xlane.xlu0 %1496
        %v1498 = vadd.f32 %v1384, %v1386
        %1499 = vadd.xlane.f32.xlu0 %v1498
        %v1500 = vpop.xlane.xlu0 %1499
        %v1501 = vadd.f32 %v1388, %v1390
        %1502 = vadd.xlane.f32.xlu0 %v1501
        %v1503 = vpop.xlane.xlu0 %1502
        %v1504 = vadd.f32 %v1392, %v1394
        %1505 = vadd.xlane.f32.xlu0 %v1504
        %v1506 = vpop.xlane.xlu0 %1505
        %v1507 = vadd.f32 %v1396, %v1398
        %1508 = vadd.xlane.f32.xlu0 %v1507
        %v1509 = vpop.xlane.xlu0 %1508
        %v1510 = vadd.f32 %v1400, %v1402
        %1511 = vadd.xlane.f32.xlu0 %v1510
        %v1512 = vpop.xlane.xlu0 %1511
        %v1513 = vadd.f32 %v1404, %v1406
        %1514 = vadd.xlane.f32.xlu0 %v1513
        %v1515 = vpop.xlane.xlu0 %1514
        %v1516 = vadd.f32 %v1408, %v1410
        %1517 = vadd.xlane.f32.xlu0 %v1516
        %v1518 = vpop.xlane.xlu0 %1517
        %v1519 = vadd.f32 %v1412, %v1414
        %1520 = vadd.xlane.f32.xlu0 %v1519
        %v1521 = vpop.xlane.xlu0 %1520
        %v1522 = vadd.f32 %v1416, %v1418
        %1523 = vadd.xlane.f32.xlu0 %v1522
        %v1524 = vpop.xlane.xlu0 %1523
        %v1525 = vadd.f32 %v1420, %v1422
        %1526 = vadd.xlane.f32.xlu0 %v1525
        %v1527 = vpop.xlane.xlu0 %1526
        %v1528 = vadd.f32 %v1424, %v1426
        %1529 = vadd.xlane.f32.xlu0 %v1528
        %v1530 = vpop.xlane.xlu0 %1529
        %v1531 = vadd.f32 %v1428, %v1430
        %1532 = vadd.xlane.f32.xlu0 %v1531
        %v1533 = vpop.xlane.xlu0 %1532
        %v1534 = vadd.f32 %v1432, %v1434
        %1535 = vadd.xlane.f32.xlu0 %v1534
        %v1536 = vpop.xlane.xlu0 %1535
        %v1537 = vadd.f32 %v1436, %v1438
        %1538 = vadd.xlane.f32.xlu0 %v1537
        %v1539 = vpop.xlane.xlu0 %1538
        %v1540 = vadd.f32 %v1440, %v1442
        %1541 = vadd.xlane.f32.xlu0 %v1540
        %v1542 = vpop.xlane.xlu0 %1541
        %v1543 = vadd.f32 %v1444, %v1446
        %1544 = vadd.xlane.f32.xlu0 %v1543
        %v1545 = vpop.xlane.xlu0 %1544
        %v1546 = vadd.f32 %v1448, %v1450
        %1547 = vadd.xlane.f32.xlu0 %v1546
        %v1548 = vpop.xlane.xlu0 %1547
        %v1549 = vadd.f32 %v1452, %v1454
        %1550 = vadd.xlane.f32.xlu0 %v1549
        %v1551 = vpop.xlane.xlu0 %1550
        %v1552 = vadd.f32 %v1456, %v1458
        %1553 = vadd.xlane.f32.xlu0 %v1552
        %v1554 = vpop.xlane.xlu0 %1553
        %v1555 = vrcp.pop %v1461
        %v1556 = vrcp.pop %v1464
        %v1557 = vrcp.pop %v1467
        %v1558 = vrcp.pop %v1470
        %v1559 = vrcp.pop %v1473
        %v1560 = vrcp.pop %v1476
        %v1561 = vrcp.pop %v1479
        %v1562 = vrcp.pop %v1482
        %v1563 = vrcp.pop %v1485
        %v1564 = vrcp.pop %v1488
        %v1565 = vrcp.pop %v1491
        %v1566 = vrcp.pop %v1494
        %v1567 = vrcp.pop %v1497
        %v1568 = vrcp.pop %v1500
        %v1569 = vrcp.pop %v1503
        %v1570 = vrcp.pop %v1506
        %v1571 = vrcp.pop %v1509
        %v1572 = vrcp.pop %v1512
        %v1573 = vrcp.pop %v1515
        %v1574 = vrcp.pop %v1518
        %v1575 = vrcp.pop %v1521
        %v1576 = vrcp.pop %v1524
        %v1577 = vrcp.pop %v1527
        %v1578 = vrcp.pop %v1530
        %v1579 = vrcp.pop %v1533
        %v1580 = vrcp.pop %v1536
        %v1581 = vrcp.pop %v1539
        %v1582 = vrcp.pop %v1542
        %v1583 = vrcp.pop %v1545
        %v1584 = vrcp.pop %v1548
        %v1585 = vrcp.pop %v1551
        %v1586 = vrcp.pop %v1554
        %v1587 = vmul.f32 %v1332, %v1555
        %v1588 = vmul.f32 %v1334, %v1555
        %v1589 = vmul.f32 %v1336, %v1556
        %v1590 = vmul.f32 %v1338, %v1556
        %v1591 = vmul.f32 %v1340, %v1557
        %v1592 = vmul.f32 %v1342, %v1557
        %v1593 = vmul.f32 %v1344, %v1558
        %v1594 = vmul.f32 %v1346, %v1558
        %v1595 = vmul.f32 %v1348, %v1559
        %v1596 = vmul.f32 %v1350, %v1559
        %v1597 = vmul.f32 %v1352, %v1560
        %v1598 = vmul.f32 %v1354, %v1560
        %v1599 = vmul.f32 %v1356, %v1561
        %v1600 = vmul.f32 %v1358, %v1561
        %v1601 = vmul.f32 %v1360, %v1562
        %v1602 = vmul.f32 %v1362, %v1562
        %v1603 = vmul.f32 %v1364, %v1563
        %v1604 = vmul.f32 %v1366, %v1563
        %v1605 = vmul.f32 %v1368, %v1564
        %v1606 = vmul.f32 %v1370, %v1564
        %v1607 = vmul.f32 %v1372, %v1565
        %v1608 = vmul.f32 %v1374, %v1565
        %v1609 = vmul.f32 %v1376, %v1566
        %v1610 = vmul.f32 %v1378, %v1566
        %v1611 = vmul.f32 %v1380, %v1567
        %v1612 = vmul.f32 %v1382, %v1567
        %v1613 = vmul.f32 %v1384, %v1568
        %v1614 = vmul.f32 %v1386, %v1568
        %v1615 = vmul.f32 %v1388, %v1569
        %v1616 = vmul.f32 %v1390, %v1569
        %v1617 = vmul.f32 %v1392, %v1570
        %v1618 = vmul.f32 %v1394, %v1570
        %v1619 = vmul.f32 %v1396, %v1571
        %v1620 = vmul.f32 %v1398, %v1571
        %v1621 = vmul.f32 %v1400, %v1572
        %v1622 = vmul.f32 %v1402, %v1572
        %v1623 = vmul.f32 %v1404, %v1573
        %v1624 = vmul.f32 %v1406, %v1573
        %v1625 = vmul.f32 %v1408, %v1574
        %v1626 = vmul.f32 %v1410, %v1574
        %v1627 = vmul.f32 %v1412, %v1575
        %v1628 = vmul.f32 %v1414, %v1575
        %v1629 = vmul.f32 %v1416, %v1576
        %v1630 = vmul.f32 %v1418, %v1576
        %v1631 = vmul.f32 %v1420, %v1577
        %v1632 = vmul.f32 %v1422, %v1577
        %v1633 = vmul.f32 %v1424, %v1578
        %v1634 = vmul.f32 %v1426, %v1578
        %v1635 = vmul.f32 %v1428, %v1579
        %v1636 = vmul.f32 %v1430, %v1579
        %v1637 = vmul.f32 %v1432, %v1580
        %v1638 = vmul.f32 %v1434, %v1580
        %v1639 = vmul.f32 %v1436, %v1581
        %v1640 = vmul.f32 %v1438, %v1581
        %v1641 = vmul.f32 %v1440, %v1582
        %v1642 = vmul.f32 %v1442, %v1582
        %v1643 = vmul.f32 %v1444, %v1583
        %v1644 = vmul.f32 %v1446, %v1583
        %v1645 = vmul.f32 %v1448, %v1584
        %v1646 = vmul.f32 %v1450, %v1584
        %v1647 = vmul.f32 %v1452, %v1585
        %v1648 = vmul.f32 %v1454, %v1585
        %v1649 = vmul.f32 %v1456, %v1586
        %v1650 = vmul.f32 %v1458, %v1586
        %v1651 = vpack.c.bf16 %v1589, %v1587
        %v1652 = vpack.c.bf16 %v1590, %v1588
        %v1653 = vpack.c.bf16 %v1593, %v1591
        %v1654 = vpack.c.bf16 %v1594, %v1592
        %v1655 = vpack.c.bf16 %v1597, %v1595
        %v1656 = vpack.c.bf16 %v1598, %v1596
        %v1657 = vpack.c.bf16 %v1601, %v1599
        %v1658 = vpack.c.bf16 %v1602, %v1600
        %v1659 = vpack.c.bf16 %v1605, %v1603
        %v1660 = vpack.c.bf16 %v1606, %v1604
        %v1661 = vpack.c.bf16 %v1609, %v1607
        %v1662 = vpack.c.bf16 %v1610, %v1608
        %v1663 = vpack.c.bf16 %v1613, %v1611
        %v1664 = vpack.c.bf16 %v1614, %v1612
        %v1665 = vpack.c.bf16 %v1617, %v1615
        %v1666 = vpack.c.bf16 %v1618, %v1616
        %v1667 = vpack.c.bf16 %v1621, %v1619
        %v1668 = vpack.c.bf16 %v1622, %v1620
        %v1669 = vpack.c.bf16 %v1625, %v1623
        %v1670 = vpack.c.bf16 %v1626, %v1624
        %v1671 = vpack.c.bf16 %v1629, %v1627
        %v1672 = vpack.c.bf16 %v1630, %v1628
        %v1673 = vpack.c.bf16 %v1633, %v1631
        %v1674 = vpack.c.bf16 %v1634, %v1632
        %v1675 = vpack.c.bf16 %v1637, %v1635
        %v1676 = vpack.c.bf16 %v1638, %v1636
        %v1677 = vpack.c.bf16 %v1641, %v1639
        %v1678 = vpack.c.bf16 %v1642, %v1640
        %v1679 = vpack.c.bf16 %v1645, %v1643
        %v1680 = vpack.c.bf16 %v1646, %v1644
        %v1681 = vpack.c.bf16 %v1649, %v1647
        %v1682 = vpack.c.bf16 %v1650, %v1648
        %1683 = vmatprep.subr.bf16.mxu0 %v1652
        %1684 = vmatpush1.bf16.xpose.msra.mxu0 %v1651
        %1685 = vmatprep.subr.bf16.mxu0 %v1654
        %1686 = vmatpush1.bf16.xpose.msra.mxu0 %v1653
        %1687 = vmatprep.subr.bf16.mxu0 %v1656
        %1688 = vmatpush1.bf16.xpose.msra.mxu0 %v1655
        %1689 = vmatprep.subr.bf16.mxu0 %v1658
        %1690 = vmatpush1.bf16.xpose.msra.mxu0 %v1657
        %1691 = vmatprep.subr.bf16.mxu0 %v1660
        %1692 = vmatpush1.bf16.xpose.msra.mxu0 %v1659
        %1693 = vmatprep.subr.bf16.mxu0 %v1662
        %1694 = vmatpush1.bf16.xpose.msra.mxu0 %v1661
        %1695 = vmatprep.subr.bf16.mxu0 %v1664
        %1696 = vmatpush1.bf16.xpose.msra.mxu0 %v1663
        %1697 = vmatprep.subr.bf16.mxu0 %v1666
        %1698 = vmatpush1.bf16.xpose.msra.mxu0 %v1665
        %1699 = vmatprep.subr.bf16.mxu0 %v1668
        %1700 = vmatpush1.bf16.xpose.msra.mxu0 %v1667
        %1701 = vmatprep.subr.bf16.mxu0 %v1670
        %1702 = vmatpush1.bf16.xpose.msra.mxu0 %v1669
        %1703 = vmatprep.subr.bf16.mxu0 %v1672
        %1704 = vmatpush1.bf16.xpose.msra.mxu0 %v1671
        %1705 = vmatprep.subr.bf16.mxu0 %v1674
        %1706 = vmatpush1.bf16.xpose.msra.mxu0 %v1673
        %1707 = vmatprep.subr.bf16.mxu0 %v1676
        %1708 = vmatpush1.bf16.xpose.msra.mxu0 %v1675
        %1709 = vmatprep.subr.bf16.mxu0 %v1678
        %1710 = vmatpush1.bf16.xpose.msra.mxu0 %v1677
        %1711 = vmatprep.subr.bf16.mxu0 %v1680
        %1712 = vmatpush1.bf16.xpose.msra.mxu0 %v1679
        %1713 = vmatprep.subr.bf16.mxu0 %v1682
        %1714 = vmatpush1.bf16.xpose.msra.mxu0 %v1681
        %1715 = vmatprep.mubr.bf16.mxu0 %v926
        %1716 = vmatmul.mubr.bf16.gmra.mrb[0].mxu0 %v925
        %v1717 = vpop.f32.mrb[0].mxu0
        %v1718 = vadd.f32 0.0, %v1717
        %v1719 = vpop.f32.mrb[0].mxu0
        %v1720 = vadd.f32 0.0, %v1719
        %v1721 = vpop.f32.mrb[0].mxu0
        %v1722 = vadd.f32 0.0, %v1721
        %v1723 = vpop.f32.mrb[0].mxu0
        %v1724 = vadd.f32 0.0, %v1723
        %1725 = vmatprep.mubr.bf16.mxu0 %v928
        %1726 = vmatmul.mubr.bf16.gmra.mrb[0].mxu0 %v927
        %v1727 = vpop.f32.mrb[0].mxu0
        %v1728 = vadd.f32 0.0, %v1727
        %v1729 = vpop.f32.mrb[0].mxu0
        %v1730 = vadd.f32 0.0, %v1729
        %v1731 = vpop.f32.mrb[0].mxu0
        %v1732 = vadd.f32 0.0, %v1731
        %v1733 = vpop.f32.mrb[0].mxu0
        %v1734 = vadd.f32 0.0, %v1733
        %1735 = vdwg.mxu0
        %v1736 = vld [vmem:[%s5] sm:$0xf]
        %s1737 = scalar_lea.vmem %s2, 4
        %v1738 = vld [vmem:[%s1737] sm:$0xf]
        %v1740 = vsel %vm460, %v1738, 0
        %1742 = vmatprep.subr.mxu0 0.0
        %1743 = vmatpush1.msra.mxu0 %v1740
        %1744 = vmatprep.subr.mxu0 0.0
        %1745 = vmatpush1.msra.mxu0 0.0
        %1746 = vmatprep.subr.mxu0 0.0
        %1747 = vmatpush1.msra.mxu0 0.0
        %1748 = vmatprep.subr.mxu0 0.0
        %1749 = vmatpush1.msra.mxu0 0.0
        %1750 = vmatprep.subr.mxu0 0.0
        %1751 = vmatpush1.msra.mxu0 0.0
        %1752 = vmatprep.subr.mxu0 0.0
        %1753 = vmatpush1.msra.mxu0 0.0
        %1754 = vmatprep.subr.mxu0 0.0
        %1755 = vmatpush1.msra.mxu0 0.0
        %1756 = vmatprep.subr.mxu0 0.0
        %1757 = vmatpush1.msra.mxu0 0.0
        %1758 = vmatprep.subr.mxu0 0.0
        %1759 = vmatpush1.msra.mxu0 0.0
        %1760 = vmatprep.subr.mxu0 0.0
        %1761 = vmatpush1.msra.mxu0 0.0
        %1762 = vmatprep.subr.mxu0 0.0
        %1763 = vmatpush1.msra.mxu0 0.0
        %1764 = vmatprep.subr.mxu0 0.0
        %1765 = vmatpush1.msra.mxu0 0.0
        %1766 = vmatprep.subr.mxu0 0.0
        %1767 = vmatpush1.msra.mxu0 0.0
        %1768 = vmatprep.subr.mxu0 0.0
        %1769 = vmatpush1.msra.mxu0 0.0
        %1770 = vmatprep.subr.mxu0 0.0
        %1771 = vmatpush1.msra.mxu0 0.0
        %1772 = vmatprep.subr.mxu0 0.0
        %1773 = vmatpush1.msra.mxu0 0.0
        %1774 = vmatprep.subr.mxu0 0.0
        %1775 = vmatpush1.msra.mxu0 0.0
        %1776 = vmatprep.subr.mxu0 0.0
        %1777 = vmatpush1.msra.mxu0 0.0
        %1778 = vmatprep.subr.mxu0 0.0
        %1779 = vmatpush1.msra.mxu0 0.0
        %1780 = vmatprep.subr.mxu0 0.0
        %1781 = vmatpush1.msra.mxu0 0.0
        %1782 = vmatprep.subr.mxu0 0.0
        %1783 = vmatpush1.msra.mxu0 0.0
        %1784 = vmatprep.subr.mxu0 0.0
        %1785 = vmatpush1.msra.mxu0 0.0
        %1786 = vmatprep.subr.mxu0 0.0
        %1787 = vmatpush1.msra.mxu0 0.0
        %1788 = vmatprep.subr.mxu0 0.0
        %1789 = vmatpush1.msra.mxu0 0.0
        %1790 = vmatprep.subr.mxu0 0.0
        %1791 = vmatpush1.msra.mxu0 0.0
        %1792 = vmatprep.subr.mxu0 0.0
        %1793 = vmatpush1.msra.mxu0 0.0
        %1794 = vmatprep.subr.mxu0 0.0
        %1795 = vmatpush1.msra.mxu0 0.0
        %1796 = vmatprep.subr.mxu0 0.0
        %1797 = vmatpush1.msra.mxu0 0.0
        %1798 = vmatprep.subr.mxu0 0.0
        %1799 = vmatpush1.msra.mxu0 0.0
        %1800 = vmatprep.subr.mxu0 0.0
        %1801 = vmatpush1.msra.mxu0 0.0
        %1802 = vmatprep.subr.mxu0 0.0
        %1803 = vmatpush1.msra.mxu0 0.0
        %1804 = vmatprep.subr.mxu0 0.0
        %1805 = vmatpush1.msra.mxu0 0.0
        %1806 = vmatprep.mubr.f32.mxu0 0.0
        %1807 = vmatmul.mubr.f32.gmra.mrb[0].mxu0 %v365
        %v1808 = vpop.f32.mrb[0].mxu0
        %v1809 = vadd.f32 0.0, %v1808
        %v1810 = vpop.f32.mrb[0].mxu0
        %1811 = vmatprep.mubr.f32.mxu0 0.0
        %1812 = vmatmul.mubr.f32.gmra.mrb[0].mxu0 %v368
        %v1813 = vpop.f32.mrb[0].mxu0
        %v1814 = vadd.f32 0.0, %v1813
        %v1815 = vpop.f32.mrb[0].mxu0
        %1816 = vmatprep.mubr.f32.mxu0 0.0
        %1817 = vmatmul.mubr.f32.gmra.mrb[0].mxu0 %v371
        %v1818 = vpop.f32.mrb[0].mxu0
        %v1819 = vadd.f32 0.0, %v1818
        %v1820 = vpop.f32.mrb[0].mxu0
        %1821 = vmatprep.mubr.f32.mxu0 0.0
        %1822 = vmatmul.mubr.f32.gmra.mrb[0].mxu0 %v374
        %v1823 = vpop.f32.mrb[0].mxu0
        %v1824 = vadd.f32 0.0, %v1823
        %v1825 = vpop.f32.mrb[0].mxu0
        %1826 = vmatprep.mubr.f32.mxu0 0.0
        %1827 = vmatmul.mubr.f32.gmra.mrb[0].mxu0 %v377
        %v1828 = vpop.f32.mrb[0].mxu0
        %v1829 = vadd.f32 0.0, %v1828
        %v1830 = vpop.f32.mrb[0].mxu0
        %1831 = vmatprep.mubr.f32.mxu0 0.0
        %1832 = vmatmul.mubr.f32.gmra.mrb[0].mxu0 %v380
        %v1833 = vpop.f32.mrb[0].mxu0
        %v1834 = vadd.f32 0.0, %v1833
        %v1835 = vpop.f32.mrb[0].mxu0
        %1836 = vmatprep.mubr.f32.mxu0 0.0
        %1837 = vmatmul.mubr.f32.gmra.mrb[0].mxu0 %v383
        %v1838 = vpop.f32.mrb[0].mxu0
        %v1839 = vadd.f32 0.0, %v1838
        %v1840 = vpop.f32.mrb[0].mxu0
        %1841 = vmatprep.mubr.f32.mxu0 0.0
        %1842 = vmatmul.mubr.f32.gmra.mrb[0].mxu0 %v386
        %v1843 = vpop.f32.mrb[0].mxu0
        %v1844 = vadd.f32 0.0, %v1843
        %v1845 = vpop.f32.mrb[0].mxu0
        %1846 = vmatprep.mubr.f32.mxu0 0.0
        %1847 = vmatmul.mubr.f32.gmra.mrb[0].mxu0 %v389
        %v1848 = vpop.f32.mrb[0].mxu0
        %v1849 = vadd.f32 0.0, %v1848
        %v1850 = vpop.f32.mrb[0].mxu0
        %1851 = vmatprep.mubr.f32.mxu0 0.0
        %1852 = vmatmul.mubr.f32.gmra.mrb[0].mxu0 %v392
        %v1853 = vpop.f32.mrb[0].mxu0
        %v1854 = vadd.f32 0.0, %v1853
        %v1855 = vpop.f32.mrb[0].mxu0
        %1856 = vmatprep.mubr.f32.mxu0 0.0
        %1857 = vmatmul.mubr.f32.gmra.mrb[0].mxu0 %v395
        %v1858 = vpop.f32.mrb[0].mxu0
        %v1859 = vadd.f32 0.0, %v1858
        %v1860 = vpop.f32.mrb[0].mxu0
        %1861 = vmatprep.mubr.f32.mxu0 0.0
        %1862 = vmatmul.mubr.f32.gmra.mrb[0].mxu0 %v398
        %v1863 = vpop.f32.mrb[0].mxu0
        %v1864 = vadd.f32 0.0, %v1863
        %v1865 = vpop.f32.mrb[0].mxu0
        %1866 = vmatprep.mubr.f32.mxu0 0.0
        %1867 = vmatmul.mubr.f32.gmra.mrb[0].mxu0 %v401
        %v1868 = vpop.f32.mrb[0].mxu0
        %v1869 = vadd.f32 0.0, %v1868
        %v1870 = vpop.f32.mrb[0].mxu0
        %1871 = vmatprep.mubr.f32.mxu0 0.0
        %1872 = vmatmul.mubr.f32.gmra.mrb[0].mxu0 %v404
        %v1873 = vpop.f32.mrb[0].mxu0
        %v1874 = vadd.f32 0.0, %v1873
        %v1875 = vpop.f32.mrb[0].mxu0
        %1876 = vmatprep.mubr.f32.mxu0 0.0
        %1877 = vmatmul.mubr.f32.gmra.mrb[0].mxu0 %v407
        %v1878 = vpop.f32.mrb[0].mxu0
        %v1879 = vadd.f32 0.0, %v1878
        %v1880 = vpop.f32.mrb[0].mxu0
        %1881 = vmatprep.mubr.f32.mxu0 0.0
        %1882 = vmatmul.mubr.f32.gmra.mrb[0].mxu0 %v410
        %v1883 = vpop.f32.mrb[0].mxu0
        %v1884 = vadd.f32 0.0, %v1883
        %v1885 = vpop.f32.mrb[0].mxu0
        %1886 = vmatprep.mubr.f32.mxu0 0.0
        %1887 = vmatmul.mubr.f32.gmra.mrb[0].mxu0 %v413
        %v1888 = vpop.f32.mrb[0].mxu0
        %v1889 = vadd.f32 0.0, %v1888
        %v1890 = vpop.f32.mrb[0].mxu0
        %1891 = vmatprep.mubr.f32.mxu0 0.0
        %1892 = vmatmul.mubr.f32.gmra.mrb[0].mxu0 %v416
        %v1893 = vpop.f32.mrb[0].mxu0
        %v1894 = vadd.f32 0.0, %v1893
        %v1895 = vpop.f32.mrb[0].mxu0
        %1896 = vmatprep.mubr.f32.mxu0 0.0
        %1897 = vmatmul.mubr.f32.gmra.mrb[0].mxu0 %v419
        %v1898 = vpop.f32.mrb[0].mxu0
        %v1899 = vadd.f32 0.0, %v1898
        %v1900 = vpop.f32.mrb[0].mxu0
        %1901 = vmatprep.mubr.f32.mxu0 0.0
        %1902 = vmatmul.mubr.f32.gmra.mrb[0].mxu0 %v422
        %v1903 = vpop.f32.mrb[0].mxu0
        %v1904 = vadd.f32 0.0, %v1903
        %v1905 = vpop.f32.mrb[0].mxu0
        %1906 = vmatprep.mubr.f32.mxu0 0.0
        %1907 = vmatmul.mubr.f32.gmra.mrb[0].mxu0 %v425
        %v1908 = vpop.f32.mrb[0].mxu0
        %v1909 = vadd.f32 0.0, %v1908
        %v1910 = vpop.f32.mrb[0].mxu0
        %1911 = vmatprep.mubr.f32.mxu0 0.0
        %1912 = vmatmul.mubr.f32.gmra.mrb[0].mxu0 %v428
        %v1913 = vpop.f32.mrb[0].mxu0
        %v1914 = vadd.f32 0.0, %v1913
        %v1915 = vpop.f32.mrb[0].mxu0
        %1916 = vmatprep.mubr.f32.mxu0 0.0
        %1917 = vmatmul.mubr.f32.gmra.mrb[0].mxu0 %v431
        %v1918 = vpop.f32.mrb[0].mxu0
        %v1919 = vadd.f32 0.0, %v1918
        %v1920 = vpop.f32.mrb[0].mxu0
        %1921 = vmatprep.mubr.f32.mxu0 0.0
        %1922 = vmatmul.mubr.f32.gmra.mrb[0].mxu0 %v434
        %v1923 = vpop.f32.mrb[0].mxu0
        %v1924 = vadd.f32 0.0, %v1923
        %v1925 = vpop.f32.mrb[0].mxu0
        %1926 = vmatprep.mubr.f32.mxu0 0.0
        %1927 = vmatmul.mubr.f32.gmra.mrb[0].mxu0 %v437
        %v1928 = vpop.f32.mrb[0].mxu0
        %v1929 = vadd.f32 0.0, %v1928
        %v1930 = vpop.f32.mrb[0].mxu0
        %1931 = vmatprep.mubr.f32.mxu0 0.0
        %1932 = vmatmul.mubr.f32.gmra.mrb[0].mxu0 %v440
        %v1933 = vpop.f32.mrb[0].mxu0
        %v1934 = vadd.f32 0.0, %v1933
        %v1935 = vpop.f32.mrb[0].mxu0
        %1936 = vmatprep.mubr.f32.mxu0 0.0
        %1937 = vmatmul.mubr.f32.gmra.mrb[0].mxu0 %v443
        %v1938 = vpop.f32.mrb[0].mxu0
        %v1939 = vadd.f32 0.0, %v1938
        %v1940 = vpop.f32.mrb[0].mxu0
        %1941 = vmatprep.mubr.f32.mxu0 0.0
        %1942 = vmatmul.mubr.f32.gmra.mrb[0].mxu0 %v446
        %v1943 = vpop.f32.mrb[0].mxu0
        %v1944 = vadd.f32 0.0, %v1943
        %v1945 = vpop.f32.mrb[0].mxu0
        %1946 = vmatprep.mubr.f32.mxu0 0.0
        %1947 = vmatmul.mubr.f32.gmra.mrb[0].mxu0 %v449
        %v1948 = vpop.f32.mrb[0].mxu0
        %v1949 = vadd.f32 0.0, %v1948
        %v1950 = vpop.f32.mrb[0].mxu0
        %1951 = vmatprep.mubr.f32.mxu0 0.0
        %1952 = vmatmul.mubr.f32.gmra.mrb[0].mxu0 %v452
        %v1953 = vpop.f32.mrb[0].mxu0
        %v1954 = vadd.f32 0.0, %v1953
        %v1955 = vpop.f32.mrb[0].mxu0
        %1956 = vmatprep.mubr.f32.mxu0 0.0
        %1957 = vmatmul.mubr.f32.gmra.mrb[0].mxu0 %v455
        %v1958 = vpop.f32.mrb[0].mxu0
        %v1959 = vadd.f32 0.0, %v1958
        %v1960 = vpop.f32.mrb[0].mxu0
        %1961 = vmatprep.mubr.f32.mxu0 0.0
        %1962 = vmatmul.mubr.f32.gmra.mrb[0].mxu0 %v458
        %v1963 = vpop.f32.mrb[0].mxu0
        %v1964 = vadd.f32 0.0, %v1963
        %v1965 = vpop.f32.mrb[0].mxu0
        %1966 = vdwg.mxu0
        %s1967 = scalar_lea.vmem %s3, 32
        %v1968 = vld [vmem:[%s1967] sm:$0xff]
        %v1969 = vld [vmem:[%s1967 + $0x8] sm:$0xff]
        %v1970 = vld [vmem:[%s1967 + $0x10] sm:$0xff]
        %v1971 = vld [vmem:[%s1967 + $0x18] sm:$0xff]
        %v1973 = vsel %vm363, %v1968, 0
        %v1976 = vsel %vm363, %v1969, 0
        %v1979 = vsel %vm363, %v1970, 0
        %v1982 = vsel %vm363, %v1971, 0
        %1984 = vmatprep.subr.mxu0 %v709
        %1985 = vmatpush1.msra.mxu0 %v707
        %1986 = vmatprep.subr.mxu0 0.0
        %1987 = vmatpush1.msra.mxu0 0.0
        %1988 = vmatprep.subr.mxu0 0.0
        %1989 = vmatpush1.msra.mxu0 0.0
        %1990 = vmatprep.subr.mxu0 0.0
        %1991 = vmatpush1.msra.mxu0 0.0
        %1992 = vmatprep.subr.mxu0 0.0
        %1993 = vmatpush1.msra.mxu0 0.0
        %1994 = vmatprep.subr.mxu0 0.0
        %1995 = vmatpush1.msra.mxu0 0.0
        %1996 = vmatprep.subr.mxu0 0.0
        %1997 = vmatpush1.msra.mxu0 0.0
        %1998 = vmatprep.subr.mxu0 0.0
        %1999 = vmatpush1.msra.mxu0 0.0
        %2000 = vmatprep.subr.mxu0 0.0
        %2001 = vmatpush1.msra.mxu0 0.0
        %2002 = vmatprep.subr.mxu0 0.0
        %2003 = vmatpush1.msra.mxu0 0.0
        %2004 = vmatprep.subr.mxu0 0.0
        %2005 = vmatpush1.msra.mxu0 0.0
        %2006 = vmatprep.subr.mxu0 0.0
        %2007 = vmatpush1.msra.mxu0 0.0
        %2008 = vmatprep.subr.mxu0 0.0
        %2009 = vmatpush1.msra.mxu0 0.0
        %2010 = vmatprep.subr.mxu0 0.0
        %2011 = vmatpush1.msra.mxu0 0.0
        %2012 = vmatprep.subr.mxu0 0.0
        %2013 = vmatpush1.msra.mxu0 0.0
        %2014 = vmatprep.subr.mxu0 0.0
        %2015 = vmatpush1.msra.mxu0 0.0
        %2016 = vmatprep.subr.mxu0 0.0
        %2017 = vmatpush1.msra.mxu0 0.0
        %2018 = vmatprep.subr.mxu0 0.0
        %2019 = vmatpush1.msra.mxu0 0.0
        %2020 = vmatprep.subr.mxu0 0.0
        %2021 = vmatpush1.msra.mxu0 0.0
        %2022 = vmatprep.subr.mxu0 0.0
        %2023 = vmatpush1.msra.mxu0 0.0
        %2024 = vmatprep.subr.mxu0 0.0
        %2025 = vmatpush1.msra.mxu0 0.0
        %2026 = vmatprep.subr.mxu0 0.0
        %2027 = vmatpush1.msra.mxu0 0.0
        %2028 = vmatprep.subr.mxu0 0.0
        %2029 = vmatpush1.msra.mxu0 0.0
        %2030 = vmatprep.subr.mxu0 0.0
        %2031 = vmatpush1.msra.mxu0 0.0
        %2032 = vmatprep.subr.mxu0 0.0
        %2033 = vmatpush1.msra.mxu0 0.0
        %2034 = vmatprep.subr.mxu0 0.0
        %2035 = vmatpush1.msra.mxu0 0.0
        %2036 = vmatprep.subr.mxu0 0.0
        %2037 = vmatpush1.msra.mxu0 0.0
        %2038 = vmatprep.subr.mxu0 0.0
        %2039 = vmatpush1.msra.mxu0 0.0
        %2040 = vmatprep.subr.mxu0 0.0
        %2041 = vmatpush1.msra.mxu0 0.0
        %2042 = vmatprep.subr.mxu0 0.0
        %2043 = vmatpush1.msra.mxu0 0.0
        %2044 = vmatprep.subr.mxu0 0.0
        %2045 = vmatpush1.msra.mxu0 0.0
        %2046 = vmatprep.subr.mxu0 0.0
        %2047 = vmatpush1.msra.mxu0 0.0
        %2048 = vmatprep.mubr.f32.mxu0 0.0
        %2049 = vmatmul.mubr.f32.gmra.mrb[0].mxu0 %v1973
        %v2050 = vpop.f32.mrb[0].mxu0
        %v2051 = vadd.f32 0.0, %v2050
        %v2052 = vpop.f32.mrb[0].mxu0
        %v2053 = vadd.f32 0.0, %v2052
        %2054 = vmatprep.mubr.f32.mxu0 0.0
        %2055 = vmatmul.mubr.f32.gmra.mrb[0].mxu0 %v1976
        %v2056 = vpop.f32.mrb[0].mxu0
        %v2057 = vadd.f32 0.0, %v2056
        %v2058 = vpop.f32.mrb[0].mxu0
        %v2059 = vadd.f32 0.0, %v2058
        %2060 = vmatprep.mubr.f32.mxu0 0.0
        %2061 = vmatmul.mubr.f32.gmra.mrb[0].mxu0 %v1979
        %v2062 = vpop.f32.mrb[0].mxu0
        %v2063 = vadd.f32 0.0, %v2062
        %v2064 = vpop.f32.mrb[0].mxu0
        %v2065 = vadd.f32 0.0, %v2064
        %2066 = vmatprep.mubr.f32.mxu0 0.0
        %2067 = vmatmul.mubr.f32.gmra.mrb[0].mxu0 %v1982
        %v2068 = vpop.f32.mrb[0].mxu0
        %v2069 = vadd.f32 0.0, %v2068
        %v2070 = vpop.f32.mrb[0].mxu0
        %v2071 = vadd.f32 0.0, %v2070
        %2072 = vdwg.mxu0
        %s2073 = scalar_lea.vmem %s4, 32
        %v2074 = vld [vmem:[%s2073] sm:$0xff]
        %v2075 = vld [vmem:[%s2073 + $0x8] sm:$0xff]
        %v2076 = vld [vmem:[%s2073 + $0x10] sm:$0xff]
        %v2077 = vld [vmem:[%s2073 + $0x18] sm:$0xff]
        %v2079 = vsel %vm363, %v2074, 0
        %v2082 = vsel %vm363, %v2075, 0
        %v2085 = vsel %vm363, %v2076, 0
        %v2088 = vsel %vm363, %v2077, 0
        %2090 = vmatprep.subr.mxu0 %v709
        %2091 = vmatpush1.msra.mxu0 %v707
        %2092 = vmatprep.subr.mxu0 0.0
        %2093 = vmatpush1.msra.mxu0 0.0
        %2094 = vmatprep.subr.mxu0 0.0
        %2095 = vmatpush1.msra.mxu0 0.0
        %2096 = vmatprep.subr.mxu0 0.0
        %2097 = vmatpush1.msra.mxu0 0.0
        %2098 = vmatprep.subr.mxu0 0.0
        %2099 = vmatpush1.msra.mxu0 0.0
        %2100 = vmatprep.subr.mxu0 0.0
        %2101 = vmatpush1.msra.mxu0 0.0
        %2102 = vmatprep.subr.mxu0 0.0
        %2103 = vmatpush1.msra.mxu0 0.0
        %2104 = vmatprep.subr.mxu0 0.0
        %2105 = vmatpush1.msra.mxu0 0.0
        %2106 = vmatprep.subr.mxu0 0.0
        %2107 = vmatpush1.msra.mxu0 0.0
        %2108 = vmatprep.subr.mxu0 0.0
        %2109 = vmatpush1.msra.mxu0 0.0
        %2110 = vmatprep.subr.mxu0 0.0
        %2111 = vmatpush1.msra.mxu0 0.0
        %2112 = vmatprep.subr.mxu0 0.0
        %2113 = vmatpush1.msra.mxu0 0.0
        %2114 = vmatprep.subr.mxu0 0.0
        %2115 = vmatpush1.msra.mxu0 0.0
        %2116 = vmatprep.subr.mxu0 0.0
        %2117 = vmatpush1.msra.mxu0 0.0
        %2118 = vmatprep.subr.mxu0 0.0
        %2119 = vmatpush1.msra.mxu0 0.0
        %2120 = vmatprep.subr.mxu0 0.0
        %2121 = vmatpush1.msra.mxu0 0.0
        %2122 = vmatprep.subr.mxu0 0.0
        %2123 = vmatpush1.msra.mxu0 0.0
        %2124 = vmatprep.subr.mxu0 0.0
        %2125 = vmatpush1.msra.mxu0 0.0
        %2126 = vmatprep.subr.mxu0 0.0
        %2127 = vmatpush1.msra.mxu0 0.0
        %2128 = vmatprep.subr.mxu0 0.0
        %2129 = vmatpush1.msra.mxu0 0.0
        %2130 = vmatprep.subr.mxu0 0.0
        %2131 = vmatpush1.msra.mxu0 0.0
        %2132 = vmatprep.subr.mxu0 0.0
        %2133 = vmatpush1.msra.mxu0 0.0
        %2134 = vmatprep.subr.mxu0 0.0
        %2135 = vmatpush1.msra.mxu0 0.0
        %2136 = vmatprep.subr.mxu0 0.0
        %2137 = vmatpush1.msra.mxu0 0.0
        %2138 = vmatprep.subr.mxu0 0.0
        %2139 = vmatpush1.msra.mxu0 0.0
        %2140 = vmatprep.subr.mxu0 0.0
        %2141 = vmatpush1.msra.mxu0 0.0
        %2142 = vmatprep.subr.mxu0 0.0
        %2143 = vmatpush1.msra.mxu0 0.0
        %2144 = vmatprep.subr.mxu0 0.0
        %2145 = vmatpush1.msra.mxu0 0.0
        %2146 = vmatprep.subr.mxu0 0.0
        %2147 = vmatpush1.msra.mxu0 0.0
        %2148 = vmatprep.subr.mxu0 0.0
        %2149 = vmatpush1.msra.mxu0 0.0
        %2150 = vmatprep.subr.mxu0 0.0
        %2151 = vmatpush1.msra.mxu0 0.0
        %2152 = vmatprep.subr.mxu0 0.0
        %2153 = vmatpush1.msra.mxu0 0.0
        %2154 = vmatprep.mubr.f32.mxu0 0.0
        %2155 = vmatmul.mubr.f32.gmra.mrb[0].mxu0 %v2079
        %v2156 = vpop.f32.mrb[0].mxu0
        %v2157 = vadd.f32 0.0, %v2156
        %v2158 = vpop.f32.mrb[0].mxu0
        %v2159 = vadd.f32 0.0, %v2158
        %2160 = vmatprep.mubr.f32.mxu0 0.0
        %2161 = vmatmul.mubr.f32.gmra.mrb[0].mxu0 %v2082
        %v2162 = vpop.f32.mrb[0].mxu0
        %v2163 = vadd.f32 0.0, %v2162
        %v2164 = vpop.f32.mrb[0].mxu0
        %v2165 = vadd.f32 0.0, %v2164
        %2166 = vmatprep.mubr.f32.mxu0 0.0
        %2167 = vmatmul.mubr.f32.gmra.mrb[0].mxu0 %v2085
        %v2168 = vpop.f32.mrb[0].mxu0
        %v2169 = vadd.f32 0.0, %v2168
        %v2170 = vpop.f32.mrb[0].mxu0
        %v2171 = vadd.f32 0.0, %v2170
        %2172 = vmatprep.mubr.f32.mxu0 0.0
        %2173 = vmatmul.mubr.f32.gmra.mrb[0].mxu0 %v2088
        %v2174 = vpop.f32.mrb[0].mxu0
        %v2175 = vadd.f32 0.0, %v2174
        %v2176 = vpop.f32.mrb[0].mxu0
        %v2177 = vadd.f32 0.0, %v2176
        %2178 = vdwg.mxu0
        %v2179 = vpack.c.bf16 %v1814, %v1809
        %v2180 = vpack.c.bf16 %v1824, %v1819
        %v2181 = vpack.c.bf16 %v1834, %v1829
        %v2182 = vpack.c.bf16 %v1844, %v1839
        %v2183 = vpack.c.bf16 %v1854, %v1849
        %v2184 = vpack.c.bf16 %v1864, %v1859
        %v2185 = vpack.c.bf16 %v1874, %v1869
        %v2186 = vpack.c.bf16 %v1884, %v1879
        %v2187 = vpack.c.bf16 %v1894, %v1889
        %v2188 = vpack.c.bf16 %v1904, %v1899
        %v2189 = vpack.c.bf16 %v1914, %v1909
        %v2190 = vpack.c.bf16 %v1924, %v1919
        %v2191 = vpack.c.bf16 %v1934, %v1929
        %v2192 = vpack.c.bf16 %v1944, %v1939
        %v2193 = vpack.c.bf16 %v1954, %v1949
        %v2194 = vpack.c.bf16 %v1964, %v1959
        %v2195 = vpack.c.bf16 %v2057, %v2051
        %v2196 = vpack.c.bf16 %v2059, %v2053
        %v2197 = vpack.c.bf16 %v2069, %v2063
        %v2198 = vpack.c.bf16 %v2071, %v2065
        %v2199 = vpack.c.bf16 %v2163, %v2157
        %v2200 = vpack.c.bf16 %v2165, %v2159
        %v2201 = vpack.c.bf16 %v2175, %v2169
        %v2202 = vpack.c.bf16 %v2177, %v2171
        %v2204 = vsel %vm929, %v2179, 0
        %v2207 = vsel %vm929, %v2180, 0
        %v2210 = vsel %vm929, %v2181, 0
        %v2213 = vsel %vm929, %v2182, 0
        %v2216 = vsel %vm929, %v2183, 0
        %v2219 = vsel %vm929, %v2184, 0
        %v2222 = vsel %vm929, %v2185, 0
        %v2225 = vsel %vm929, %v2186, 0
        %v2228 = vsel %vm929, %v2187, 0
        %v2231 = vsel %vm929, %v2188, 0
        %v2234 = vsel %vm929, %v2189, 0
        %v2237 = vsel %vm929, %v2190, 0
        %v2240 = vsel %vm929, %v2191, 0
        %v2243 = vsel %vm929, %v2192, 0
        %v2246 = vsel %vm929, %v2193, 0
        %v2249 = vsel %vm929, %v2194, 0
        %2251 = vmatprep.subr.bf16.mxu0 %v2196
        %2252 = vmatpush1.bf16.msra.mxu0 %v2195
        %2253 = vmatprep.subr.bf16.mxu0 %v2198
        %2254 = vmatpush1.bf16.msra.mxu0 %v2197
        %2255 = vmatprep.subr.bf16.mxu0 0
        %2256 = vmatpush1.bf16.msra.mxu0 0
        %2257 = vmatprep.subr.bf16.mxu0 0
        %2258 = vmatpush1.bf16.msra.mxu0 0
        %2259 = vmatprep.subr.bf16.mxu0 0
        %2260 = vmatpush1.bf16.msra.mxu0 0
        %2261 = vmatprep.subr.bf16.mxu0 0
        %2262 = vmatpush1.bf16.msra.mxu0 0
        %2263 = vmatprep.subr.bf16.mxu0 0
        %2264 = vmatpush1.bf16.msra.mxu0 0
        %2265 = vmatprep.subr.bf16.mxu0 0
        %2266 = vmatpush1.bf16.msra.mxu0 0
        %2267 = vmatprep.subr.bf16.mxu0 0
        %2268 = vmatpush1.bf16.msra.mxu0 0
        %2269 = vmatprep.subr.bf16.mxu0 0
        %2270 = vmatpush1.bf16.msra.mxu0 0
        %2271 = vmatprep.subr.bf16.mxu0 0
        %2272 = vmatpush1.bf16.msra.mxu0 0
        %2273 = vmatprep.subr.bf16.mxu0 0
        %2274 = vmatpush1.bf16.msra.mxu0 0
        %2275 = vmatprep.subr.bf16.mxu0 0
        %2276 = vmatpush1.bf16.msra.mxu0 0
        %2277 = vmatprep.subr.bf16.mxu0 0
        %2278 = vmatpush1.bf16.msra.mxu0 0
        %2279 = vmatprep.subr.bf16.mxu0 0
        %2280 = vmatpush1.bf16.msra.mxu0 0
        %2281 = vmatprep.subr.bf16.mxu0 0
        %2282 = vmatpush1.bf16.msra.mxu0 0
        %2283 = vmatprep.mubr.bf16.mxu0 0
        %2284 = vmatmul.mubr.bf16.gmra.mrb[0].mxu0 %v2204
        %v2285 = vpop.f32.mrb[0].mxu0
        %v2286 = vadd.f32 0.0, %v2285
        %v2287 = vpop.f32.mrb[0].mxu0
        %v2288 = vadd.f32 0.0, %v2287
        %v2289 = vpop.f32.mrb[0].mxu0
        %v2290 = vadd.f32 0.0, %v2289
        %v2291 = vpop.f32.mrb[0].mxu0
        %v2292 = vadd.f32 0.0, %v2291
        %2293 = vmatprep.mubr.bf16.mxu0 0
        %2294 = vmatmul.mubr.bf16.gmra.mrb[0].mxu0 %v2207
        %v2295 = vpop.f32.mrb[0].mxu0
        %v2296 = vadd.f32 0.0, %v2295
        %v2297 = vpop.f32.mrb[0].mxu0
        %v2298 = vadd.f32 0.0, %v2297
        %v2299 = vpop.f32.mrb[0].mxu0
        %v2300 = vadd.f32 0.0, %v2299
        %v2301 = vpop.f32.mrb[0].mxu0
        %v2302 = vadd.f32 0.0, %v2301
        %2303 = vmatprep.mubr.bf16.mxu0 0
        %2304 = vmatmul.mubr.bf16.gmra.mrb[0].mxu0 %v2210
        %v2305 = vpop.f32.mrb[0].mxu0
        %v2306 = vadd.f32 0.0, %v2305
        %v2307 = vpop.f32.mrb[0].mxu0
        %v2308 = vadd.f32 0.0, %v2307
        %v2309 = vpop.f32.mrb[0].mxu0
        %v2310 = vadd.f32 0.0, %v2309
        %v2311 = vpop.f32.mrb[0].mxu0
        %v2312 = vadd.f32 0.0, %v2311
        %2313 = vmatprep.mubr.bf16.mxu0 0
        %2314 = vmatmul.mubr.bf16.gmra.mrb[0].mxu0 %v2213
        %v2315 = vpop.f32.mrb[0].mxu0
        %v2316 = vadd.f32 0.0, %v2315
        %v2317 = vpop.f32.mrb[0].mxu0
        %v2318 = vadd.f32 0.0, %v2317
        %v2319 = vpop.f32.mrb[0].mxu0
        %v2320 = vadd.f32 0.0, %v2319
        %v2321 = vpop.f32.mrb[0].mxu0
        %v2322 = vadd.f32 0.0, %v2321
        %2323 = vmatprep.mubr.bf16.mxu0 0
        %2324 = vmatmul.mubr.bf16.gmra.mrb[0].mxu0 %v2216
        %v2325 = vpop.f32.mrb[0].mxu0
        %v2326 = vadd.f32 0.0, %v2325
        %v2327 = vpop.f32.mrb[0].mxu0
        %v2328 = vadd.f32 0.0, %v2327
        %v2329 = vpop.f32.mrb[0].mxu0
        %v2330 = vadd.f32 0.0, %v2329
        %v2331 = vpop.f32.mrb[0].mxu0
        %v2332 = vadd.f32 0.0, %v2331
        %2333 = vmatprep.mubr.bf16.mxu0 0
        %2334 = vmatmul.mubr.bf16.gmra.mrb[0].mxu0 %v2219
        %v2335 = vpop.f32.mrb[0].mxu0
        %v2336 = vadd.f32 0.0, %v2335
        %v2337 = vpop.f32.mrb[0].mxu0
        %v2338 = vadd.f32 0.0, %v2337
        %v2339 = vpop.f32.mrb[0].mxu0
        %v2340 = vadd.f32 0.0, %v2339
        %v2341 = vpop.f32.mrb[0].mxu0
        %v2342 = vadd.f32 0.0, %v2341
        %2343 = vmatprep.mubr.bf16.mxu0 0
        %2344 = vmatmul.mubr.bf16.gmra.mrb[0].mxu0 %v2222
        %v2345 = vpop.f32.mrb[0].mxu0
        %v2346 = vadd.f32 0.0, %v2345
        %v2347 = vpop.f32.mrb[0].mxu0
        %v2348 = vadd.f32 0.0, %v2347
        %v2349 = vpop.f32.mrb[0].mxu0
        %v2350 = vadd.f32 0.0, %v2349
        %v2351 = vpop.f32.mrb[0].mxu0
        %v2352 = vadd.f32 0.0, %v2351
        %2353 = vmatprep.mubr.bf16.mxu0 0
        %2354 = vmatmul.mubr.bf16.gmra.mrb[0].mxu0 %v2225
        %v2355 = vpop.f32.mrb[0].mxu0
        %v2356 = vadd.f32 0.0, %v2355
        %v2357 = vpop.f32.mrb[0].mxu0
        %v2358 = vadd.f32 0.0, %v2357
        %v2359 = vpop.f32.mrb[0].mxu0
        %v2360 = vadd.f32 0.0, %v2359
        %v2361 = vpop.f32.mrb[0].mxu0
        %v2362 = vadd.f32 0.0, %v2361
        %2363 = vmatprep.mubr.bf16.mxu0 0
        %2364 = vmatmul.mubr.bf16.gmra.mrb[0].mxu0 %v2228
        %v2365 = vpop.f32.mrb[0].mxu0
        %v2366 = vadd.f32 0.0, %v2365
        %v2367 = vpop.f32.mrb[0].mxu0
        %v2368 = vadd.f32 0.0, %v2367
        %v2369 = vpop.f32.mrb[0].mxu0
        %v2370 = vadd.f32 0.0, %v2369
        %v2371 = vpop.f32.mrb[0].mxu0
        %v2372 = vadd.f32 0.0, %v2371
        %2373 = vmatprep.mubr.bf16.mxu0 0
        %2374 = vmatmul.mubr.bf16.gmra.mrb[0].mxu0 %v2231
        %v2375 = vpop.f32.mrb[0].mxu0
        %v2376 = vadd.f32 0.0, %v2375
        %v2377 = vpop.f32.mrb[0].mxu0
        %v2378 = vadd.f32 0.0, %v2377
        %v2379 = vpop.f32.mrb[0].mxu0
        %v2380 = vadd.f32 0.0, %v2379
        %v2381 = vpop.f32.mrb[0].mxu0
        %v2382 = vadd.f32 0.0, %v2381
        %2383 = vmatprep.mubr.bf16.mxu0 0
        %2384 = vmatmul.mubr.bf16.gmra.mrb[0].mxu0 %v2234
        %v2385 = vpop.f32.mrb[0].mxu0
        %v2386 = vadd.f32 0.0, %v2385
        %v2387 = vpop.f32.mrb[0].mxu0
        %v2388 = vadd.f32 0.0, %v2387
        %v2389 = vpop.f32.mrb[0].mxu0
        %v2390 = vadd.f32 0.0, %v2389
        %v2391 = vpop.f32.mrb[0].mxu0
        %v2392 = vadd.f32 0.0, %v2391
        %2393 = vmatprep.mubr.bf16.mxu0 0
        %2394 = vmatmul.mubr.bf16.gmra.mrb[0].mxu0 %v2237
        %v2395 = vpop.f32.mrb[0].mxu0
        %v2396 = vadd.f32 0.0, %v2395
        %v2397 = vpop.f32.mrb[0].mxu0
        %v2398 = vadd.f32 0.0, %v2397
        %v2399 = vpop.f32.mrb[0].mxu0
        %v2400 = vadd.f32 0.0, %v2399
        %v2401 = vpop.f32.mrb[0].mxu0
        %v2402 = vadd.f32 0.0, %v2401
        %2403 = vmatprep.mubr.bf16.mxu0 0
        %2404 = vmatmul.mubr.bf16.gmra.mrb[0].mxu0 %v2240
        %v2405 = vpop.f32.mrb[0].mxu0
        %v2406 = vadd.f32 0.0, %v2405
        %v2407 = vpop.f32.mrb[0].mxu0
        %v2408 = vadd.f32 0.0, %v2407
        %v2409 = vpop.f32.mrb[0].mxu0
        %v2410 = vadd.f32 0.0, %v2409
        %v2411 = vpop.f32.mrb[0].mxu0
        %v2412 = vadd.f32 0.0, %v2411
        %2413 = vmatprep.mubr.bf16.mxu0 0
        %2414 = vmatmul.mubr.bf16.gmra.mrb[0].mxu0 %v2243
        %v2415 = vpop.f32.mrb[0].mxu0
        %v2416 = vadd.f32 0.0, %v2415
        %v2417 = vpop.f32.mrb[0].mxu0
        %v2418 = vadd.f32 0.0, %v2417
        %v2419 = vpop.f32.mrb[0].mxu0
        %v2420 = vadd.f32 0.0, %v2419
        %v2421 = vpop.f32.mrb[0].mxu0
        %v2422 = vadd.f32 0.0, %v2421
        %2423 = vmatprep.mubr.bf16.mxu0 0
        %2424 = vmatmul.mubr.bf16.gmra.mrb[0].mxu0 %v2246
        %v2425 = vpop.f32.mrb[0].mxu0
        %v2426 = vadd.f32 0.0, %v2425
        %v2427 = vpop.f32.mrb[0].mxu0
        %v2428 = vadd.f32 0.0, %v2427
        %v2429 = vpop.f32.mrb[0].mxu0
        %v2430 = vadd.f32 0.0, %v2429
        %v2431 = vpop.f32.mrb[0].mxu0
        %v2432 = vadd.f32 0.0, %v2431
        %2433 = vmatprep.mubr.bf16.mxu0 0
        %2434 = vmatmul.mubr.bf16.gmra.mrb[0].mxu0 %v2249
        %v2435 = vpop.f32.mrb[0].mxu0
        %v2436 = vadd.f32 0.0, %v2435
        %v2437 = vpop.f32.mrb[0].mxu0
        %v2438 = vadd.f32 0.0, %v2437
        %v2439 = vpop.f32.mrb[0].mxu0
        %v2440 = vadd.f32 0.0, %v2439
        %v2441 = vpop.f32.mrb[0].mxu0
        %v2442 = vadd.f32 0.0, %v2441
        %2443 = vdwg.mxu0
        %v2444 = vmax.f32 %v2286, %v2288
        %2445 = vmax.xlane.f32.xlu0 %v2444
        %v2446 = vpop.xlane.xlu0 %2445
        %v2447 = vmax.f32 %v2290, %v2292
        %2448 = vmax.xlane.f32.xlu0 %v2447
        %v2449 = vpop.xlane.xlu0 %2448
        %v2450 = vmax.f32 %v2296, %v2298
        %2451 = vmax.xlane.f32.xlu0 %v2450
        %v2452 = vpop.xlane.xlu0 %2451
        %v2453 = vmax.f32 %v2300, %v2302
        %2454 = vmax.xlane.f32.xlu0 %v2453
        %v2455 = vpop.xlane.xlu0 %2454
        %v2456 = vmax.f32 %v2306, %v2308
        %2457 = vmax.xlane.f32.xlu0 %v2456
        %v2458 = vpop.xlane.xlu0 %2457
        %v2459 = vmax.f32 %v2310, %v2312
        %2460 = vmax.xlane.f32.xlu0 %v2459
        %v2461 = vpop.xlane.xlu0 %2460
        %v2462 = vmax.f32 %v2316, %v2318
        %2463 = vmax.xlane.f32.xlu0 %v2462
        %v2464 = vpop.xlane.xlu0 %2463
        %v2465 = vmax.f32 %v2320, %v2322
        %2466 = vmax.xlane.f32.xlu0 %v2465
        %v2467 = vpop.xlane.xlu0 %2466
        %v2468 = vmax.f32 %v2326, %v2328
        %2469 = vmax.xlane.f32.xlu0 %v2468
        %v2470 = vpop.xlane.xlu0 %2469
        %v2471 = vmax.f32 %v2330, %v2332
        %2472 = vmax.xlane.f32.xlu0 %v2471
        %v2473 = vpop.xlane.xlu0 %2472
        %v2474 = vmax.f32 %v2336, %v2338
        %2475 = vmax.xlane.f32.xlu0 %v2474
        %v2476 = vpop.xlane.xlu0 %2475
        %v2477 = vmax.f32 %v2340, %v2342
        %2478 = vmax.xlane.f32.xlu0 %v2477
        %v2479 = vpop.xlane.xlu0 %2478
        %v2480 = vmax.f32 %v2346, %v2348
        %2481 = vmax.xlane.f32.xlu0 %v2480
        %v2482 = vpop.xlane.xlu0 %2481
        %v2483 = vmax.f32 %v2350, %v2352
        %2484 = vmax.xlane.f32.xlu0 %v2483
        %v2485 = vpop.xlane.xlu0 %2484
        %v2486 = vmax.f32 %v2356, %v2358
        %2487 = vmax.xlane.f32.xlu0 %v2486
        %v2488 = vpop.xlane.xlu0 %2487
        %v2489 = vmax.f32 %v2360, %v2362
        %2490 = vmax.xlane.f32.xlu0 %v2489
        %v2491 = vpop.xlane.xlu0 %2490
        %v2492 = vmax.f32 %v2366, %v2368
        %2493 = vmax.xlane.f32.xlu0 %v2492
        %v2494 = vpop.xlane.xlu0 %2493
        %v2495 = vmax.f32 %v2370, %v2372
        %2496 = vmax.xlane.f32.xlu0 %v2495
        %v2497 = vpop.xlane.xlu0 %2496
        %v2498 = vmax.f32 %v2376, %v2378
        %2499 = vmax.xlane.f32.xlu0 %v2498
        %v2500 = vpop.xlane.xlu0 %2499
        %v2501 = vmax.f32 %v2380, %v2382
        %2502 = vmax.xlane.f32.xlu0 %v2501
        %v2503 = vpop.xlane.xlu0 %2502
        %v2504 = vmax.f32 %v2386, %v2388
        %2505 = vmax.xlane.f32.xlu0 %v2504
        %v2506 = vpop.xlane.xlu0 %2505
        %v2507 = vmax.f32 %v2390, %v2392
        %2508 = vmax.xlane.f32.xlu0 %v2507
        %v2509 = vpop.xlane.xlu0 %2508
        %v2510 = vmax.f32 %v2396, %v2398
        %2511 = vmax.xlane.f32.xlu0 %v2510
        %v2512 = vpop.xlane.xlu0 %2511
        %v2513 = vmax.f32 %v2400, %v2402
        %2514 = vmax.xlane.f32.xlu0 %v2513
        %v2515 = vpop.xlane.xlu0 %2514
        %v2516 = vmax.f32 %v2406, %v2408
        %2517 = vmax.xlane.f32.xlu0 %v2516
        %v2518 = vpop.xlane.xlu0 %2517
        %v2519 = vmax.f32 %v2410, %v2412
        %2520 = vmax.xlane.f32.xlu0 %v2519
        %v2521 = vpop.xlane.xlu0 %2520
        %v2522 = vmax.f32 %v2416, %v2418
        %2523 = vmax.xlane.f32.xlu0 %v2522
        %v2524 = vpop.xlane.xlu0 %2523
        %v2525 = vmax.f32 %v2420, %v2422
        %2526 = vmax.xlane.f32.xlu0 %v2525
        %v2527 = vpop.xlane.xlu0 %2526
        %v2528 = vmax.f32 %v2426, %v2428
        %2529 = vmax.xlane.f32.xlu0 %v2528
        %v2530 = vpop.xlane.xlu0 %2529
        %v2531 = vmax.f32 %v2430, %v2432
        %2532 = vmax.xlane.f32.xlu0 %v2531
        %v2533 = vpop.xlane.xlu0 %2532
        %v2534 = vmax.f32 %v2436, %v2438
        %2535 = vmax.xlane.f32.xlu0 %v2534
        %v2536 = vpop.xlane.xlu0 %2535
        %v2537 = vmax.f32 %v2440, %v2442
        %2538 = vmax.xlane.f32.xlu0 %v2537
        %v2539 = vpop.xlane.xlu0 %2538
        %v2540 = vsub.f32 %v2286, %v2446
        %v2541 = vsub.f32 %v2288, %v2446
        %v2542 = vsub.f32 %v2290, %v2449
        %v2543 = vsub.f32 %v2292, %v2449
        %v2544 = vsub.f32 %v2296, %v2452
        %v2545 = vsub.f32 %v2298, %v2452
        %v2546 = vsub.f32 %v2300, %v2455
        %v2547 = vsub.f32 %v2302, %v2455
        %v2548 = vsub.f32 %v2306, %v2458
        %v2549 = vsub.f32 %v2308, %v2458
        %v2550 = vsub.f32 %v2310, %v2461
        %v2551 = vsub.f32 %v2312, %v2461
        %v2552 = vsub.f32 %v2316, %v2464
        %v2553 = vsub.f32 %v2318, %v2464
        %v2554 = vsub.f32 %v2320, %v2467
        %v2555 = vsub.f32 %v2322, %v2467
        %v2556 = vsub.f32 %v2326, %v2470
        %v2557 = vsub.f32 %v2328, %v2470
        %v2558 = vsub.f32 %v2330, %v2473
        %v2559 = vsub.f32 %v2332, %v2473
        %v2560 = vsub.f32 %v2336, %v2476
        %v2561 = vsub.f32 %v2338, %v2476
        %v2562 = vsub.f32 %v2340, %v2479
        %v2563 = vsub.f32 %v2342, %v2479
        %v2564 = vsub.f32 %v2346, %v2482
        %v2565 = vsub.f32 %v2348, %v2482
        %v2566 = vsub.f32 %v2350, %v2485
        %v2567 = vsub.f32 %v2352, %v2485
        %v2568 = vsub.f32 %v2356, %v2488
        %v2569 = vsub.f32 %v2358, %v2488
        %v2570 = vsub.f32 %v2360, %v2491
        %v2571 = vsub.f32 %v2362, %v2491
        %v2572 = vsub.f32 %v2366, %v2494
        %v2573 = vsub.f32 %v2368, %v2494
        %v2574 = vsub.f32 %v2370, %v2497
        %v2575 = vsub.f32 %v2372, %v2497
        %v2576 = vsub.f32 %v2376, %v2500
        %v2577 = vsub.f32 %v2378, %v2500
        %v2578 = vsub.f32 %v2380, %v2503
        %v2579 = vsub.f32 %v2382, %v2503
        %v2580 = vsub.f32 %v2386, %v2506
        %v2581 = vsub.f32 %v2388, %v2506
        %v2582 = vsub.f32 %v2390, %v2509
        %v2583 = vsub.f32 %v2392, %v2509
        %v2584 = vsub.f32 %v2396, %v2512
        %v2585 = vsub.f32 %v2398, %v2512
        %v2586 = vsub.f32 %v2400, %v2515
        %v2587 = vsub.f32 %v2402, %v2515
        %v2588 = vsub.f32 %v2406, %v2518
        %v2589 = vsub.f32 %v2408, %v2518
        %v2590 = vsub.f32 %v2410, %v2521
        %v2591 = vsub.f32 %v2412, %v2521
        %v2592 = vsub.f32 %v2416, %v2524
        %v2593 = vsub.f32 %v2418, %v2524
        %v2594 = vsub.f32 %v2420, %v2527
        %v2595 = vsub.f32 %v2422, %v2527
        %v2596 = vsub.f32 %v2426, %v2530
        %v2597 = vsub.f32 %v2428, %v2530
        %v2598 = vsub.f32 %v2430, %v2533
        %v2599 = vsub.f32 %v2432, %v2533
        %v2600 = vsub.f32 %v2436, %v2536
        %v2601 = vsub.f32 %v2438, %v2536
        %v2602 = vsub.f32 %v2440, %v2539
        %v2603 = vsub.f32 %v2442, %v2539
        %v2604 = vmul.f32 %v2540, 1.442695
        %v2605 = vpow.pop %v2604
        %v2606 = vmul.f32 %v2541, 1.442695
        %v2607 = vpow.pop %v2606
        %v2608 = vmul.f32 %v2542, 1.442695
        %v2609 = vpow.pop %v2608
        %v2610 = vmul.f32 %v2543, 1.442695
        %v2611 = vpow.pop %v2610
        %v2612 = vmul.f32 %v2544, 1.442695
        %v2613 = vpow.pop %v2612
        %v2614 = vmul.f32 %v2545, 1.442695
        %v2615 = vpow.pop %v2614
        %v2616 = vmul.f32 %v2546, 1.442695
        %v2617 = vpow.pop %v2616
        %v2618 = vmul.f32 %v2547, 1.442695
        %v2619 = vpow.pop %v2618
        %v2620 = vmul.f32 %v2548, 1.442695
        %v2621 = vpow.pop %v2620
        %v2622 = vmul.f32 %v2549, 1.442695
        %v2623 = vpow.pop %v2622
        %v2624 = vmul.f32 %v2550, 1.442695
        %v2625 = vpow.pop %v2624
        %v2626 = vmul.f32 %v2551, 1.442695
        %v2627 = vpow.pop %v2626
        %v2628 = vmul.f32 %v2552, 1.442695
        %v2629 = vpow.pop %v2628
        %v2630 = vmul.f32 %v2553, 1.442695
        %v2631 = vpow.pop %v2630
        %v2632 = vmul.f32 %v2554, 1.442695
        %v2633 = vpow.pop %v2632
        %v2634 = vmul.f32 %v2555, 1.442695
        %v2635 = vpow.pop %v2634
        %v2636 = vmul.f32 %v2556, 1.442695
        %v2637 = vpow.pop %v2636
        %v2638 = vmul.f32 %v2557, 1.442695
        %v2639 = vpow.pop %v2638
        %v2640 = vmul.f32 %v2558, 1.442695
        %v2641 = vpow.pop %v2640
        %v2642 = vmul.f32 %v2559, 1.442695
        %v2643 = vpow.pop %v2642
        %v2644 = vmul.f32 %v2560, 1.442695
        %v2645 = vpow.pop %v2644
        %v2646 = vmul.f32 %v2561, 1.442695
        %v2647 = vpow.pop %v2646
        %v2648 = vmul.f32 %v2562, 1.442695
        %v2649 = vpow.pop %v2648
        %v2650 = vmul.f32 %v2563, 1.442695
        %v2651 = vpow.pop %v2650
        %v2652 = vmul.f32 %v2564, 1.442695
        %v2653 = vpow.pop %v2652
        %v2654 = vmul.f32 %v2565, 1.442695
        %v2655 = vpow.pop %v2654
        %v2656 = vmul.f32 %v2566, 1.442695
        %v2657 = vpow.pop %v2656
        %v2658 = vmul.f32 %v2567, 1.442695
        %v2659 = vpow.pop %v2658
        %v2660 = vmul.f32 %v2568, 1.442695
        %v2661 = vpow.pop %v2660
        %v2662 = vmul.f32 %v2569, 1.442695
        %v2663 = vpow.pop %v2662
        %v2664 = vmul.f32 %v2570, 1.442695
        %v2665 = vpow.pop %v2664
        %v2666 = vmul.f32 %v2571, 1.442695
        %v2667 = vpow.pop %v2666
        %v2668 = vmul.f32 %v2572, 1.442695
        %v2669 = vpow.pop %v2668
        %v2670 = vmul.f32 %v2573, 1.442695
        %v2671 = vpow.pop %v2670
        %v2672 = vmul.f32 %v2574, 1.442695
        %v2673 = vpow.pop %v2672
        %v2674 = vmul.f32 %v2575, 1.442695
        %v2675 = vpow.pop %v2674
        %v2676 = vmul.f32 %v2576, 1.442695
        %v2677 = vpow.pop %v2676
        %v2678 = vmul.f32 %v2577, 1.442695
        %v2679 = vpow.pop %v2678
        %v2680 = vmul.f32 %v2578, 1.442695
        %v2681 = vpow.pop %v2680
        %v2682 = vmul.f32 %v2579, 1.442695
        %v2683 = vpow.pop %v2682
        %v2684 = vmul.f32 %v2580, 1.442695
        %v2685 = vpow.pop %v2684
        %v2686 = vmul.f32 %v2581, 1.442695
        %v2687 = vpow.pop %v2686
        %v2688 = vmul.f32 %v2582, 1.442695
        %v2689 = vpow.pop %v2688
        %v2690 = vmul.f32 %v2583, 1.442695
        %v2691 = vpow.pop %v2690
        %v2692 = vmul.f32 %v2584, 1.442695
        %v2693 = vpow.pop %v2692
        %v2694 = vmul.f32 %v2585, 1.442695
        %v2695 = vpow.pop %v2694
        %v2696 = vmul.f32 %v2586, 1.442695
        %v2697 = vpow.pop %v2696
        %v2698 = vmul.f32 %v2587, 1.442695
        %v2699 = vpow.pop %v2698
        %v2700 = vmul.f32 %v2588, 1.442695
        %v2701 = vpow.pop %v2700
        %v2702 = vmul.f32 %v2589, 1.442695
        %v2703 = vpow.pop %v2702
        %v2704 = vmul.f32 %v2590, 1.442695
        %v2705 = vpow.pop %v2704
        %v2706 = vmul.f32 %v2591, 1.442695
        %v2707 = vpow.pop %v2706
        %v2708 = vmul.f32 %v2592, 1.442695
        %v2709 = vpow.pop %v2708
        %v2710 = vmul.f32 %v2593, 1.442695
        %v2711 = vpow.pop %v2710
        %v2712 = vmul.f32 %v2594, 1.442695
        %v2713 = vpow.pop %v2712
        %v2714 = vmul.f32 %v2595, 1.442695
        %v2715 = vpow.pop %v2714
        %v2716 = vmul.f32 %v2596, 1.442695
        %v2717 = vpow.pop %v2716
        %v2718 = vmul.f32 %v2597, 1.442695
        %v2719 = vpow.pop %v2718
        %v2720 = vmul.f32 %v2598, 1.442695
        %v2721 = vpow.pop %v2720
        %v2722 = vmul.f32 %v2599, 1.442695
        %v2723 = vpow.pop %v2722
        %v2724 = vmul.f32 %v2600, 1.442695
        %v2725 = vpow.pop %v2724
        %v2726 = vmul.f32 %v2601, 1.442695
        %v2727 = vpow.pop %v2726
        %v2728 = vmul.f32 %v2602, 1.442695
        %v2729 = vpow.pop %v2728
        %v2730 = vmul.f32 %v2603, 1.442695
        %v2731 = vpow.pop %v2730
        %v2732 = vadd.f32 %v2605, %v2607
        %2733 = vadd.xlane.f32.xlu0 %v2732
        %v2734 = vpop.xlane.xlu0 %2733
        %v2735 = vadd.f32 %v2609, %v2611
        %2736 = vadd.xlane.f32.xlu0 %v2735
        %v2737 = vpop.xlane.xlu0 %2736
        %v2738 = vadd.f32 %v2613, %v2615
        %2739 = vadd.xlane.f32.xlu0 %v2738
        %v2740 = vpop.xlane.xlu0 %2739
        %v2741 = vadd.f32 %v2617, %v2619
        %2742 = vadd.xlane.f32.xlu0 %v2741
        %v2743 = vpop.xlane.xlu0 %2742
        %v2744 = vadd.f32 %v2621, %v2623
        %2745 = vadd.xlane.f32.xlu0 %v2744
        %v2746 = vpop.xlane.xlu0 %2745
        %v2747 = vadd.f32 %v2625, %v2627
        %2748 = vadd.xlane.f32.xlu0 %v2747
        %v2749 = vpop.xlane.xlu0 %2748
        %v2750 = vadd.f32 %v2629, %v2631
        %2751 = vadd.xlane.f32.xlu0 %v2750
        %v2752 = vpop.xlane.xlu0 %2751
        %v2753 = vadd.f32 %v2633, %v2635
        %2754 = vadd.xlane.f32.xlu0 %v2753
        %v2755 = vpop.xlane.xlu0 %2754
        %v2756 = vadd.f32 %v2637, %v2639
        %2757 = vadd.xlane.f32.xlu0 %v2756
        %v2758 = vpop.xlane.xlu0 %2757
        %v2759 = vadd.f32 %v2641, %v2643
        %2760 = vadd.xlane.f32.xlu0 %v2759
        %v2761 = vpop.xlane.xlu0 %2760
        %v2762 = vadd.f32 %v2645, %v2647
        %2763 = vadd.xlane.f32.xlu0 %v2762
        %v2764 = vpop.xlane.xlu0 %2763
        %v2765 = vadd.f32 %v2649, %v2651
        %2766 = vadd.xlane.f32.xlu0 %v2765
        %v2767 = vpop.xlane.xlu0 %2766
        %v2768 = vadd.f32 %v2653, %v2655
        %2769 = vadd.xlane.f32.xlu0 %v2768
        %v2770 = vpop.xlane.xlu0 %2769
        %v2771 = vadd.f32 %v2657, %v2659
        %2772 = vadd.xlane.f32.xlu0 %v2771
        %v2773 = vpop.xlane.xlu0 %2772
        %v2774 = vadd.f32 %v2661, %v2663
        %2775 = vadd.xlane.f32.xlu0 %v2774
        %v2776 = vpop.xlane.xlu0 %2775
        %v2777 = vadd.f32 %v2665, %v2667
        %2778 = vadd.xlane.f32.xlu0 %v2777
        %v2779 = vpop.xlane.xlu0 %2778
        %v2780 = vadd.f32 %v2669, %v2671
        %2781 = vadd.xlane.f32.xlu0 %v2780
        %v2782 = vpop.xlane.xlu0 %2781
        %v2783 = vadd.f32 %v2673, %v2675
        %2784 = vadd.xlane.f32.xlu0 %v2783
        %v2785 = vpop.xlane.xlu0 %2784
        %v2786 = vadd.f32 %v2677, %v2679
        %2787 = vadd.xlane.f32.xlu0 %v2786
        %v2788 = vpop.xlane.xlu0 %2787
        %v2789 = vadd.f32 %v2681, %v2683
        %2790 = vadd.xlane.f32.xlu0 %v2789
        %v2791 = vpop.xlane.xlu0 %2790
        %v2792 = vadd.f32 %v2685, %v2687
        %2793 = vadd.xlane.f32.xlu0 %v2792
        %v2794 = vpop.xlane.xlu0 %2793
        %v2795 = vadd.f32 %v2689, %v2691
        %2796 = vadd.xlane.f32.xlu0 %v2795
        %v2797 = vpop.xlane.xlu0 %2796
        %v2798 = vadd.f32 %v2693, %v2695
        %2799 = vadd.xlane.f32.xlu0 %v2798
        %v2800 = vpop.xlane.xlu0 %2799
        %v2801 = vadd.f32 %v2697, %v2699
        %2802 = vadd.xlane.f32.xlu0 %v2801
        %v2803 = vpop.xlane.xlu0 %2802
        %v2804 = vadd.f32 %v2701, %v2703
        %2805 = vadd.xlane.f32.xlu0 %v2804
        %v2806 = vpop.xlane.xlu0 %2805
        %v2807 = vadd.f32 %v2705, %v2707
        %2808 = vadd.xlane.f32.xlu0 %v2807
        %v2809 = vpop.xlane.xlu0 %2808
        %v2810 = vadd.f32 %v2709, %v2711
        %2811 = vadd.xlane.f32.xlu0 %v2810
        %v2812 = vpop.xlane.xlu0 %2811
        %v2813 = vadd.f32 %v2713, %v2715
        %2814 = vadd.xlane.f32.xlu0 %v2813
        %v2815 = vpop.xlane.xlu0 %2814
        %v2816 = vadd.f32 %v2717, %v2719
        %2817 = vadd.xlane.f32.xlu0 %v2816
        %v2818 = vpop.xlane.xlu0 %2817
        %v2819 = vadd.f32 %v2721, %v2723
        %2820 = vadd.xlane.f32.xlu0 %v2819
        %v2821 = vpop.xlane.xlu0 %2820
        %v2822 = vadd.f32 %v2725, %v2727
        %2823 = vadd.xlane.f32.xlu0 %v2822
        %v2824 = vpop.xlane.xlu0 %2823
        %v2825 = vadd.f32 %v2729, %v2731
        %2826 = vadd.xlane.f32.xlu0 %v2825
        %v2827 = vpop.xlane.xlu0 %2826
        %v2828 = vrcp.pop %v2734
        %v2829 = vrcp.pop %v2737
        %v2830 = vrcp.pop %v2740
        %v2831 = vrcp.pop %v2743
        %v2832 = vrcp.pop %v2746
        %v2833 = vrcp.pop %v2749
        %v2834 = vrcp.pop %v2752
        %v2835 = vrcp.pop %v2755
        %v2836 = vrcp.pop %v2758
        %v2837 = vrcp.pop %v2761
        %v2838 = vrcp.pop %v2764
        %v2839 = vrcp.pop %v2767
        %v2840 = vrcp.pop %v2770
        %v2841 = vrcp.pop %v2773
        %v2842 = vrcp.pop %v2776
        %v2843 = vrcp.pop %v2779
        %v2844 = vrcp.pop %v2782
        %v2845 = vrcp.pop %v2785
        %v2846 = vrcp.pop %v2788
        %v2847 = vrcp.pop %v2791
        %v2848 = vrcp.pop %v2794
        %v2849 = vrcp.pop %v2797
        %v2850 = vrcp.pop %v2800
        %v2851 = vrcp.pop %v2803
        %v2852 = vrcp.pop %v2806
        %v2853 = vrcp.pop %v2809
        %v2854 = vrcp.pop %v2812
        %v2855 = vrcp.pop %v2815
        %v2856 = vrcp.pop %v2818
        %v2857 = vrcp.pop %v2821
        %v2858 = vrcp.pop %v2824
        %v2859 = vrcp.pop %v2827
        %v2860 = vmul.f32 %v2605, %v2828
        %v2861 = vmul.f32 %v2607, %v2828
        %v2862 = vmul.f32 %v2609, %v2829
        %v2863 = vmul.f32 %v2611, %v2829
        %v2864 = vmul.f32 %v2613, %v2830
        %v2865 = vmul.f32 %v2615, %v2830
        %v2866 = vmul.f32 %v2617, %v2831
        %v2867 = vmul.f32 %v2619, %v2831
        %v2868 = vmul.f32 %v2621, %v2832
        %v2869 = vmul.f32 %v2623, %v2832
        %v2870 = vmul.f32 %v2625, %v2833
        %v2871 = vmul.f32 %v2627, %v2833
        %v2872 = vmul.f32 %v2629, %v2834
        %v2873 = vmul.f32 %v2631, %v2834
        %v2874 = vmul.f32 %v2633, %v2835
        %v2875 = vmul.f32 %v2635, %v2835
        %v2876 = vmul.f32 %v2637, %v2836
        %v2877 = vmul.f32 %v2639, %v2836
        %v2878 = vmul.f32 %v2641, %v2837
        %v2879 = vmul.f32 %v2643, %v2837
        %v2880 = vmul.f32 %v2645, %v2838
        %v2881 = vmul.f32 %v2647, %v2838
        %v2882 = vmul.f32 %v2649, %v2839
        %v2883 = vmul.f32 %v2651, %v2839
        %v2884 = vmul.f32 %v2653, %v2840
        %v2885 = vmul.f32 %v2655, %v2840
        %v2886 = vmul.f32 %v2657, %v2841
        %v2887 = vmul.f32 %v2659, %v2841
        %v2888 = vmul.f32 %v2661, %v2842
        %v2889 = vmul.f32 %v2663, %v2842
        %v2890 = vmul.f32 %v2665, %v2843
        %v2891 = vmul.f32 %v2667, %v2843
        %v2892 = vmul.f32 %v2669, %v2844
        %v2893 = vmul.f32 %v2671, %v2844
        %v2894 = vmul.f32 %v2673, %v2845
        %v2895 = vmul.f32 %v2675, %v2845
        %v2896 = vmul.f32 %v2677, %v2846
        %v2897 = vmul.f32 %v2679, %v2846
        %v2898 = vmul.f32 %v2681, %v2847
        %v2899 = vmul.f32 %v2683, %v2847
        %v2900 = vmul.f32 %v2685, %v2848
        %v2901 = vmul.f32 %v2687, %v2848
        %v2902 = vmul.f32 %v2689, %v2849
        %v2903 = vmul.f32 %v2691, %v2849
        %v2904 = vmul.f32 %v2693, %v2850
        %v2905 = vmul.f32 %v2695, %v2850
        %v2906 = vmul.f32 %v2697, %v2851
        %v2907 = vmul.f32 %v2699, %v2851
        %v2908 = vmul.f32 %v2701, %v2852
        %v2909 = vmul.f32 %v2703, %v2852
        %v2910 = vmul.f32 %v2705, %v2853
        %v2911 = vmul.f32 %v2707, %v2853
        %v2912 = vmul.f32 %v2709, %v2854
        %v2913 = vmul.f32 %v2711, %v2854
        %v2914 = vmul.f32 %v2713, %v2855
        %v2915 = vmul.f32 %v2715, %v2855
        %v2916 = vmul.f32 %v2717, %v2856
        %v2917 = vmul.f32 %v2719, %v2856
        %v2918 = vmul.f32 %v2721, %v2857
        %v2919 = vmul.f32 %v2723, %v2857
        %v2920 = vmul.f32 %v2725, %v2858
        %v2921 = vmul.f32 %v2727, %v2858
        %v2922 = vmul.f32 %v2729, %v2859
        %v2923 = vmul.f32 %v2731, %v2859
        %v2924 = vpack.c.bf16 %v2862, %v2860
        %v2925 = vpack.c.bf16 %v2863, %v2861
        %v2926 = vpack.c.bf16 %v2866, %v2864
        %v2927 = vpack.c.bf16 %v2867, %v2865
        %v2928 = vpack.c.bf16 %v2870, %v2868
        %v2929 = vpack.c.bf16 %v2871, %v2869
        %v2930 = vpack.c.bf16 %v2874, %v2872
        %v2931 = vpack.c.bf16 %v2875, %v2873
        %v2932 = vpack.c.bf16 %v2878, %v2876
        %v2933 = vpack.c.bf16 %v2879, %v2877
        %v2934 = vpack.c.bf16 %v2882, %v2880
        %v2935 = vpack.c.bf16 %v2883, %v2881
        %v2936 = vpack.c.bf16 %v2886, %v2884
        %v2937 = vpack.c.bf16 %v2887, %v2885
        %v2938 = vpack.c.bf16 %v2890, %v2888
        %v2939 = vpack.c.bf16 %v2891, %v2889
        %v2940 = vpack.c.bf16 %v2894, %v2892
        %v2941 = vpack.c.bf16 %v2895, %v2893
        %v2942 = vpack.c.bf16 %v2898, %v2896
        %v2943 = vpack.c.bf16 %v2899, %v2897
        %v2944 = vpack.c.bf16 %v2902, %v2900
        %v2945 = vpack.c.bf16 %v2903, %v2901
        %v2946 = vpack.c.bf16 %v2906, %v2904
        %v2947 = vpack.c.bf16 %v2907, %v2905
        %v2948 = vpack.c.bf16 %v2910, %v2908
        %v2949 = vpack.c.bf16 %v2911, %v2909
        %v2950 = vpack.c.bf16 %v2914, %v2912
        %v2951 = vpack.c.bf16 %v2915, %v2913
        %v2952 = vpack.c.bf16 %v2918, %v2916
        %v2953 = vpack.c.bf16 %v2919, %v2917
        %v2954 = vpack.c.bf16 %v2922, %v2920
        %v2955 = vpack.c.bf16 %v2923, %v2921
        %2956 = vmatprep.subr.bf16.mxu0 %v2925
        %2957 = vmatpush1.bf16.xpose.msra.mxu0 %v2924
        %2958 = vmatprep.subr.bf16.mxu0 %v2927
        %2959 = vmatpush1.bf16.xpose.msra.mxu0 %v2926
        %2960 = vmatprep.subr.bf16.mxu0 %v2929
        %2961 = vmatpush1.bf16.xpose.msra.mxu0 %v2928
        %2962 = vmatprep.subr.bf16.mxu0 %v2931
        %2963 = vmatpush1.bf16.xpose.msra.mxu0 %v2930
        %2964 = vmatprep.subr.bf16.mxu0 %v2933
        %2965 = vmatpush1.bf16.xpose.msra.mxu0 %v2932
        %2966 = vmatprep.subr.bf16.mxu0 %v2935
        %2967 = vmatpush1.bf16.xpose.msra.mxu0 %v2934
        %2968 = vmatprep.subr.bf16.mxu0 %v2937
        %2969 = vmatpush1.bf16.xpose.msra.mxu0 %v2936
        %2970 = vmatprep.subr.bf16.mxu0 %v2939
        %2971 = vmatpush1.bf16.xpose.msra.mxu0 %v2938
        %2972 = vmatprep.subr.bf16.mxu0 %v2941
        %2973 = vmatpush1.bf16.xpose.msra.mxu0 %v2940
        %2974 = vmatprep.subr.bf16.mxu0 %v2943
        %2975 = vmatpush1.bf16.xpose.msra.mxu0 %v2942
        %2976 = vmatprep.subr.bf16.mxu0 %v2945
        %2977 = vmatpush1.bf16.xpose.msra.mxu0 %v2944
        %2978 = vmatprep.subr.bf16.mxu0 %v2947
        %2979 = vmatpush1.bf16.xpose.msra.mxu0 %v2946
        %2980 = vmatprep.subr.bf16.mxu0 %v2949
        %2981 = vmatpush1.bf16.xpose.msra.mxu0 %v2948
        %2982 = vmatprep.subr.bf16.mxu0 %v2951
        %2983 = vmatpush1.bf16.xpose.msra.mxu0 %v2950
        %2984 = vmatprep.subr.bf16.mxu0 %v2953
        %2985 = vmatpush1.bf16.xpose.msra.mxu0 %v2952
        %2986 = vmatprep.subr.bf16.mxu0 %v2955
        %2987 = vmatpush1.bf16.xpose.msra.mxu0 %v2954
        %2988 = vmatprep.mubr.bf16.mxu0 %v2200
        %2989 = vmatmul.mubr.bf16.gmra.mrb[0].mxu0 %v2199
        %v2990 = vpop.f32.mrb[0].mxu0
        %v2991 = vadd.f32 0.0, %v2990
        %v2992 = vpop.f32.mrb[0].mxu0
        %v2993 = vadd.f32 0.0, %v2992
        %v2994 = vpop.f32.mrb[0].mxu0
        %v2995 = vadd.f32 0.0, %v2994
        %v2996 = vpop.f32.mrb[0].mxu0
        %v2997 = vadd.f32 0.0, %v2996
        %2998 = vmatprep.mubr.bf16.mxu0 %v2202
        %2999 = vmatmul.mubr.bf16.gmra.mrb[0].mxu0 %v2201
        %v3000 = vpop.f32.mrb[0].mxu0
        %v3001 = vadd.f32 0.0, %v3000
        %v3002 = vpop.f32.mrb[0].mxu0
        %v3003 = vadd.f32 0.0, %v3002
        %v3004 = vpop.f32.mrb[0].mxu0
        %v3005 = vadd.f32 0.0, %v3004
        %v3006 = vpop.f32.mrb[0].mxu0
        %v3007 = vadd.f32 0.0, %v3006
        %3008 = vdwg.mxu0
        %s3009 = scalar_lea.vmem %s5, 4
        %v3010 = vld [vmem:[%s3009] sm:$0xf]
        %v3012 = vsel %vm929, %v3010, 0
        %3014 = vmatprep.subr.mxu0 %v2993
        %3015 = vmatpush1.msra.mxu0 %v2991
        %3016 = vmatprep.subr.mxu0 %v2997
        %3017 = vmatpush1.msra.mxu0 %v2995
        %3018 = vmatprep.subr.mxu0 %v3003
        %3019 = vmatpush1.msra.mxu0 %v3001
        %3020 = vmatprep.subr.mxu0 %v3007
        %3021 = vmatpush1.msra.mxu0 %v3005
        %3022 = vmatprep.subr.mxu0 0.0
        %3023 = vmatpush1.msra.mxu0 0.0
        %3024 = vmatprep.subr.mxu0 0.0
        %3025 = vmatpush1.msra.mxu0 0.0
        %3026 = vmatprep.subr.mxu0 0.0
        %3027 = vmatpush1.msra.mxu0 0.0
        %3028 = vmatprep.subr.mxu0 0.0
        %3029 = vmatpush1.msra.mxu0 0.0
        %3030 = vmatprep.subr.mxu0 0.0
        %3031 = vmatpush1.msra.mxu0 0.0
        %3032 = vmatprep.subr.mxu0 0.0
        %3033 = vmatpush1.msra.mxu0 0.0
        %3034 = vmatprep.subr.mxu0 0.0
        %3035 = vmatpush1.msra.mxu0 0.0
        %3036 = vmatprep.subr.mxu0 0.0
        %3037 = vmatpush1.msra.mxu0 0.0
        %3038 = vmatprep.subr.mxu0 0.0
        %3039 = vmatpush1.msra.mxu0 0.0
        %3040 = vmatprep.subr.mxu0 0.0
        %3041 = vmatpush1.msra.mxu0 0.0
        %3042 = vmatprep.subr.mxu0 0.0
        %3043 = vmatpush1.msra.mxu0 0.0
        %3044 = vmatprep.subr.mxu0 0.0
        %3045 = vmatpush1.msra.mxu0 0.0
        %3046 = vmatprep.subr.mxu0 0.0
        %3047 = vmatpush1.msra.mxu0 0.0
        %3048 = vmatprep.subr.mxu0 0.0
        %3049 = vmatpush1.msra.mxu0 0.0
        %3050 = vmatprep.subr.mxu0 0.0
        %3051 = vmatpush1.msra.mxu0 0.0
        %3052 = vmatprep.subr.mxu0 0.0
        %3053 = vmatpush1.msra.mxu0 0.0
        %3054 = vmatprep.subr.mxu0 0.0
        %3055 = vmatpush1.msra.mxu0 0.0
        %3056 = vmatprep.subr.mxu0 0.0
        %3057 = vmatpush1.msra.mxu0 0.0
        %3058 = vmatprep.subr.mxu0 0.0
        %3059 = vmatpush1.msra.mxu0 0.0
        %3060 = vmatprep.subr.mxu0 0.0
        %3061 = vmatpush1.msra.mxu0 0.0
        %3062 = vmatprep.subr.mxu0 0.0
        %3063 = vmatpush1.msra.mxu0 0.0
        %3064 = vmatprep.subr.mxu0 0.0
        %3065 = vmatpush1.msra.mxu0 0.0
        %3066 = vmatprep.subr.mxu0 0.0
        %3067 = vmatpush1.msra.mxu0 0.0
        %3068 = vmatprep.subr.mxu0 0.0
        %3069 = vmatpush1.msra.mxu0 0.0
        %3070 = vmatprep.subr.mxu0 0.0
        %3071 = vmatpush1.msra.mxu0 0.0
        %3072 = vmatprep.subr.mxu0 0.0
        %3073 = vmatpush1.msra.mxu0 0.0
        %3074 = vmatprep.subr.mxu0 0.0
        %3075 = vmatpush1.msra.mxu0 0.0
        %3076 = vmatprep.subr.mxu0 0.0
        %3077 = vmatpush1.msra.mxu0 0.0
        %3078 = vmatprep.mubr.f32.mxu0 0.0
        %3079 = vmatmul.mubr.f32.gmra.mrb[0].mxu0 %v3012
        %v3080 = vpop.f32.mrb[0].mxu0
        %v3081 = vadd.f32 0.0, %v3080
        %v3082 = vpop.f32.mrb[0].mxu0
        %v3083 = vadd.f32 0.0, %v3082
        %3084 = vdwg.mxu0
        %v3086 = vsel %vm929, %v1736, 0
        %3088 = vmatprep.subr.mxu0 %v1720
        %3089 = vmatpush1.msra.mxu0 %v1718
        %3090 = vmatprep.subr.mxu0 %v1724
        %3091 = vmatpush1.msra.mxu0 %v1722
        %3092 = vmatprep.subr.mxu0 %v1730
        %3093 = vmatpush1.msra.mxu0 %v1728
        %3094 = vmatprep.subr.mxu0 %v1734
        %3095 = vmatpush1.msra.mxu0 %v1732
        %3096 = vmatprep.subr.mxu0 0.0
        %3097 = vmatpush1.msra.mxu0 0.0
        %3098 = vmatprep.subr.mxu0 0.0
        %3099 = vmatpush1.msra.mxu0 0.0
        %3100 = vmatprep.subr.mxu0 0.0
        %3101 = vmatpush1.msra.mxu0 0.0
        %3102 = vmatprep.subr.mxu0 0.0
        %3103 = vmatpush1.msra.mxu0 0.0
        %3104 = vmatprep.subr.mxu0 0.0
        %3105 = vmatpush1.msra.mxu0 0.0
        %3106 = vmatprep.subr.mxu0 0.0
        %3107 = vmatpush1.msra.mxu0 0.0
        %3108 = vmatprep.subr.mxu0 0.0
        %3109 = vmatpush1.msra.mxu0 0.0
        %3110 = vmatprep.subr.mxu0 0.0
        %3111 = vmatpush1.msra.mxu0 0.0
        %3112 = vmatprep.subr.mxu0 0.0
        %3113 = vmatpush1.msra.mxu0 0.0
        %3114 = vmatprep.subr.mxu0 0.0
        %3115 = vmatpush1.msra.mxu0 0.0
        %3116 = vmatprep.subr.mxu0 0.0
        %3117 = vmatpush1.msra.mxu0 0.0
        %3118 = vmatprep.subr.mxu0 0.0
        %3119 = vmatpush1.msra.mxu0 0.0
        %3120 = vmatprep.subr.mxu0 0.0
        %3121 = vmatpush1.msra.mxu0 0.0
        %3122 = vmatprep.subr.mxu0 0.0
        %3123 = vmatpush1.msra.mxu0 0.0
        %3124 = vmatprep.subr.mxu0 0.0
        %3125 = vmatpush1.msra.mxu0 0.0
        %3126 = vmatprep.subr.mxu0 0.0
        %3127 = vmatpush1.msra.mxu0 0.0
        %3128 = vmatprep.subr.mxu0 0.0
        %3129 = vmatpush1.msra.mxu0 0.0
        %3130 = vmatprep.subr.mxu0 0.0
        %3131 = vmatpush1.msra.mxu0 0.0
        %3132 = vmatprep.subr.mxu0 0.0
        %3133 = vmatpush1.msra.mxu0 0.0
        %3134 = vmatprep.subr.mxu0 0.0
        %3135 = vmatpush1.msra.mxu0 0.0
        %3136 = vmatprep.subr.mxu0 0.0
        %3137 = vmatpush1.msra.mxu0 0.0
        %3138 = vmatprep.subr.mxu0 0.0
        %3139 = vmatpush1.msra.mxu0 0.0
        %3140 = vmatprep.subr.mxu0 0.0
        %3141 = vmatpush1.msra.mxu0 0.0
        %3142 = vmatprep.subr.mxu0 0.0
        %3143 = vmatpush1.msra.mxu0 0.0
        %3144 = vmatprep.subr.mxu0 0.0
        %3145 = vmatpush1.msra.mxu0 0.0
        %3146 = vmatprep.subr.mxu0 0.0
        %3147 = vmatpush1.msra.mxu0 0.0
        %3148 = vmatprep.subr.mxu0 0.0
        %3149 = vmatpush1.msra.mxu0 0.0
        %3150 = vmatprep.subr.mxu0 0.0
        %3151 = vmatpush1.msra.mxu0 0.0
        %3152 = vmatprep.mubr.f32.mxu0 0.0
        %3153 = vmatmul.mubr.f32.gmra.mrb[0].mxu0 %v3086
        %v3154 = vpop.f32.mrb[0].mxu0
        %v3155 = vadd.f32 %v3081, %v3154
        %v3156 = vpop.f32.mrb[0].mxu0
        %v3157 = vadd.f32 %v3083, %v3156
        %3158 = vdwg.mxu0
        %s3159 = scalar_lea.vmem %s2, 8
        %v3160 = vld [vmem:[%s3159] sm:$0xf]
        %v3162 = vsel %vm460, %v3160, 0
        %3164 = vmatprep.subr.mxu0 0.0
        %3165 = vmatpush1.msra.mxu0 %v3162
        %3166 = vmatprep.subr.mxu0 0.0
        %3167 = vmatpush1.msra.mxu0 0.0
        %3168 = vmatprep.subr.mxu0 0.0
        %3169 = vmatpush1.msra.mxu0 0.0
        %3170 = vmatprep.subr.mxu0 0.0
        %3171 = vmatpush1.msra.mxu0 0.0
        %3172 = vmatprep.subr.mxu0 0.0
        %3173 = vmatpush1.msra.mxu0 0.0
        %3174 = vmatprep.subr.mxu0 0.0
        %3175 = vmatpush1.msra.mxu0 0.0
        %3176 = vmatprep.subr.mxu0 0.0
        %3177 = vmatpush1.msra.mxu0 0.0
        %3178 = vmatprep.subr.mxu0 0.0
        %3179 = vmatpush1.msra.mxu0 0.0
        %3180 = vmatprep.subr.mxu0 0.0
        %3181 = vmatpush1.msra.mxu0 0.0
        %3182 = vmatprep.subr.mxu0 0.0
        %3183 = vmatpush1.msra.mxu0 0.0
        %3184 = vmatprep.subr.mxu0 0.0
        %3185 = vmatpush1.msra.mxu0 0.0
        %3186 = vmatprep.subr.mxu0 0.0
        %3187 = vmatpush1.msra.mxu0 0.0
        %3188 = vmatprep.subr.mxu0 0.0
        %3189 = vmatpush1.msra.mxu0 0.0
        %3190 = vmatprep.subr.mxu0 0.0
        %3191 = vmatpush1.msra.mxu0 0.0
        %3192 = vmatprep.subr.mxu0 0.0
        %3193 = vmatpush1.msra.mxu0 0.0
        %3194 = vmatprep.subr.mxu0 0.0
        %3195 = vmatpush1.msra.mxu0 0.0
        %3196 = vmatprep.subr.mxu0 0.0
        %3197 = vmatpush1.msra.mxu0 0.0
        %3198 = vmatprep.subr.mxu0 0.0
        %3199 = vmatpush1.msra.mxu0 0.0
        %3200 = vmatprep.subr.mxu0 0.0
        %3201 = vmatpush1.msra.mxu0 0.0
        %3202 = vmatprep.subr.mxu0 0.0
        %3203 = vmatpush1.msra.mxu0 0.0
        %3204 = vmatprep.subr.mxu0 0.0
        %3205 = vmatpush1.msra.mxu0 0.0
        %3206 = vmatprep.subr.mxu0 0.0
        %3207 = vmatpush1.msra.mxu0 0.0
        %3208 = vmatprep.subr.mxu0 0.0
        %3209 = vmatpush1.msra.mxu0 0.0
        %3210 = vmatprep.subr.mxu0 0.0
        %3211 = vmatpush1.msra.mxu0 0.0
        %3212 = vmatprep.subr.mxu0 0.0
        %3213 = vmatpush1.msra.mxu0 0.0
        %3214 = vmatprep.subr.mxu0 0.0
        %3215 = vmatpush1.msra.mxu0 0.0
        %3216 = vmatprep.subr.mxu0 0.0
        %3217 = vmatpush1.msra.mxu0 0.0
        %3218 = vmatprep.subr.mxu0 0.0
        %3219 = vmatpush1.msra.mxu0 0.0
        %3220 = vmatprep.subr.mxu0 0.0
        %3221 = vmatpush1.msra.mxu0 0.0
        %3222 = vmatprep.subr.mxu0 0.0
        %3223 = vmatpush1.msra.mxu0 0.0
        %3224 = vmatprep.subr.mxu0 0.0
        %3225 = vmatpush1.msra.mxu0 0.0
        %3226 = vmatprep.subr.mxu0 0.0
        %3227 = vmatpush1.msra.mxu0 0.0
        %3228 = vmatprep.mubr.f32.mxu0 0.0
        %3229 = vmatmul.mubr.f32.gmra.mrb[0].mxu0 %v365
        %v3230 = vpop.f32.mrb[0].mxu0
        %v3231 = vadd.f32 0.0, %v3230
        %v3232 = vpop.f32.mrb[0].mxu0
        %3233 = vmatprep.mubr.f32.mxu0 0.0
        %3234 = vmatmul.mubr.f32.gmra.mrb[0].mxu0 %v368
        %v3235 = vpop.f32.mrb[0].mxu0
        %v3236 = vadd.f32 0.0, %v3235
        %v3237 = vpop.f32.mrb[0].mxu0
        %3238 = vmatprep.mubr.f32.mxu0 0.0
        %3239 = vmatmul.mubr.f32.gmra.mrb[0].mxu0 %v371
        %v3240 = vpop.f32.mrb[0].mxu0
        %v3241 = vadd.f32 0.0, %v3240
        %v3242 = vpop.f32.mrb[0].mxu0
        %3243 = vmatprep.mubr.f32.mxu0 0.0
        %3244 = vmatmul.mubr.f32.gmra.mrb[0].mxu0 %v374
        %v3245 = vpop.f32.mrb[0].mxu0
        %v3246 = vadd.f32 0.0, %v3245
        %v3247 = vpop.f32.mrb[0].mxu0
        %3248 = vmatprep.mubr.f32.mxu0 0.0
        %3249 = vmatmul.mubr.f32.gmra.mrb[0].mxu0 %v377
        %v3250 = vpop.f32.mrb[0].mxu0
        %v3251 = vadd.f32 0.0, %v3250
        %v3252 = vpop.f32.mrb[0].mxu0
        %3253 = vmatprep.mubr.f32.mxu0 0.0
        %3254 = vmatmul.mubr.f32.gmra.mrb[0].mxu0 %v380
        %v3255 = vpop.f32.mrb[0].mxu0
        %v3256 = vadd.f32 0.0, %v3255
        %v3257 = vpop.f32.mrb[0].mxu0
        %3258 = vmatprep.mubr.f32.mxu0 0.0
        %3259 = vmatmul.mubr.f32.gmra.mrb[0].mxu0 %v383
        %v3260 = vpop.f32.mrb[0].mxu0
        %v3261 = vadd.f32 0.0, %v3260
        %v3262 = vpop.f32.mrb[0].mxu0
        %3263 = vmatprep.mubr.f32.mxu0 0.0
        %3264 = vmatmul.mubr.f32.gmra.mrb[0].mxu0 %v386
        %v3265 = vpop.f32.mrb[0].mxu0
        %v3266 = vadd.f32 0.0, %v3265
        %v3267 = vpop.f32.mrb[0].mxu0
        %3268 = vmatprep.mubr.f32.mxu0 0.0
        %3269 = vmatmul.mubr.f32.gmra.mrb[0].mxu0 %v389
        %v3270 = vpop.f32.mrb[0].mxu0
        %v3271 = vadd.f32 0.0, %v3270
        %v3272 = vpop.f32.mrb[0].mxu0
        %3273 = vmatprep.mubr.f32.mxu0 0.0
        %3274 = vmatmul.mubr.f32.gmra.mrb[0].mxu0 %v392
        %v3275 = vpop.f32.mrb[0].mxu0
        %v3276 = vadd.f32 0.0, %v3275
        %v3277 = vpop.f32.mrb[0].mxu0
        %3278 = vmatprep.mubr.f32.mxu0 0.0
        %3279 = vmatmul.mubr.f32.gmra.mrb[0].mxu0 %v395
        %v3280 = vpop.f32.mrb[0].mxu0
        %v3281 = vadd.f32 0.0, %v3280
        %v3282 = vpop.f32.mrb[0].mxu0
        %3283 = vmatprep.mubr.f32.mxu0 0.0
        %3284 = vmatmul.mubr.f32.gmra.mrb[0].mxu0 %v398
        %v3285 = vpop.f32.mrb[0].mxu0
        %v3286 = vadd.f32 0.0, %v3285
        %v3287 = vpop.f32.mrb[0].mxu0
        %3288 = vmatprep.mubr.f32.mxu0 0.0
        %3289 = vmatmul.mubr.f32.gmra.mrb[0].mxu0 %v401
        %v3290 = vpop.f32.mrb[0].mxu0
        %v3291 = vadd.f32 0.0, %v3290
        %v3292 = vpop.f32.mrb[0].mxu0
        %3293 = vmatprep.mubr.f32.mxu0 0.0
        %3294 = vmatmul.mubr.f32.gmra.mrb[0].mxu0 %v404
        %v3295 = vpop.f32.mrb[0].mxu0
        %v3296 = vadd.f32 0.0, %v3295
        %v3297 = vpop.f32.mrb[0].mxu0
        %3298 = vmatprep.mubr.f32.mxu0 0.0
        %3299 = vmatmul.mubr.f32.gmra.mrb[0].mxu0 %v407
        %v3300 = vpop.f32.mrb[0].mxu0
        %v3301 = vadd.f32 0.0, %v3300
        %v3302 = vpop.f32.mrb[0].mxu0
        %3303 = vmatprep.mubr.f32.mxu0 0.0
        %3304 = vmatmul.mubr.f32.gmra.mrb[0].mxu0 %v410
        %v3305 = vpop.f32.mrb[0].mxu0
        %v3306 = vadd.f32 0.0, %v3305
        %v3307 = vpop.f32.mrb[0].mxu0
        %3308 = vmatprep.mubr.f32.mxu0 0.0
        %3309 = vmatmul.mubr.f32.gmra.mrb[0].mxu0 %v413
        %v3310 = vpop.f32.mrb[0].mxu0
        %v3311 = vadd.f32 0.0, %v3310
        %v3312 = vpop.f32.mrb[0].mxu0
        %3313 = vmatprep.mubr.f32.mxu0 0.0
        %3314 = vmatmul.mubr.f32.gmra.mrb[0].mxu0 %v416
        %v3315 = vpop.f32.mrb[0].mxu0
        %v3316 = vadd.f32 0.0, %v3315
        %v3317 = vpop.f32.mrb[0].mxu0
        %3318 = vmatprep.mubr.f32.mxu0 0.0
        %3319 = vmatmul.mubr.f32.gmra.mrb[0].mxu0 %v419
        %v3320 = vpop.f32.mrb[0].mxu0
        %v3321 = vadd.f32 0.0, %v3320
        %v3322 = vpop.f32.mrb[0].mxu0
        %3323 = vmatprep.mubr.f32.mxu0 0.0
        %3324 = vmatmul.mubr.f32.gmra.mrb[0].mxu0 %v422
        %v3325 = vpop.f32.mrb[0].mxu0
        %v3326 = vadd.f32 0.0, %v3325
        %v3327 = vpop.f32.mrb[0].mxu0
        %3328 = vmatprep.mubr.f32.mxu0 0.0
        %3329 = vmatmul.mubr.f32.gmra.mrb[0].mxu0 %v425
        %v3330 = vpop.f32.mrb[0].mxu0
        %v3331 = vadd.f32 0.0, %v3330
        %v3332 = vpop.f32.mrb[0].mxu0
        %3333 = vmatprep.mubr.f32.mxu0 0.0
        %3334 = vmatmul.mubr.f32.gmra.mrb[0].mxu0 %v428
        %v3335 = vpop.f32.mrb[0].mxu0
        %v3336 = vadd.f32 0.0, %v3335
        %v3337 = vpop.f32.mrb[0].mxu0
        %3338 = vmatprep.mubr.f32.mxu0 0.0
        %3339 = vmatmul.mubr.f32.gmra.mrb[0].mxu0 %v431
        %v3340 = vpop.f32.mrb[0].mxu0
        %v3341 = vadd.f32 0.0, %v3340
        %v3342 = vpop.f32.mrb[0].mxu0
        %3343 = vmatprep.mubr.f32.mxu0 0.0
        %3344 = vmatmul.mubr.f32.gmra.mrb[0].mxu0 %v434
        %v3345 = vpop.f32.mrb[0].mxu0
        %v3346 = vadd.f32 0.0, %v3345
        %v3347 = vpop.f32.mrb[0].mxu0
        %3348 = vmatprep.mubr.f32.mxu0 0.0
        %3349 = vmatmul.mubr.f32.gmra.mrb[0].mxu0 %v437
        %v3350 = vpop.f32.mrb[0].mxu0
        %v3351 = vadd.f32 0.0, %v3350
        %v3352 = vpop.f32.mrb[0].mxu0
        %3353 = vmatprep.mubr.f32.mxu0 0.0
        %3354 = vmatmul.mubr.f32.gmra.mrb[0].mxu0 %v440
        %v3355 = vpop.f32.mrb[0].mxu0
        %v3356 = vadd.f32 0.0, %v3355
        %v3357 = vpop.f32.mrb[0].mxu0
        %3358 = vmatprep.mubr.f32.mxu0 0.0
        %3359 = vmatmul.mubr.f32.gmra.mrb[0].mxu0 %v443
        %v3360 = vpop.f32.mrb[0].mxu0
        %v3361 = vadd.f32 0.0, %v3360
        %v3362 = vpop.f32.mrb[0].mxu0
        %3363 = vmatprep.mubr.f32.mxu0 0.0
        %3364 = vmatmul.mubr.f32.gmra.mrb[0].mxu0 %v446
        %v3365 = vpop.f32.mrb[0].mxu0
        %v3366 = vadd.f32 0.0, %v3365
        %v3367 = vpop.f32.mrb[0].mxu0
        %3368 = vmatprep.mubr.f32.mxu0 0.0
        %3369 = vmatmul.mubr.f32.gmra.mrb[0].mxu0 %v449
        %v3370 = vpop.f32.mrb[0].mxu0
        %v3371 = vadd.f32 0.0, %v3370
        %v3372 = vpop.f32.mrb[0].mxu0
        %3373 = vmatprep.mubr.f32.mxu0 0.0
        %3374 = vmatmul.mubr.f32.gmra.mrb[0].mxu0 %v452
        %v3375 = vpop.f32.mrb[0].mxu0
        %v3376 = vadd.f32 0.0, %v3375
        %v3377 = vpop.f32.mrb[0].mxu0
        %3378 = vmatprep.mubr.f32.mxu0 0.0
        %3379 = vmatmul.mubr.f32.gmra.mrb[0].mxu0 %v455
        %v3380 = vpop.f32.mrb[0].mxu0
        %v3381 = vadd.f32 0.0, %v3380
        %v3382 = vpop.f32.mrb[0].mxu0
        %3383 = vmatprep.mubr.f32.mxu0 0.0
        %3384 = vmatmul.mubr.f32.gmra.mrb[0].mxu0 %v458
        %v3385 = vpop.f32.mrb[0].mxu0
        %v3386 = vadd.f32 0.0, %v3385
        %v3387 = vpop.f32.mrb[0].mxu0
        %3388 = vdwg.mxu0
        %s3389 = scalar_lea.vmem %s3, 64
        %v3390 = vld [vmem:[%s3389] sm:$0xff]
        %v3391 = vld [vmem:[%s3389 + $0x8] sm:$0xff]
        %v3392 = vld [vmem:[%s3389 + $0x10] sm:$0xff]
        %v3393 = vld [vmem:[%s3389 + $0x18] sm:$0xff]
        %v3395 = vsel %vm363, %v3390, 0
        %v3398 = vsel %vm363, %v3391, 0
        %v3401 = vsel %vm363, %v3392, 0
        %v3404 = vsel %vm363, %v3393, 0
        %3406 = vmatprep.subr.mxu0 %v709
        %3407 = vmatpush1.msra.mxu0 %v707
        %3408 = vmatprep.subr.mxu0 0.0
        %3409 = vmatpush1.msra.mxu0 0.0
        %3410 = vmatprep.subr.mxu0 0.0
        %3411 = vmatpush1.msra.mxu0 0.0
        %3412 = vmatprep.subr.mxu0 0.0
        %3413 = vmatpush1.msra.mxu0 0.0
        %3414 = vmatprep.subr.mxu0 0.0
        %3415 = vmatpush1.msra.mxu0 0.0
        %3416 = vmatprep.subr.mxu0 0.0
        %3417 = vmatpush1.msra.mxu0 0.0
        %3418 = vmatprep.subr.mxu0 0.0
        %3419 = vmatpush1.msra.mxu0 0.0
        %3420 = vmatprep.subr.mxu0 0.0
        %3421 = vmatpush1.msra.mxu0 0.0
        %3422 = vmatprep.subr.mxu0 0.0
        %3423 = vmatpush1.msra.mxu0 0.0
        %3424 = vmatprep.subr.mxu0 0.0
        %3425 = vmatpush1.msra.mxu0 0.0
        %3426 = vmatprep.subr.mxu0 0.0
        %3427 = vmatpush1.msra.mxu0 0.0
        %3428 = vmatprep.subr.mxu0 0.0
        %3429 = vmatpush1.msra.mxu0 0.0
        %3430 = vmatprep.subr.mxu0 0.0
        %3431 = vmatpush1.msra.mxu0 0.0
        %3432 = vmatprep.subr.mxu0 0.0
        %3433 = vmatpush1.msra.mxu0 0.0
        %3434 = vmatprep.subr.mxu0 0.0
        %3435 = vmatpush1.msra.mxu0 0.0
        %3436 = vmatprep.subr.mxu0 0.0
        %3437 = vmatpush1.msra.mxu0 0.0
        %3438 = vmatprep.subr.mxu0 0.0
        %3439 = vmatpush1.msra.mxu0 0.0
        %3440 = vmatprep.subr.mxu0 0.0
        %3441 = vmatpush1.msra.mxu0 0.0
        %3442 = vmatprep.subr.mxu0 0.0
        %3443 = vmatpush1.msra.mxu0 0.0
        %3444 = vmatprep.subr.mxu0 0.0
        %3445 = vmatpush1.msra.mxu0 0.0
        %3446 = vmatprep.subr.mxu0 0.0
        %3447 = vmatpush1.msra.mxu0 0.0
        %3448 = vmatprep.subr.mxu0 0.0
        %3449 = vmatpush1.msra.mxu0 0.0
        %3450 = vmatprep.subr.mxu0 0.0
        %3451 = vmatpush1.msra.mxu0 0.0
        %3452 = vmatprep.subr.mxu0 0.0
        %3453 = vmatpush1.msra.mxu0 0.0
        %3454 = vmatprep.subr.mxu0 0.0
        %3455 = vmatpush1.msra.mxu0 0.0
        %3456 = vmatprep.subr.mxu0 0.0
        %3457 = vmatpush1.msra.mxu0 0.0
        %3458 = vmatprep.subr.mxu0 0.0
        %3459 = vmatpush1.msra.mxu0 0.0
        %3460 = vmatprep.subr.mxu0 0.0
        %3461 = vmatpush1.msra.mxu0 0.0
        %3462 = vmatprep.subr.mxu0 0.0
        %3463 = vmatpush1.msra.mxu0 0.0
        %3464 = vmatprep.subr.mxu0 0.0
        %3465 = vmatpush1.msra.mxu0 0.0
        %3466 = vmatprep.subr.mxu0 0.0
        %3467 = vmatpush1.msra.mxu0 0.0
        %3468 = vmatprep.subr.mxu0 0.0
        %3469 = vmatpush1.msra.mxu0 0.0
        %3470 = vmatprep.mubr.f32.mxu0 0.0
        %3471 = vmatmul.mubr.f32.gmra.mrb[0].mxu0 %v3395
        %v3472 = vpop.f32.mrb[0].mxu0
        %v3473 = vadd.f32 0.0, %v3472
        %v3474 = vpop.f32.mrb[0].mxu0
        %v3475 = vadd.f32 0.0, %v3474
        %3476 = vmatprep.mubr.f32.mxu0 0.0
        %3477 = vmatmul.mubr.f32.gmra.mrb[0].mxu0 %v3398
        %v3478 = vpop.f32.mrb[0].mxu0
        %v3479 = vadd.f32 0.0, %v3478
        %v3480 = vpop.f32.mrb[0].mxu0
        %v3481 = vadd.f32 0.0, %v3480
        %3482 = vmatprep.mubr.f32.mxu0 0.0
        %3483 = vmatmul.mubr.f32.gmra.mrb[0].mxu0 %v3401
        %v3484 = vpop.f32.mrb[0].mxu0
        %v3485 = vadd.f32 0.0, %v3484
        %v3486 = vpop.f32.mrb[0].mxu0
        %v3487 = vadd.f32 0.0, %v3486
        %3488 = vmatprep.mubr.f32.mxu0 0.0
        %3489 = vmatmul.mubr.f32.gmra.mrb[0].mxu0 %v3404
        %v3490 = vpop.f32.mrb[0].mxu0
        %v3491 = vadd.f32 0.0, %v3490
        %v3492 = vpop.f32.mrb[0].mxu0
        %v3493 = vadd.f32 0.0, %v3492
        %3494 = vdwg.mxu0
        %s3495 = scalar_lea.vmem %s4, 64
        %v3496 = vld [vmem:[%s3495] sm:$0xff]
        %v3497 = vld [vmem:[%s3495 + $0x8] sm:$0xff]
        %v3498 = vld [vmem:[%s3495 + $0x10] sm:$0xff]
        %v3499 = vld [vmem:[%s3495 + $0x18] sm:$0xff]
        %v3501 = vsel %vm363, %v3496, 0
        %v3504 = vsel %vm363, %v3497, 0
        %v3507 = vsel %vm363, %v3498, 0
        %v3510 = vsel %vm363, %v3499, 0
        %3512 = vmatprep.subr.mxu0 %v709
        %3513 = vmatpush1.msra.mxu0 %v707
        %3514 = vmatprep.subr.mxu0 0.0
        %3515 = vmatpush1.msra.mxu0 0.0
        %3516 = vmatprep.subr.mxu0 0.0
        %3517 = vmatpush1.msra.mxu0 0.0
        %3518 = vmatprep.subr.mxu0 0.0
        %3519 = vmatpush1.msra.mxu0 0.0
        %3520 = vmatprep.subr.mxu0 0.0
        %3521 = vmatpush1.msra.mxu0 0.0
        %3522 = vmatprep.subr.mxu0 0.0
        %3523 = vmatpush1.msra.mxu0 0.0
        %3524 = vmatprep.subr.mxu0 0.0
        %3525 = vmatpush1.msra.mxu0 0.0
        %3526 = vmatprep.subr.mxu0 0.0
        %3527 = vmatpush1.msra.mxu0 0.0
        %3528 = vmatprep.subr.mxu0 0.0
        %3529 = vmatpush1.msra.mxu0 0.0
        %3530 = vmatprep.subr.mxu0 0.0
        %3531 = vmatpush1.msra.mxu0 0.0
        %3532 = vmatprep.subr.mxu0 0.0
        %3533 = vmatpush1.msra.mxu0 0.0
        %3534 = vmatprep.subr.mxu0 0.0
        %3535 = vmatpush1.msra.mxu0 0.0
        %3536 = vmatprep.subr.mxu0 0.0
        %3537 = vmatpush1.msra.mxu0 0.0
        %3538 = vmatprep.subr.mxu0 0.0
        %3539 = vmatpush1.msra.mxu0 0.0
        %3540 = vmatprep.subr.mxu0 0.0
        %3541 = vmatpush1.msra.mxu0 0.0
        %3542 = vmatprep.subr.mxu0 0.0
        %3543 = vmatpush1.msra.mxu0 0.0
        %3544 = vmatprep.subr.mxu0 0.0
        %3545 = vmatpush1.msra.mxu0 0.0
        %3546 = vmatprep.subr.mxu0 0.0
        %3547 = vmatpush1.msra.mxu0 0.0
        %3548 = vmatprep.subr.mxu0 0.0
        %3549 = vmatpush1.msra.mxu0 0.0
        %3550 = vmatprep.subr.mxu0 0.0
        %3551 = vmatpush1.msra.mxu0 0.0
        %3552 = vmatprep.subr.mxu0 0.0
        %3553 = vmatpush1.msra.mxu0 0.0
        %3554 = vmatprep.subr.mxu0 0.0
        %3555 = vmatpush1.msra.mxu0 0.0
        %3556 = vmatprep.subr.mxu0 0.0
        %3557 = vmatpush1.msra.mxu0 0.0
        %3558 = vmatprep.subr.mxu0 0.0
        %3559 = vmatpush1.msra.mxu0 0.0
        %3560 = vmatprep.subr.mxu0 0.0
        %3561 = vmatpush1.msra.mxu0 0.0
        %3562 = vmatprep.subr.mxu0 0.0
        %3563 = vmatpush1.msra.mxu0 0.0
        %3564 = vmatprep.subr.mxu0 0.0
        %3565 = vmatpush1.msra.mxu0 0.0
        %3566 = vmatprep.subr.mxu0 0.0
        %3567 = vmatpush1.msra.mxu0 0.0
        %3568 = vmatprep.subr.mxu0 0.0
        %3569 = vmatpush1.msra.mxu0 0.0
        %3570 = vmatprep.subr.mxu0 0.0
        %3571 = vmatpush1.msra.mxu0 0.0
        %3572 = vmatprep.subr.mxu0 0.0
        %3573 = vmatpush1.msra.mxu0 0.0
        %3574 = vmatprep.subr.mxu0 0.0
        %3575 = vmatpush1.msra.mxu0 0.0
        %3576 = vmatprep.mubr.f32.mxu0 0.0
        %3577 = vmatmul.mubr.f32.gmra.mrb[0].mxu0 %v3501
        %v3578 = vpop.f32.mrb[0].mxu0
        %v3579 = vadd.f32 0.0, %v3578
        %v3580 = vpop.f32.mrb[0].mxu0
        %v3581 = vadd.f32 0.0, %v3580
        %3582 = vmatprep.mubr.f32.mxu0 0.0
        %3583 = vmatmul.mubr.f32.gmra.mrb[0].mxu0 %v3504
        %v3584 = vpop.f32.mrb[0].mxu0
        %v3585 = vadd.f32 0.0, %v3584
        %v3586 = vpop.f32.mrb[0].mxu0
        %v3587 = vadd.f32 0.0, %v3586
        %3588 = vmatprep.mubr.f32.mxu0 0.0
        %3589 = vmatmul.mubr.f32.gmra.mrb[0].mxu0 %v3507
        %v3590 = vpop.f32.mrb[0].mxu0
        %v3591 = vadd.f32 0.0, %v3590
        %v3592 = vpop.f32.mrb[0].mxu0
        %v3593 = vadd.f32 0.0, %v3592
        %3594 = vmatprep.mubr.f32.mxu0 0.0
        %3595 = vmatmul.mubr.f32.gmra.mrb[0].mxu0 %v3510
        %v3596 = vpop.f32.mrb[0].mxu0
        %v3597 = vadd.f32 0.0, %v3596
        %v3598 = vpop.f32.mrb[0].mxu0
        %v3599 = vadd.f32 0.0, %v3598
        %3600 = vdwg.mxu0
        %v3601 = vpack.c.bf16 %v3236, %v3231
        %v3602 = vpack.c.bf16 %v3246, %v3241
        %v3603 = vpack.c.bf16 %v3256, %v3251
        %v3604 = vpack.c.bf16 %v3266, %v3261
        %v3605 = vpack.c.bf16 %v3276, %v3271
        %v3606 = vpack.c.bf16 %v3286, %v3281
        %v3607 = vpack.c.bf16 %v3296, %v3291
        %v3608 = vpack.c.bf16 %v3306, %v3301
        %v3609 = vpack.c.bf16 %v3316, %v3311
        %v3610 = vpack.c.bf16 %v3326, %v3321
        %v3611 = vpack.c.bf16 %v3336, %v3331
        %v3612 = vpack.c.bf16 %v3346, %v3341
        %v3613 = vpack.c.bf16 %v3356, %v3351
        %v3614 = vpack.c.bf16 %v3366, %v3361
        %v3615 = vpack.c.bf16 %v3376, %v3371
        %v3616 = vpack.c.bf16 %v3386, %v3381
        %v3617 = vpack.c.bf16 %v3479, %v3473
        %v3618 = vpack.c.bf16 %v3481, %v3475
        %v3619 = vpack.c.bf16 %v3491, %v3485
        %v3620 = vpack.c.bf16 %v3493, %v3487
        %v3621 = vpack.c.bf16 %v3585, %v3579
        %v3622 = vpack.c.bf16 %v3587, %v3581
        %v3623 = vpack.c.bf16 %v3597, %v3591
        %v3624 = vpack.c.bf16 %v3599, %v3593
        %v3626 = vsel %vm929, %v3601, 0
        %v3629 = vsel %vm929, %v3602, 0
        %v3632 = vsel %vm929, %v3603, 0
        %v3635 = vsel %vm929, %v3604, 0
        %v3638 = vsel %vm929, %v3605, 0
        %v3641 = vsel %vm929, %v3606, 0
        %v3644 = vsel %vm929, %v3607, 0
        %v3647 = vsel %vm929, %v3608, 0
        %v3650 = vsel %vm929, %v3609, 0
        %v3653 = vsel %vm929, %v3610, 0
        %v3656 = vsel %vm929, %v3611, 0
        %v3659 = vsel %vm929, %v3612, 0
        %v3662 = vsel %vm929, %v3613, 0
        %v3665 = vsel %vm929, %v3614, 0
        %v3668 = vsel %vm929, %v3615, 0
        %v3671 = vsel %vm929, %v3616, 0
        %3673 = vmatprep.subr.bf16.mxu0 %v3618
        %3674 = vmatpush1.bf16.msra.mxu0 %v3617
        %3675 = vmatprep.subr.bf16.mxu0 %v3620
        %3676 = vmatpush1.bf16.msra.mxu0 %v3619
        %3677 = vmatprep.subr.bf16.mxu0 0
        %3678 = vmatpush1.bf16.msra.mxu0 0
        %3679 = vmatprep.subr.bf16.mxu0 0
        %3680 = vmatpush1.bf16.msra.mxu0 0
        %3681 = vmatprep.subr.bf16.mxu0 0
        %3682 = vmatpush1.bf16.msra.mxu0 0
        %3683 = vmatprep.subr.bf16.mxu0 0
        %3684 = vmatpush1.bf16.msra.mxu0 0
        %3685 = vmatprep.subr.bf16.mxu0 0
        %3686 = vmatpush1.bf16.msra.mxu0 0
        %3687 = vmatprep.subr.bf16.mxu0 0
        %3688 = vmatpush1.bf16.msra.mxu0 0
        %3689 = vmatprep.subr.bf16.mxu0 0
        %3690 = vmatpush1.bf16.msra.mxu0 0
        %3691 = vmatprep.subr.bf16.mxu0 0
        %3692 = vmatpush1.bf16.msra.mxu0 0
        %3693 = vmatprep.subr.bf16.mxu0 0
        %3694 = vmatpush1.bf16.msra.mxu0 0
        %3695 = vmatprep.subr.bf16.mxu0 0
        %3696 = vmatpush1.bf16.msra.mxu0 0
        %3697 = vmatprep.subr.bf16.mxu0 0
        %3698 = vmatpush1.bf16.msra.mxu0 0
        %3699 = vmatprep.subr.bf16.mxu0 0
        %3700 = vmatpush1.bf16.msra.mxu0 0
        %3701 = vmatprep.subr.bf16.mxu0 0
        %3702 = vmatpush1.bf16.msra.mxu0 0
        %3703 = vmatprep.subr.bf16.mxu0 0
        %3704 = vmatpush1.bf16.msra.mxu0 0
        %3705 = vmatprep.mubr.bf16.mxu0 0
        %3706 = vmatmul.mubr.bf16.gmra.mrb[0].mxu0 %v3626
        %v3707 = vpop.f32.mrb[0].mxu0
        %v3708 = vadd.f32 0.0, %v3707
        %v3709 = vpop.f32.mrb[0].mxu0
        %v3710 = vadd.f32 0.0, %v3709
        %v3711 = vpop.f32.mrb[0].mxu0
        %v3712 = vadd.f32 0.0, %v3711
        %v3713 = vpop.f32.mrb[0].mxu0
        %v3714 = vadd.f32 0.0, %v3713
        %3715 = vmatprep.mubr.bf16.mxu0 0
        %3716 = vmatmul.mubr.bf16.gmra.mrb[0].mxu0 %v3629
        %v3717 = vpop.f32.mrb[0].mxu0
        %v3718 = vadd.f32 0.0, %v3717
        %v3719 = vpop.f32.mrb[0].mxu0
        %v3720 = vadd.f32 0.0, %v3719
        %v3721 = vpop.f32.mrb[0].mxu0
        %v3722 = vadd.f32 0.0, %v3721
        %v3723 = vpop.f32.mrb[0].mxu0
        %v3724 = vadd.f32 0.0, %v3723
        %3725 = vmatprep.mubr.bf16.mxu0 0
        %3726 = vmatmul.mubr.bf16.gmra.mrb[0].mxu0 %v3632
        %v3727 = vpop.f32.mrb[0].mxu0
        %v3728 = vadd.f32 0.0, %v3727
        %v3729 = vpop.f32.mrb[0].mxu0
        %v3730 = vadd.f32 0.0, %v3729
        %v3731 = vpop.f32.mrb[0].mxu0
        %v3732 = vadd.f32 0.0, %v3731
        %v3733 = vpop.f32.mrb[0].mxu0
        %v3734 = vadd.f32 0.0, %v3733
        %3735 = vmatprep.mubr.bf16.mxu0 0
        %3736 = vmatmul.mubr.bf16.gmra.mrb[0].mxu0 %v3635
        %v3737 = vpop.f32.mrb[0].mxu0
        %v3738 = vadd.f32 0.0, %v3737
        %v3739 = vpop.f32.mrb[0].mxu0
        %v3740 = vadd.f32 0.0, %v3739
        %v3741 = vpop.f32.mrb[0].mxu0
        %v3742 = vadd.f32 0.0, %v3741
        %v3743 = vpop.f32.mrb[0].mxu0
        %v3744 = vadd.f32 0.0, %v3743
        %3745 = vmatprep.mubr.bf16.mxu0 0
        %3746 = vmatmul.mubr.bf16.gmra.mrb[0].mxu0 %v3638
        %v3747 = vpop.f32.mrb[0].mxu0
        %v3748 = vadd.f32 0.0, %v3747
        %v3749 = vpop.f32.mrb[0].mxu0
        %v3750 = vadd.f32 0.0, %v3749
        %v3751 = vpop.f32.mrb[0].mxu0
        %v3752 = vadd.f32 0.0, %v3751
        %v3753 = vpop.f32.mrb[0].mxu0
        %v3754 = vadd.f32 0.0, %v3753
        %3755 = vmatprep.mubr.bf16.mxu0 0
        %3756 = vmatmul.mubr.bf16.gmra.mrb[0].mxu0 %v3641
        %v3757 = vpop.f32.mrb[0].mxu0
        %v3758 = vadd.f32 0.0, %v3757
        %v3759 = vpop.f32.mrb[0].mxu0
        %v3760 = vadd.f32 0.0, %v3759
        %v3761 = vpop.f32.mrb[0].mxu0
        %v3762 = vadd.f32 0.0, %v3761
        %v3763 = vpop.f32.mrb[0].mxu0
        %v3764 = vadd.f32 0.0, %v3763
        %3765 = vmatprep.mubr.bf16.mxu0 0
        %3766 = vmatmul.mubr.bf16.gmra.mrb[0].mxu0 %v3644
        %v3767 = vpop.f32.mrb[0].mxu0
        %v3768 = vadd.f32 0.0, %v3767
        %v3769 = vpop.f32.mrb[0].mxu0
        %v3770 = vadd.f32 0.0, %v3769
        %v3771 = vpop.f32.mrb[0].mxu0
        %v3772 = vadd.f32 0.0, %v3771
        %v3773 = vpop.f32.mrb[0].mxu0
        %v3774 = vadd.f32 0.0, %v3773
        %3775 = vmatprep.mubr.bf16.mxu0 0
        %3776 = vmatmul.mubr.bf16.gmra.mrb[0].mxu0 %v3647
        %v3777 = vpop.f32.mrb[0].mxu0
        %v3778 = vadd.f32 0.0, %v3777
        %v3779 = vpop.f32.mrb[0].mxu0
        %v3780 = vadd.f32 0.0, %v3779
        %v3781 = vpop.f32.mrb[0].mxu0
        %v3782 = vadd.f32 0.0, %v3781
        %v3783 = vpop.f32.mrb[0].mxu0
        %v3784 = vadd.f32 0.0, %v3783
        %3785 = vmatprep.mubr.bf16.mxu0 0
        %3786 = vmatmul.mubr.bf16.gmra.mrb[0].mxu0 %v3650
        %v3787 = vpop.f32.mrb[0].mxu0
        %v3788 = vadd.f32 0.0, %v3787
        %v3789 = vpop.f32.mrb[0].mxu0
        %v3790 = vadd.f32 0.0, %v3789
        %v3791 = vpop.f32.mrb[0].mxu0
        %v3792 = vadd.f32 0.0, %v3791
        %v3793 = vpop.f32.mrb[0].mxu0
        %v3794 = vadd.f32 0.0, %v3793
        %3795 = vmatprep.mubr.bf16.mxu0 0
        %3796 = vmatmul.mubr.bf16.gmra.mrb[0].mxu0 %v3653
        %v3797 = vpop.f32.mrb[0].mxu0
        %v3798 = vadd.f32 0.0, %v3797
        %v3799 = vpop.f32.mrb[0].mxu0
        %v3800 = vadd.f32 0.0, %v3799
        %v3801 = vpop.f32.mrb[0].mxu0
        %v3802 = vadd.f32 0.0, %v3801
        %v3803 = vpop.f32.mrb[0].mxu0
        %v3804 = vadd.f32 0.0, %v3803
        %3805 = vmatprep.mubr.bf16.mxu0 0
        %3806 = vmatmul.mubr.bf16.gmra.mrb[0].mxu0 %v3656
        %v3807 = vpop.f32.mrb[0].mxu0
        %v3808 = vadd.f32 0.0, %v3807
        %v3809 = vpop.f32.mrb[0].mxu0
        %v3810 = vadd.f32 0.0, %v3809
        %v3811 = vpop.f32.mrb[0].mxu0
        %v3812 = vadd.f32 0.0, %v3811
        %v3813 = vpop.f32.mrb[0].mxu0
        %v3814 = vadd.f32 0.0, %v3813
        %3815 = vmatprep.mubr.bf16.mxu0 0
        %3816 = vmatmul.mubr.bf16.gmra.mrb[0].mxu0 %v3659
        %v3817 = vpop.f32.mrb[0].mxu0
        %v3818 = vadd.f32 0.0, %v3817
        %v3819 = vpop.f32.mrb[0].mxu0
        %v3820 = vadd.f32 0.0, %v3819
        %v3821 = vpop.f32.mrb[0].mxu0
        %v3822 = vadd.f32 0.0, %v3821
        %v3823 = vpop.f32.mrb[0].mxu0
        %v3824 = vadd.f32 0.0, %v3823
        %3825 = vmatprep.mubr.bf16.mxu0 0
        %3826 = vmatmul.mubr.bf16.gmra.mrb[0].mxu0 %v3662
        %v3827 = vpop.f32.mrb[0].mxu0
        %v3828 = vadd.f32 0.0, %v3827
        %v3829 = vpop.f32.mrb[0].mxu0
        %v3830 = vadd.f32 0.0, %v3829
        %v3831 = vpop.f32.mrb[0].mxu0
        %v3832 = vadd.f32 0.0, %v3831
        %v3833 = vpop.f32.mrb[0].mxu0
        %v3834 = vadd.f32 0.0, %v3833
        %3835 = vmatprep.mubr.bf16.mxu0 0
        %3836 = vmatmul.mubr.bf16.gmra.mrb[0].mxu0 %v3665
        %v3837 = vpop.f32.mrb[0].mxu0
        %v3838 = vadd.f32 0.0, %v3837
        %v3839 = vpop.f32.mrb[0].mxu0
        %v3840 = vadd.f32 0.0, %v3839
        %v3841 = vpop.f32.mrb[0].mxu0
        %v3842 = vadd.f32 0.0, %v3841
        %v3843 = vpop.f32.mrb[0].mxu0
        %v3844 = vadd.f32 0.0, %v3843
        %3845 = vmatprep.mubr.bf16.mxu0 0
        %3846 = vmatmul.mubr.bf16.gmra.mrb[0].mxu0 %v3668
        %v3847 = vpop.f32.mrb[0].mxu0
        %v3848 = vadd.f32 0.0, %v3847
        %v3849 = vpop.f32.mrb[0].mxu0
        %v3850 = vadd.f32 0.0, %v3849
        %v3851 = vpop.f32.mrb[0].mxu0
        %v3852 = vadd.f32 0.0, %v3851
        %v3853 = vpop.f32.mrb[0].mxu0
        %v3854 = vadd.f32 0.0, %v3853
        %3855 = vmatprep.mubr.bf16.mxu0 0
        %3856 = vmatmul.mubr.bf16.gmra.mrb[0].mxu0 %v3671
        %v3857 = vpop.f32.mrb[0].mxu0
        %v3858 = vadd.f32 0.0, %v3857
        %v3859 = vpop.f32.mrb[0].mxu0
        %v3860 = vadd.f32 0.0, %v3859
        %v3861 = vpop.f32.mrb[0].mxu0
        %v3862 = vadd.f32 0.0, %v3861
        %v3863 = vpop.f32.mrb[0].mxu0
        %v3864 = vadd.f32 0.0, %v3863
        %3865 = vdwg.mxu0
        %v3866 = vmax.f32 %v3708, %v3710
        %3867 = vmax.xlane.f32.xlu0 %v3866
        %v3868 = vpop.xlane.xlu0 %3867
        %v3869 = vmax.f32 %v3712, %v3714
        %3870 = vmax.xlane.f32.xlu0 %v3869
        %v3871 = vpop.xlane.xlu0 %3870
        %v3872 = vmax.f32 %v3718, %v3720
        %3873 = vmax.xlane.f32.xlu0 %v3872
        %v3874 = vpop.xlane.xlu0 %3873
        %v3875 = vmax.f32 %v3722, %v3724
        %3876 = vmax.xlane.f32.xlu0 %v3875
        %v3877 = vpop.xlane.xlu0 %3876
        %v3878 = vmax.f32 %v3728, %v3730
        %3879 = vmax.xlane.f32.xlu0 %v3878
        %v3880 = vpop.xlane.xlu0 %3879
        %v3881 = vmax.f32 %v3732, %v3734
        %3882 = vmax.xlane.f32.xlu0 %v3881
        %v3883 = vpop.xlane.xlu0 %3882
        %v3884 = vmax.f32 %v3738, %v3740
        %3885 = vmax.xlane.f32.xlu0 %v3884
        %v3886 = vpop.xlane.xlu0 %3885
        %v3887 = vmax.f32 %v3742, %v3744
        %3888 = vmax.xlane.f32.xlu0 %v3887
        %v3889 = vpop.xlane.xlu0 %3888
        %v3890 = vmax.f32 %v3748, %v3750
        %3891 = vmax.xlane.f32.xlu0 %v3890
        %v3892 = vpop.xlane.xlu0 %3891
        %v3893 = vmax.f32 %v3752, %v3754
        %3894 = vmax.xlane.f32.xlu0 %v3893
        %v3895 = vpop.xlane.xlu0 %3894
        %v3896 = vmax.f32 %v3758, %v3760
        %3897 = vmax.xlane.f32.xlu0 %v3896
        %v3898 = vpop.xlane.xlu0 %3897
        %v3899 = vmax.f32 %v3762, %v3764
        %3900 = vmax.xlane.f32.xlu0 %v3899
        %v3901 = vpop.xlane.xlu0 %3900
        %v3902 = vmax.f32 %v3768, %v3770
        %3903 = vmax.xlane.f32.xlu0 %v3902
        %v3904 = vpop.xlane.xlu0 %3903
        %v3905 = vmax.f32 %v3772, %v3774
        %3906 = vmax.xlane.f32.xlu0 %v3905
        %v3907 = vpop.xlane.xlu0 %3906
        %v3908 = vmax.f32 %v3778, %v3780
        %3909 = vmax.xlane.f32.xlu0 %v3908
        %v3910 = vpop.xlane.xlu0 %3909
        %v3911 = vmax.f32 %v3782, %v3784
        %3912 = vmax.xlane.f32.xlu0 %v3911
        %v3913 = vpop.xlane.xlu0 %3912
        %v3914 = vmax.f32 %v3788, %v3790
        %3915 = vmax.xlane.f32.xlu0 %v3914
        %v3916 = vpop.xlane.xlu0 %3915
        %v3917 = vmax.f32 %v3792, %v3794
        %3918 = vmax.xlane.f32.xlu0 %v3917
        %v3919 = vpop.xlane.xlu0 %3918
        %v3920 = vmax.f32 %v3798, %v3800
        %3921 = vmax.xlane.f32.xlu0 %v3920
        %v3922 = vpop.xlane.xlu0 %3921
        %v3923 = vmax.f32 %v3802, %v3804
        %3924 = vmax.xlane.f32.xlu0 %v3923
        %v3925 = vpop.xlane.xlu0 %3924
        %v3926 = vmax.f32 %v3808, %v3810
        %3927 = vmax.xlane.f32.xlu0 %v3926
        %v3928 = vpop.xlane.xlu0 %3927
        %v3929 = vmax.f32 %v3812, %v3814
        %3930 = vmax.xlane.f32.xlu0 %v3929
        %v3931 = vpop.xlane.xlu0 %3930
        %v3932 = vmax.f32 %v3818, %v3820
        %3933 = vmax.xlane.f32.xlu0 %v3932
        %v3934 = vpop.xlane.xlu0 %3933
        %v3935 = vmax.f32 %v3822, %v3824
        %3936 = vmax.xlane.f32.xlu0 %v3935
        %v3937 = vpop.xlane.xlu0 %3936
        %v3938 = vmax.f32 %v3828, %v3830
        %3939 = vmax.xlane.f32.xlu0 %v3938
        %v3940 = vpop.xlane.xlu0 %3939
        %v3941 = vmax.f32 %v3832, %v3834
        %3942 = vmax.xlane.f32.xlu0 %v3941
        %v3943 = vpop.xlane.xlu0 %3942
        %v3944 = vmax.f32 %v3838, %v3840
        %3945 = vmax.xlane.f32.xlu0 %v3944
        %v3946 = vpop.xlane.xlu0 %3945
        %v3947 = vmax.f32 %v3842, %v3844
        %3948 = vmax.xlane.f32.xlu0 %v3947
        %v3949 = vpop.xlane.xlu0 %3948
        %v3950 = vmax.f32 %v3848, %v3850
        %3951 = vmax.xlane.f32.xlu0 %v3950
        %v3952 = vpop.xlane.xlu0 %3951
        %v3953 = vmax.f32 %v3852, %v3854
        %3954 = vmax.xlane.f32.xlu0 %v3953
        %v3955 = vpop.xlane.xlu0 %3954
        %v3956 = vmax.f32 %v3858, %v3860
        %3957 = vmax.xlane.f32.xlu0 %v3956
        %v3958 = vpop.xlane.xlu0 %3957
        %v3959 = vmax.f32 %v3862, %v3864
        %3960 = vmax.xlane.f32.xlu0 %v3959
        %v3961 = vpop.xlane.xlu0 %3960
        %v3962 = vsub.f32 %v3708, %v3868
        %v3963 = vsub.f32 %v3710, %v3868
        %v3964 = vsub.f32 %v3712, %v3871
        %v3965 = vsub.f32 %v3714, %v3871
        %v3966 = vsub.f32 %v3718, %v3874
        %v3967 = vsub.f32 %v3720, %v3874
        %v3968 = vsub.f32 %v3722, %v3877
        %v3969 = vsub.f32 %v3724, %v3877
        %v3970 = vsub.f32 %v3728, %v3880
        %v3971 = vsub.f32 %v3730, %v3880
        %v3972 = vsub.f32 %v3732, %v3883
        %v3973 = vsub.f32 %v3734, %v3883
        %v3974 = vsub.f32 %v3738, %v3886
        %v3975 = vsub.f32 %v3740, %v3886
        %v3976 = vsub.f32 %v3742, %v3889
        %v3977 = vsub.f32 %v3744, %v3889
        %v3978 = vsub.f32 %v3748, %v3892
        %v3979 = vsub.f32 %v3750, %v3892
        %v3980 = vsub.f32 %v3752, %v3895
        %v3981 = vsub.f32 %v3754, %v3895
        %v3982 = vsub.f32 %v3758, %v3898
        %v3983 = vsub.f32 %v3760, %v3898
        %v3984 = vsub.f32 %v3762, %v3901
        %v3985 = vsub.f32 %v3764, %v3901
        %v3986 = vsub.f32 %v3768, %v3904
        %v3987 = vsub.f32 %v3770, %v3904
        %v3988 = vsub.f32 %v3772, %v3907
        %v3989 = vsub.f32 %v3774, %v3907
        %v3990 = vsub.f32 %v3778, %v3910
        %v3991 = vsub.f32 %v3780, %v3910
        %v3992 = vsub.f32 %v3782, %v3913
        %v3993 = vsub.f32 %v3784, %v3913
        %v3994 = vsub.f32 %v3788, %v3916
        %v3995 = vsub.f32 %v3790, %v3916
        %v3996 = vsub.f32 %v3792, %v3919
        %v3997 = vsub.f32 %v3794, %v3919
        %v3998 = vsub.f32 %v3798, %v3922
        %v3999 = vsub.f32 %v3800, %v3922
        %v4000 = vsub.f32 %v3802, %v3925
        %v4001 = vsub.f32 %v3804, %v3925
        %v4002 = vsub.f32 %v3808, %v3928
        %v4003 = vsub.f32 %v3810, %v3928
        %v4004 = vsub.f32 %v3812, %v3931
        %v4005 = vsub.f32 %v3814, %v3931
        %v4006 = vsub.f32 %v3818, %v3934
        %v4007 = vsub.f32 %v3820, %v3934
        %v4008 = vsub.f32 %v3822, %v3937
        %v4009 = vsub.f32 %v3824, %v3937
        %v4010 = vsub.f32 %v3828, %v3940
        %v4011 = vsub.f32 %v3830, %v3940
        %v4012 = vsub.f32 %v3832, %v3943
        %v4013 = vsub.f32 %v3834, %v3943
        %v4014 = vsub.f32 %v3838, %v3946
        %v4015 = vsub.f32 %v3840, %v3946
        %v4016 = vsub.f32 %v3842, %v3949
        %v4017 = vsub.f32 %v3844, %v3949
        %v4018 = vsub.f32 %v3848, %v3952
        %v4019 = vsub.f32 %v3850, %v3952
        %v4020 = vsub.f32 %v3852, %v3955
        %v4021 = vsub.f32 %v3854, %v3955
        %v4022 = vsub.f32 %v3858, %v3958
        %v4023 = vsub.f32 %v3860, %v3958
        %v4024 = vsub.f32 %v3862, %v3961
        %v4025 = vsub.f32 %v3864, %v3961
        %v4026 = vmul.f32 %v3962, 1.442695
        %v4027 = vpow.pop %v4026
        %v4028 = vmul.f32 %v3963, 1.442695
        %v4029 = vpow.pop %v4028
        %v4030 = vmul.f32 %v3964, 1.442695
        %v4031 = vpow.pop %v4030
        %v4032 = vmul.f32 %v3965, 1.442695
        %v4033 = vpow.pop %v4032
        %v4034 = vmul.f32 %v3966, 1.442695
        %v4035 = vpow.pop %v4034
        %v4036 = vmul.f32 %v3967, 1.442695
        %v4037 = vpow.pop %v4036
        %v4038 = vmul.f32 %v3968, 1.442695
        %v4039 = vpow.pop %v4038
        %v4040 = vmul.f32 %v3969, 1.442695
        %v4041 = vpow.pop %v4040
        %v4042 = vmul.f32 %v3970, 1.442695
        %v4043 = vpow.pop %v4042
        %v4044 = vmul.f32 %v3971, 1.442695
        %v4045 = vpow.pop %v4044
        %v4046 = vmul.f32 %v3972, 1.442695
        %v4047 = vpow.pop %v4046
        %v4048 = vmul.f32 %v3973, 1.442695
        %v4049 = vpow.pop %v4048
        %v4050 = vmul.f32 %v3974, 1.442695
        %v4051 = vpow.pop %v4050
        %v4052 = vmul.f32 %v3975, 1.442695
        %v4053 = vpow.pop %v4052
        %v4054 = vmul.f32 %v3976, 1.442695
        %v4055 = vpow.pop %v4054
        %v4056 = vmul.f32 %v3977, 1.442695
        %v4057 = vpow.pop %v4056
        %v4058 = vmul.f32 %v3978, 1.442695
        %v4059 = vpow.pop %v4058
        %v4060 = vmul.f32 %v3979, 1.442695
        %v4061 = vpow.pop %v4060
        %v4062 = vmul.f32 %v3980, 1.442695
        %v4063 = vpow.pop %v4062
        %v4064 = vmul.f32 %v3981, 1.442695
        %v4065 = vpow.pop %v4064
        %v4066 = vmul.f32 %v3982, 1.442695
        %v4067 = vpow.pop %v4066
        %v4068 = vmul.f32 %v3983, 1.442695
        %v4069 = vpow.pop %v4068
        %v4070 = vmul.f32 %v3984, 1.442695
        %v4071 = vpow.pop %v4070
        %v4072 = vmul.f32 %v3985, 1.442695
        %v4073 = vpow.pop %v4072
        %v4074 = vmul.f32 %v3986, 1.442695
        %v4075 = vpow.pop %v4074
        %v4076 = vmul.f32 %v3987, 1.442695
        %v4077 = vpow.pop %v4076
        %v4078 = vmul.f32 %v3988, 1.442695
        %v4079 = vpow.pop %v4078
        %v4080 = vmul.f32 %v3989, 1.442695
        %v4081 = vpow.pop %v4080
        %v4082 = vmul.f32 %v3990, 1.442695
        %v4083 = vpow.pop %v4082
        %v4084 = vmul.f32 %v3991, 1.442695
        %v4085 = vpow.pop %v4084
        %v4086 = vmul.f32 %v3992, 1.442695
        %v4087 = vpow.pop %v4086
        %v4088 = vmul.f32 %v3993, 1.442695
        %v4089 = vpow.pop %v4088
        %v4090 = vmul.f32 %v3994, 1.442695
        %v4091 = vpow.pop %v4090
        %v4092 = vmul.f32 %v3995, 1.442695
        %v4093 = vpow.pop %v4092
        %v4094 = vmul.f32 %v3996, 1.442695
        %v4095 = vpow.pop %v4094
        %v4096 = vmul.f32 %v3997, 1.442695
        %v4097 = vpow.pop %v4096
        %v4098 = vmul.f32 %v3998, 1.442695
        %v4099 = vpow.pop %v4098
        %v4100 = vmul.f32 %v3999, 1.442695
        %v4101 = vpow.pop %v4100
        %v4102 = vmul.f32 %v4000, 1.442695
        %v4103 = vpow.pop %v4102
        %v4104 = vmul.f32 %v4001, 1.442695
        %v4105 = vpow.pop %v4104
        %v4106 = vmul.f32 %v4002, 1.442695
        %v4107 = vpow.pop %v4106
        %v4108 = vmul.f32 %v4003, 1.442695
        %v4109 = vpow.pop %v4108
        %v4110 = vmul.f32 %v4004, 1.442695
        %v4111 = vpow.pop %v4110
        %v4112 = vmul.f32 %v4005, 1.442695
        %v4113 = vpow.pop %v4112
        %v4114 = vmul.f32 %v4006, 1.442695
        %v4115 = vpow.pop %v4114
        %v4116 = vmul.f32 %v4007, 1.442695
        %v4117 = vpow.pop %v4116
        %v4118 = vmul.f32 %v4008, 1.442695
        %v4119 = vpow.pop %v4118
        %v4120 = vmul.f32 %v4009, 1.442695
        %v4121 = vpow.pop %v4120
        %v4122 = vmul.f32 %v4010, 1.442695
        %v4123 = vpow.pop %v4122
        %v4124 = vmul.f32 %v4011, 1.442695
        %v4125 = vpow.pop %v4124
        %v4126 = vmul.f32 %v4012, 1.442695
        %v4127 = vpow.pop %v4126
        %v4128 = vmul.f32 %v4013, 1.442695
        %v4129 = vpow.pop %v4128
        %v4130 = vmul.f32 %v4014, 1.442695
        %v4131 = vpow.pop %v4130
        %v4132 = vmul.f32 %v4015, 1.442695
        %v4133 = vpow.pop %v4132
        %v4134 = vmul.f32 %v4016, 1.442695
        %v4135 = vpow.pop %v4134
        %v4136 = vmul.f32 %v4017, 1.442695
        %v4137 = vpow.pop %v4136
        %v4138 = vmul.f32 %v4018, 1.442695
        %v4139 = vpow.pop %v4138
        %v4140 = vmul.f32 %v4019, 1.442695
        %v4141 = vpow.pop %v4140
        %v4142 = vmul.f32 %v4020, 1.442695
        %v4143 = vpow.pop %v4142
        %v4144 = vmul.f32 %v4021, 1.442695
        %v4145 = vpow.pop %v4144
        %v4146 = vmul.f32 %v4022, 1.442695
        %v4147 = vpow.pop %v4146
        %v4148 = vmul.f32 %v4023, 1.442695
        %v4149 = vpow.pop %v4148
        %v4150 = vmul.f32 %v4024, 1.442695
        %v4151 = vpow.pop %v4150
        %v4152 = vmul.f32 %v4025, 1.442695
        %v4153 = vpow.pop %v4152
        %v4154 = vadd.f32 %v4027, %v4029
        %4155 = vadd.xlane.f32.xlu0 %v4154
        %v4156 = vpop.xlane.xlu0 %4155
        %v4157 = vadd.f32 %v4031, %v4033
        %4158 = vadd.xlane.f32.xlu0 %v4157
        %v4159 = vpop.xlane.xlu0 %4158
        %v4160 = vadd.f32 %v4035, %v4037
        %4161 = vadd.xlane.f32.xlu0 %v4160
        %v4162 = vpop.xlane.xlu0 %4161
        %v4163 = vadd.f32 %v4039, %v4041
        %4164 = vadd.xlane.f32.xlu0 %v4163
        %v4165 = vpop.xlane.xlu0 %4164
        %v4166 = vadd.f32 %v4043, %v4045
        %4167 = vadd.xlane.f32.xlu0 %v4166
        %v4168 = vpop.xlane.xlu0 %4167
        %v4169 = vadd.f32 %v4047, %v4049
        %4170 = vadd.xlane.f32.xlu0 %v4169
        %v4171 = vpop.xlane.xlu0 %4170
        %v4172 = vadd.f32 %v4051, %v4053
        %4173 = vadd.xlane.f32.xlu0 %v4172
        %v4174 = vpop.xlane.xlu0 %4173
        %v4175 = vadd.f32 %v4055, %v4057
        %4176 = vadd.xlane.f32.xlu0 %v4175
        %v4177 = vpop.xlane.xlu0 %4176
        %v4178 = vadd.f32 %v4059, %v4061
        %4179 = vadd.xlane.f32.xlu0 %v4178
        %v4180 = vpop.xlane.xlu0 %4179
        %v4181 = vadd.f32 %v4063, %v4065
        %4182 = vadd.xlane.f32.xlu0 %v4181
        %v4183 = vpop.xlane.xlu0 %4182
        %v4184 = vadd.f32 %v4067, %v4069
        %4185 = vadd.xlane.f32.xlu0 %v4184
        %v4186 = vpop.xlane.xlu0 %4185
        %v4187 = vadd.f32 %v4071, %v4073
        %4188 = vadd.xlane.f32.xlu0 %v4187
        %v4189 = vpop.xlane.xlu0 %4188
        %v4190 = vadd.f32 %v4075, %v4077
        %4191 = vadd.xlane.f32.xlu0 %v4190
        %v4192 = vpop.xlane.xlu0 %4191
        %v4193 = vadd.f32 %v4079, %v4081
        %4194 = vadd.xlane.f32.xlu0 %v4193
        %v4195 = vpop.xlane.xlu0 %4194
        %v4196 = vadd.f32 %v4083, %v4085
        %4197 = vadd.xlane.f32.xlu0 %v4196
        %v4198 = vpop.xlane.xlu0 %4197
        %v4199 = vadd.f32 %v4087, %v4089
        %4200 = vadd.xlane.f32.xlu0 %v4199
        %v4201 = vpop.xlane.xlu0 %4200
        %v4202 = vadd.f32 %v4091, %v4093
        %4203 = vadd.xlane.f32.xlu0 %v4202
        %v4204 = vpop.xlane.xlu0 %4203
        %v4205 = vadd.f32 %v4095, %v4097
        %4206 = vadd.xlane.f32.xlu0 %v4205
        %v4207 = vpop.xlane.xlu0 %4206
        %v4208 = vadd.f32 %v4099, %v4101
        %4209 = vadd.xlane.f32.xlu0 %v4208
        %v4210 = vpop.xlane.xlu0 %4209
        %v4211 = vadd.f32 %v4103, %v4105
        %4212 = vadd.xlane.f32.xlu0 %v4211
        %v4213 = vpop.xlane.xlu0 %4212
        %v4214 = vadd.f32 %v4107, %v4109
        %4215 = vadd.xlane.f32.xlu0 %v4214
        %v4216 = vpop.xlane.xlu0 %4215
        %v4217 = vadd.f32 %v4111, %v4113
        %4218 = vadd.xlane.f32.xlu0 %v4217
        %v4219 = vpop.xlane.xlu0 %4218
        %v4220 = vadd.f32 %v4115, %v4117
        %4221 = vadd.xlane.f32.xlu0 %v4220
        %v4222 = vpop.xlane.xlu0 %4221
        %v4223 = vadd.f32 %v4119, %v4121
        %4224 = vadd.xlane.f32.xlu0 %v4223
        %v4225 = vpop.xlane.xlu0 %4224
        %v4226 = vadd.f32 %v4123, %v4125
        %4227 = vadd.xlane.f32.xlu0 %v4226
        %v4228 = vpop.xlane.xlu0 %4227
        %v4229 = vadd.f32 %v4127, %v4129
        %4230 = vadd.xlane.f32.xlu0 %v4229
        %v4231 = vpop.xlane.xlu0 %4230
        %v4232 = vadd.f32 %v4131, %v4133
        %4233 = vadd.xlane.f32.xlu0 %v4232
        %v4234 = vpop.xlane.xlu0 %4233
        %v4235 = vadd.f32 %v4135, %v4137
        %4236 = vadd.xlane.f32.xlu0 %v4235
        %v4237 = vpop.xlane.xlu0 %4236
        %v4238 = vadd.f32 %v4139, %v4141
        %4239 = vadd.xlane.f32.xlu0 %v4238
        %v4240 = vpop.xlane.xlu0 %4239
        %v4241 = vadd.f32 %v4143, %v4145
        %4242 = vadd.xlane.f32.xlu0 %v4241
        %v4243 = vpop.xlane.xlu0 %4242
        %v4244 = vadd.f32 %v4147, %v4149
        %4245 = vadd.xlane.f32.xlu0 %v4244
        %v4246 = vpop.xlane.xlu0 %4245
        %v4247 = vadd.f32 %v4151, %v4153
        %4248 = vadd.xlane.f32.xlu0 %v4247
        %v4249 = vpop.xlane.xlu0 %4248
        %v4250 = vrcp.pop %v4156
        %v4251 = vrcp.pop %v4159
        %v4252 = vrcp.pop %v4162
        %v4253 = vrcp.pop %v4165
        %v4254 = vrcp.pop %v4168
        %v4255 = vrcp.pop %v4171
        %v4256 = vrcp.pop %v4174
        %v4257 = vrcp.pop %v4177
        %v4258 = vrcp.pop %v4180
        %v4259 = vrcp.pop %v4183
        %v4260 = vrcp.pop %v4186
        %v4261 = vrcp.pop %v4189
        %v4262 = vrcp.pop %v4192
        %v4263 = vrcp.pop %v4195
        %v4264 = vrcp.pop %v4198
        %v4265 = vrcp.pop %v4201
        %v4266 = vrcp.pop %v4204
        %v4267 = vrcp.pop %v4207
        %v4268 = vrcp.pop %v4210
        %v4269 = vrcp.pop %v4213
        %v4270 = vrcp.pop %v4216
        %v4271 = vrcp.pop %v4219
        %v4272 = vrcp.pop %v4222
        %v4273 = vrcp.pop %v4225
        %v4274 = vrcp.pop %v4228
        %v4275 = vrcp.pop %v4231
        %v4276 = vrcp.pop %v4234
        %v4277 = vrcp.pop %v4237
        %v4278 = vrcp.pop %v4240
        %v4279 = vrcp.pop %v4243
        %v4280 = vrcp.pop %v4246
        %v4281 = vrcp.pop %v4249
        %v4282 = vmul.f32 %v4027, %v4250
        %v4283 = vmul.f32 %v4029, %v4250
        %v4284 = vmul.f32 %v4031, %v4251
        %v4285 = vmul.f32 %v4033, %v4251
        %v4286 = vmul.f32 %v4035, %v4252
        %v4287 = vmul.f32 %v4037, %v4252
        %v4288 = vmul.f32 %v4039, %v4253
        %v4289 = vmul.f32 %v4041, %v4253
        %v4290 = vmul.f32 %v4043, %v4254
        %v4291 = vmul.f32 %v4045, %v4254
        %v4292 = vmul.f32 %v4047, %v4255
        %v4293 = vmul.f32 %v4049, %v4255
        %v4294 = vmul.f32 %v4051, %v4256
        %v4295 = vmul.f32 %v4053, %v4256
        %v4296 = vmul.f32 %v4055, %v4257
        %v4297 = vmul.f32 %v4057, %v4257
        %v4298 = vmul.f32 %v4059, %v4258
        %v4299 = vmul.f32 %v4061, %v4258
        %v4300 = vmul.f32 %v4063, %v4259
        %v4301 = vmul.f32 %v4065, %v4259
        %v4302 = vmul.f32 %v4067, %v4260
        %v4303 = vmul.f32 %v4069, %v4260
        %v4304 = vmul.f32 %v4071, %v4261
        %v4305 = vmul.f32 %v4073, %v4261
        %v4306 = vmul.f32 %v4075, %v4262
        %v4307 = vmul.f32 %v4077, %v4262
        %v4308 = vmul.f32 %v4079, %v4263
        %v4309 = vmul.f32 %v4081, %v4263
        %v4310 = vmul.f32 %v4083, %v4264
        %v4311 = vmul.f32 %v4085, %v4264
        %v4312 = vmul.f32 %v4087, %v4265
        %v4313 = vmul.f32 %v4089, %v4265
        %v4314 = vmul.f32 %v4091, %v4266
        %v4315 = vmul.f32 %v4093, %v4266
        %v4316 = vmul.f32 %v4095, %v4267
        %v4317 = vmul.f32 %v4097, %v4267
        %v4318 = vmul.f32 %v4099, %v4268
        %v4319 = vmul.f32 %v4101, %v4268
        %v4320 = vmul.f32 %v4103, %v4269
        %v4321 = vmul.f32 %v4105, %v4269
        %v4322 = vmul.f32 %v4107, %v4270
        %v4323 = vmul.f32 %v4109, %v4270
        %v4324 = vmul.f32 %v4111, %v4271
        %v4325 = vmul.f32 %v4113, %v4271
        %v4326 = vmul.f32 %v4115, %v4272
        %v4327 = vmul.f32 %v4117, %v4272
        %v4328 = vmul.f32 %v4119, %v4273
        %v4329 = vmul.f32 %v4121, %v4273
        %v4330 = vmul.f32 %v4123, %v4274
        %v4331 = vmul.f32 %v4125, %v4274
        %v4332 = vmul.f32 %v4127, %v4275
        %v4333 = vmul.f32 %v4129, %v4275
        %v4334 = vmul.f32 %v4131, %v4276
        %v4335 = vmul.f32 %v4133, %v4276
        %v4336 = vmul.f32 %v4135, %v4277
        %v4337 = vmul.f32 %v4137, %v4277
        %v4338 = vmul.f32 %v4139, %v4278
        %v4339 = vmul.f32 %v4141, %v4278
        %v4340 = vmul.f32 %v4143, %v4279
        %v4341 = vmul.f32 %v4145, %v4279
        %v4342 = vmul.f32 %v4147, %v4280
        %v4343 = vmul.f32 %v4149, %v4280
        %v4344 = vmul.f32 %v4151, %v4281
        %v4345 = vmul.f32 %v4153, %v4281
        %v4346 = vpack.c.bf16 %v4284, %v4282
        %v4347 = vpack.c.bf16 %v4285, %v4283
        %v4348 = vpack.c.bf16 %v4288, %v4286
        %v4349 = vpack.c.bf16 %v4289, %v4287
        %v4350 = vpack.c.bf16 %v4292, %v4290
        %v4351 = vpack.c.bf16 %v4293, %v4291
        %v4352 = vpack.c.bf16 %v4296, %v4294
        %v4353 = vpack.c.bf16 %v4297, %v4295
        %v4354 = vpack.c.bf16 %v4300, %v4298
        %v4355 = vpack.c.bf16 %v4301, %v4299
        %v4356 = vpack.c.bf16 %v4304, %v4302
        %v4357 = vpack.c.bf16 %v4305, %v4303
        %v4358 = vpack.c.bf16 %v4308, %v4306
        %v4359 = vpack.c.bf16 %v4309, %v4307
        %v4360 = vpack.c.bf16 %v4312, %v4310
        %v4361 = vpack.c.bf16 %v4313, %v4311
        %v4362 = vpack.c.bf16 %v4316, %v4314
        %v4363 = vpack.c.bf16 %v4317, %v4315
        %v4364 = vpack.c.bf16 %v4320, %v4318
        %v4365 = vpack.c.bf16 %v4321, %v4319
        %v4366 = vpack.c.bf16 %v4324, %v4322
        %v4367 = vpack.c.bf16 %v4325, %v4323
        %v4368 = vpack.c.bf16 %v4328, %v4326
        %v4369 = vpack.c.bf16 %v4329, %v4327
        %v4370 = vpack.c.bf16 %v4332, %v4330
        %v4371 = vpack.c.bf16 %v4333, %v4331
        %v4372 = vpack.c.bf16 %v4336, %v4334
        %v4373 = vpack.c.bf16 %v4337, %v4335
        %v4374 = vpack.c.bf16 %v4340, %v4338
        %v4375 = vpack.c.bf16 %v4341, %v4339
        %v4376 = vpack.c.bf16 %v4344, %v4342
        %v4377 = vpack.c.bf16 %v4345, %v4343
        %4378 = vmatprep.subr.bf16.mxu0 %v4347
        %4379 = vmatpush1.bf16.xpose.msra.mxu0 %v4346
        %4380 = vmatprep.subr.bf16.mxu0 %v4349
        %4381 = vmatpush1.bf16.xpose.msra.mxu0 %v4348
        %4382 = vmatprep.subr.bf16.mxu0 %v4351
        %4383 = vmatpush1.bf16.xpose.msra.mxu0 %v4350
        %4384 = vmatprep.subr.bf16.mxu0 %v4353
        %4385 = vmatpush1.bf16.xpose.msra.mxu0 %v4352
        %4386 = vmatprep.subr.bf16.mxu0 %v4355
        %4387 = vmatpush1.bf16.xpose.msra.mxu0 %v4354
        %4388 = vmatprep.subr.bf16.mxu0 %v4357
        %4389 = vmatpush1.bf16.xpose.msra.mxu0 %v4356
        %4390 = vmatprep.subr.bf16.mxu0 %v4359
        %4391 = vmatpush1.bf16.xpose.msra.mxu0 %v4358
        %4392 = vmatprep.subr.bf16.mxu0 %v4361
        %4393 = vmatpush1.bf16.xpose.msra.mxu0 %v4360
        %4394 = vmatprep.subr.bf16.mxu0 %v4363
        %4395 = vmatpush1.bf16.xpose.msra.mxu0 %v4362
        %4396 = vmatprep.subr.bf16.mxu0 %v4365
        %4397 = vmatpush1.bf16.xpose.msra.mxu0 %v4364
        %4398 = vmatprep.subr.bf16.mxu0 %v4367
        %4399 = vmatpush1.bf16.xpose.msra.mxu0 %v4366
        %4400 = vmatprep.subr.bf16.mxu0 %v4369
        %4401 = vmatpush1.bf16.xpose.msra.mxu0 %v4368
        %4402 = vmatprep.subr.bf16.mxu0 %v4371
        %4403 = vmatpush1.bf16.xpose.msra.mxu0 %v4370
        %4404 = vmatprep.subr.bf16.mxu0 %v4373
        %4405 = vmatpush1.bf16.xpose.msra.mxu0 %v4372
        %4406 = vmatprep.subr.bf16.mxu0 %v4375
        %4407 = vmatpush1.bf16.xpose.msra.mxu0 %v4374
        %4408 = vmatprep.subr.bf16.mxu0 %v4377
        %4409 = vmatpush1.bf16.xpose.msra.mxu0 %v4376
        %4410 = vmatprep.mubr.bf16.mxu0 %v3622
        %4411 = vmatmul.mubr.bf16.gmra.mrb[0].mxu0 %v3621
        %v4412 = vpop.f32.mrb[0].mxu0
        %v4413 = vadd.f32 0.0, %v4412
        %v4414 = vpop.f32.mrb[0].mxu0
        %v4415 = vadd.f32 0.0, %v4414
        %v4416 = vpop.f32.mrb[0].mxu0
        %v4417 = vadd.f32 0.0, %v4416
        %v4418 = vpop.f32.mrb[0].mxu0
        %v4419 = vadd.f32 0.0, %v4418
        %4420 = vmatprep.mubr.bf16.mxu0 %v3624
        %4421 = vmatmul.mubr.bf16.gmra.mrb[0].mxu0 %v3623
        %v4422 = vpop.f32.mrb[0].mxu0
        %v4423 = vadd.f32 0.0, %v4422
        %v4424 = vpop.f32.mrb[0].mxu0
        %v4425 = vadd.f32 0.0, %v4424
        %v4426 = vpop.f32.mrb[0].mxu0
        %v4427 = vadd.f32 0.0, %v4426
        %v4428 = vpop.f32.mrb[0].mxu0
        %v4429 = vadd.f32 0.0, %v4428
        %4430 = vdwg.mxu0
        %s4431 = scalar_lea.vmem %s5, 8
        %v4432 = vld [vmem:[%s4431] sm:$0xf]
        %v4434 = vsel %vm929, %v4432, 0
        %4436 = vmatprep.subr.mxu0 %v4415
        %4437 = vmatpush1.msra.mxu0 %v4413
        %4438 = vmatprep.subr.mxu0 %v4419
        %4439 = vmatpush1.msra.mxu0 %v4417
        %4440 = vmatprep.subr.mxu0 %v4425
        %4441 = vmatpush1.msra.mxu0 %v4423
        %4442 = vmatprep.subr.mxu0 %v4429
        %4443 = vmatpush1.msra.mxu0 %v4427
        %4444 = vmatprep.subr.mxu0 0.0
        %4445 = vmatpush1.msra.mxu0 0.0
        %4446 = vmatprep.subr.mxu0 0.0
        %4447 = vmatpush1.msra.mxu0 0.0
        %4448 = vmatprep.subr.mxu0 0.0
        %4449 = vmatpush1.msra.mxu0 0.0
        %4450 = vmatprep.subr.mxu0 0.0
        %4451 = vmatpush1.msra.mxu0 0.0
        %4452 = vmatprep.subr.mxu0 0.0
        %4453 = vmatpush1.msra.mxu0 0.0
        %4454 = vmatprep.subr.mxu0 0.0
        %4455 = vmatpush1.msra.mxu0 0.0
        %4456 = vmatprep.subr.mxu0 0.0
        %4457 = vmatpush1.msra.mxu0 0.0
        %4458 = vmatprep.subr.mxu0 0.0
        %4459 = vmatpush1.msra.mxu0 0.0
        %4460 = vmatprep.subr.mxu0 0.0
        %4461 = vmatpush1.msra.mxu0 0.0
        %4462 = vmatprep.subr.mxu0 0.0
        %4463 = vmatpush1.msra.mxu0 0.0
        %4464 = vmatprep.subr.mxu0 0.0
        %4465 = vmatpush1.msra.mxu0 0.0
        %4466 = vmatprep.subr.mxu0 0.0
        %4467 = vmatpush1.msra.mxu0 0.0
        %4468 = vmatprep.subr.mxu0 0.0
        %4469 = vmatpush1.msra.mxu0 0.0
        %4470 = vmatprep.subr.mxu0 0.0
        %4471 = vmatpush1.msra.mxu0 0.0
        %4472 = vmatprep.subr.mxu0 0.0
        %4473 = vmatpush1.msra.mxu0 0.0
        %4474 = vmatprep.subr.mxu0 0.0
        %4475 = vmatpush1.msra.mxu0 0.0
        %4476 = vmatprep.subr.mxu0 0.0
        %4477 = vmatpush1.msra.mxu0 0.0
        %4478 = vmatprep.subr.mxu0 0.0
        %4479 = vmatpush1.msra.mxu0 0.0
        %4480 = vmatprep.subr.mxu0 0.0
        %4481 = vmatpush1.msra.mxu0 0.0
        %4482 = vmatprep.subr.mxu0 0.0
        %4483 = vmatpush1.msra.mxu0 0.0
        %4484 = vmatprep.subr.mxu0 0.0
        %4485 = vmatpush1.msra.mxu0 0.0
        %4486 = vmatprep.subr.mxu0 0.0
        %4487 = vmatpush1.msra.mxu0 0.0
        %4488 = vmatprep.subr.mxu0 0.0
        %4489 = vmatpush1.msra.mxu0 0.0
        %4490 = vmatprep.subr.mxu0 0.0
        %4491 = vmatpush1.msra.mxu0 0.0
        %4492 = vmatprep.subr.mxu0 0.0
        %4493 = vmatpush1.msra.mxu0 0.0
        %4494 = vmatprep.subr.mxu0 0.0
        %4495 = vmatpush1.msra.mxu0 0.0
        %4496 = vmatprep.subr.mxu0 0.0
        %4497 = vmatpush1.msra.mxu0 0.0
        %4498 = vmatprep.subr.mxu0 0.0
        %4499 = vmatpush1.msra.mxu0 0.0
        %4500 = vmatprep.mubr.f32.mxu0 0.0
        %4501 = vmatmul.mubr.f32.gmra.mrb[0].mxu0 %v4434
        %v4502 = vpop.f32.mrb[0].mxu0
        %v4503 = vadd.f32 0.0, %v4502
        %v4504 = vpop.f32.mrb[0].mxu0
        %v4505 = vadd.f32 0.0, %v4504
        %4506 = vdwg.mxu0
        %v4507 = vadd.f32 %v3155, %v4503
        %v4508 = vadd.f32 %v3157, %v4505
        %s4509 = scalar_lea.vmem %s2, 12
        %v4510 = vld [vmem:[%s4509] sm:$0xf]
        %v4512 = vsel %vm460, %v4510, 0
        %4514 = vmatprep.subr.mxu0 0.0
        %4515 = vmatpush1.msra.mxu0 %v4512
        %4516 = vmatprep.subr.mxu0 0.0
        %4517 = vmatpush1.msra.mxu0 0.0
        %4518 = vmatprep.subr.mxu0 0.0
        %4519 = vmatpush1.msra.mxu0 0.0
        %4520 = vmatprep.subr.mxu0 0.0
        %4521 = vmatpush1.msra.mxu0 0.0
        %4522 = vmatprep.subr.mxu0 0.0
        %4523 = vmatpush1.msra.mxu0 0.0
        %4524 = vmatprep.subr.mxu0 0.0
        %4525 = vmatpush1.msra.mxu0 0.0
        %4526 = vmatprep.subr.mxu0 0.0
        %4527 = vmatpush1.msra.mxu0 0.0
        %4528 = vmatprep.subr.mxu0 0.0
        %4529 = vmatpush1.msra.mxu0 0.0
        %4530 = vmatprep.subr.mxu0 0.0
        %4531 = vmatpush1.msra.mxu0 0.0
        %4532 = vmatprep.subr.mxu0 0.0
        %4533 = vmatpush1.msra.mxu0 0.0
        %4534 = vmatprep.subr.mxu0 0.0
        %4535 = vmatpush1.msra.mxu0 0.0
        %4536 = vmatprep.subr.mxu0 0.0
        %4537 = vmatpush1.msra.mxu0 0.0
        %4538 = vmatprep.subr.mxu0 0.0
        %4539 = vmatpush1.msra.mxu0 0.0
        %4540 = vmatprep.subr.mxu0 0.0
        %4541 = vmatpush1.msra.mxu0 0.0
        %4542 = vmatprep.subr.mxu0 0.0
        %4543 = vmatpush1.msra.mxu0 0.0
        %4544 = vmatprep.subr.mxu0 0.0
        %4545 = vmatpush1.msra.mxu0 0.0
        %4546 = vmatprep.subr.mxu0 0.0
        %4547 = vmatpush1.msra.mxu0 0.0
        %4548 = vmatprep.subr.mxu0 0.0
        %4549 = vmatpush1.msra.mxu0 0.0
        %4550 = vmatprep.subr.mxu0 0.0
        %4551 = vmatpush1.msra.mxu0 0.0
        %4552 = vmatprep.subr.mxu0 0.0
        %4553 = vmatpush1.msra.mxu0 0.0
        %4554 = vmatprep.subr.mxu0 0.0
        %4555 = vmatpush1.msra.mxu0 0.0
        %4556 = vmatprep.subr.mxu0 0.0
        %4557 = vmatpush1.msra.mxu0 0.0
        %4558 = vmatprep.subr.mxu0 0.0
        %4559 = vmatpush1.msra.mxu0 0.0
        %4560 = vmatprep.subr.mxu0 0.0
        %4561 = vmatpush1.msra.mxu0 0.0
        %4562 = vmatprep.subr.mxu0 0.0
        %4563 = vmatpush1.msra.mxu0 0.0
        %4564 = vmatprep.subr.mxu0 0.0
        %4565 = vmatpush1.msra.mxu0 0.0
        %4566 = vmatprep.subr.mxu0 0.0
        %4567 = vmatpush1.msra.mxu0 0.0
        %4568 = vmatprep.subr.mxu0 0.0
        %4569 = vmatpush1.msra.mxu0 0.0
        %4570 = vmatprep.subr.mxu0 0.0
        %4571 = vmatpush1.msra.mxu0 0.0
        %4572 = vmatprep.subr.mxu0 0.0
        %4573 = vmatpush1.msra.mxu0 0.0
        %4574 = vmatprep.subr.mxu0 0.0
        %4575 = vmatpush1.msra.mxu0 0.0
        %4576 = vmatprep.subr.mxu0 0.0
        %4577 = vmatpush1.msra.mxu0 0.0
        %4578 = vmatprep.mubr.f32.mxu0 0.0
        %4579 = vmatmul.mubr.f32.gmra.mrb[0].mxu0 %v365
        %v4580 = vpop.f32.mrb[0].mxu0
        %v4581 = vadd.f32 0.0, %v4580
        %v4582 = vpop.f32.mrb[0].mxu0
        %4583 = vmatprep.mubr.f32.mxu0 0.0
        %4584 = vmatmul.mubr.f32.gmra.mrb[0].mxu0 %v368
        %v4585 = vpop.f32.mrb[0].mxu0
        %v4586 = vadd.f32 0.0, %v4585
        %v4587 = vpop.f32.mrb[0].mxu0
        %4588 = vmatprep.mubr.f32.mxu0 0.0
        %4589 = vmatmul.mubr.f32.gmra.mrb[0].mxu0 %v371
        %v4590 = vpop.f32.mrb[0].mxu0
        %v4591 = vadd.f32 0.0, %v4590
        %v4592 = vpop.f32.mrb[0].mxu0
        %4593 = vmatprep.mubr.f32.mxu0 0.0
        %4594 = vmatmul.mubr.f32.gmra.mrb[0].mxu0 %v374
        %v4595 = vpop.f32.mrb[0].mxu0
        %v4596 = vadd.f32 0.0, %v4595
        %v4597 = vpop.f32.mrb[0].mxu0
        %4598 = vmatprep.mubr.f32.mxu0 0.0
        %4599 = vmatmul.mubr.f32.gmra.mrb[0].mxu0 %v377
        %v4600 = vpop.f32.mrb[0].mxu0
        %v4601 = vadd.f32 0.0, %v4600
        %v4602 = vpop.f32.mrb[0].mxu0
        %4603 = vmatprep.mubr.f32.mxu0 0.0
        %4604 = vmatmul.mubr.f32.gmra.mrb[0].mxu0 %v380
        %v4605 = vpop.f32.mrb[0].mxu0
        %v4606 = vadd.f32 0.0, %v4605
        %v4607 = vpop.f32.mrb[0].mxu0
        %4608 = vmatprep.mubr.f32.mxu0 0.0
        %4609 = vmatmul.mubr.f32.gmra.mrb[0].mxu0 %v383
        %v4610 = vpop.f32.mrb[0].mxu0
        %v4611 = vadd.f32 0.0, %v4610
        %v4612 = vpop.f32.mrb[0].mxu0
        %4613 = vmatprep.mubr.f32.mxu0 0.0
        %4614 = vmatmul.mubr.f32.gmra.mrb[0].mxu0 %v386
        %v4615 = vpop.f32.mrb[0].mxu0
        %v4616 = vadd.f32 0.0, %v4615
        %v4617 = vpop.f32.mrb[0].mxu0
        %4618 = vmatprep.mubr.f32.mxu0 0.0
        %4619 = vmatmul.mubr.f32.gmra.mrb[0].mxu0 %v389
        %v4620 = vpop.f32.mrb[0].mxu0
        %v4621 = vadd.f32 0.0, %v4620
        %v4622 = vpop.f32.mrb[0].mxu0
        %4623 = vmatprep.mubr.f32.mxu0 0.0
        %4624 = vmatmul.mubr.f32.gmra.mrb[0].mxu0 %v392
        %v4625 = vpop.f32.mrb[0].mxu0
        %v4626 = vadd.f32 0.0, %v4625
        %v4627 = vpop.f32.mrb[0].mxu0
        %4628 = vmatprep.mubr.f32.mxu0 0.0
        %4629 = vmatmul.mubr.f32.gmra.mrb[0].mxu0 %v395
        %v4630 = vpop.f32.mrb[0].mxu0
        %v4631 = vadd.f32 0.0, %v4630
        %v4632 = vpop.f32.mrb[0].mxu0
        %4633 = vmatprep.mubr.f32.mxu0 0.0
        %4634 = vmatmul.mubr.f32.gmra.mrb[0].mxu0 %v398
        %v4635 = vpop.f32.mrb[0].mxu0
        %v4636 = vadd.f32 0.0, %v4635
        %v4637 = vpop.f32.mrb[0].mxu0
        %4638 = vmatprep.mubr.f32.mxu0 0.0
        %4639 = vmatmul.mubr.f32.gmra.mrb[0].mxu0 %v401
        %v4640 = vpop.f32.mrb[0].mxu0
        %v4641 = vadd.f32 0.0, %v4640
        %v4642 = vpop.f32.mrb[0].mxu0
        %4643 = vmatprep.mubr.f32.mxu0 0.0
        %4644 = vmatmul.mubr.f32.gmra.mrb[0].mxu0 %v404
        %v4645 = vpop.f32.mrb[0].mxu0
        %v4646 = vadd.f32 0.0, %v4645
        %v4647 = vpop.f32.mrb[0].mxu0
        %4648 = vmatprep.mubr.f32.mxu0 0.0
        %4649 = vmatmul.mubr.f32.gmra.mrb[0].mxu0 %v407
        %v4650 = vpop.f32.mrb[0].mxu0
        %v4651 = vadd.f32 0.0, %v4650
        %v4652 = vpop.f32.mrb[0].mxu0
        %4653 = vmatprep.mubr.f32.mxu0 0.0
        %4654 = vmatmul.mubr.f32.gmra.mrb[0].mxu0 %v410
        %v4655 = vpop.f32.mrb[0].mxu0
        %v4656 = vadd.f32 0.0, %v4655
        %v4657 = vpop.f32.mrb[0].mxu0
        %4658 = vmatprep.mubr.f32.mxu0 0.0
        %4659 = vmatmul.mubr.f32.gmra.mrb[0].mxu0 %v413
        %v4660 = vpop.f32.mrb[0].mxu0
        %v4661 = vadd.f32 0.0, %v4660
        %v4662 = vpop.f32.mrb[0].mxu0
        %4663 = vmatprep.mubr.f32.mxu0 0.0
        %4664 = vmatmul.mubr.f32.gmra.mrb[0].mxu0 %v416
        %v4665 = vpop.f32.mrb[0].mxu0
        %v4666 = vadd.f32 0.0, %v4665
        %v4667 = vpop.f32.mrb[0].mxu0
        %4668 = vmatprep.mubr.f32.mxu0 0.0
        %4669 = vmatmul.mubr.f32.gmra.mrb[0].mxu0 %v419
        %v4670 = vpop.f32.mrb[0].mxu0
        %v4671 = vadd.f32 0.0, %v4670
        %v4672 = vpop.f32.mrb[0].mxu0
        %4673 = vmatprep.mubr.f32.mxu0 0.0
        %4674 = vmatmul.mubr.f32.gmra.mrb[0].mxu0 %v422
        %v4675 = vpop.f32.mrb[0].mxu0
        %v4676 = vadd.f32 0.0, %v4675
        %v4677 = vpop.f32.mrb[0].mxu0
        %4678 = vmatprep.mubr.f32.mxu0 0.0
        %4679 = vmatmul.mubr.f32.gmra.mrb[0].mxu0 %v425
        %v4680 = vpop.f32.mrb[0].mxu0
        %v4681 = vadd.f32 0.0, %v4680
        %v4682 = vpop.f32.mrb[0].mxu0
        %4683 = vmatprep.mubr.f32.mxu0 0.0
        %4684 = vmatmul.mubr.f32.gmra.mrb[0].mxu0 %v428
        %v4685 = vpop.f32.mrb[0].mxu0
        %v4686 = vadd.f32 0.0, %v4685
        %v4687 = vpop.f32.mrb[0].mxu0
        %4688 = vmatprep.mubr.f32.mxu0 0.0
        %4689 = vmatmul.mubr.f32.gmra.mrb[0].mxu0 %v431
        %v4690 = vpop.f32.mrb[0].mxu0
        %v4691 = vadd.f32 0.0, %v4690
        %v4692 = vpop.f32.mrb[0].mxu0
        %4693 = vmatprep.mubr.f32.mxu0 0.0
        %4694 = vmatmul.mubr.f32.gmra.mrb[0].mxu0 %v434
        %v4695 = vpop.f32.mrb[0].mxu0
        %v4696 = vadd.f32 0.0, %v4695
        %v4697 = vpop.f32.mrb[0].mxu0
        %4698 = vmatprep.mubr.f32.mxu0 0.0
        %4699 = vmatmul.mubr.f32.gmra.mrb[0].mxu0 %v437
        %v4700 = vpop.f32.mrb[0].mxu0
        %v4701 = vadd.f32 0.0, %v4700
        %v4702 = vpop.f32.mrb[0].mxu0
        %4703 = vmatprep.mubr.f32.mxu0 0.0
        %4704 = vmatmul.mubr.f32.gmra.mrb[0].mxu0 %v440
        %v4705 = vpop.f32.mrb[0].mxu0
        %v4706 = vadd.f32 0.0, %v4705
        %v4707 = vpop.f32.mrb[0].mxu0
        %4708 = vmatprep.mubr.f32.mxu0 0.0
        %4709 = vmatmul.mubr.f32.gmra.mrb[0].mxu0 %v443
        %v4710 = vpop.f32.mrb[0].mxu0
        %v4711 = vadd.f32 0.0, %v4710
        %v4712 = vpop.f32.mrb[0].mxu0
        %4713 = vmatprep.mubr.f32.mxu0 0.0
        %4714 = vmatmul.mubr.f32.gmra.mrb[0].mxu0 %v446
        %v4715 = vpop.f32.mrb[0].mxu0
        %v4716 = vadd.f32 0.0, %v4715
        %v4717 = vpop.f32.mrb[0].mxu0
        %4718 = vmatprep.mubr.f32.mxu0 0.0
        %4719 = vmatmul.mubr.f32.gmra.mrb[0].mxu0 %v449
        %v4720 = vpop.f32.mrb[0].mxu0
        %v4721 = vadd.f32 0.0, %v4720
        %v4722 = vpop.f32.mrb[0].mxu0
        %4723 = vmatprep.mubr.f32.mxu0 0.0
        %4724 = vmatmul.mubr.f32.gmra.mrb[0].mxu0 %v452
        %v4725 = vpop.f32.mrb[0].mxu0
        %v4726 = vadd.f32 0.0, %v4725
        %v4727 = vpop.f32.mrb[0].mxu0
        %4728 = vmatprep.mubr.f32.mxu0 0.0
        %4729 = vmatmul.mubr.f32.gmra.mrb[0].mxu0 %v455
        %v4730 = vpop.f32.mrb[0].mxu0
        %v4731 = vadd.f32 0.0, %v4730
        %v4732 = vpop.f32.mrb[0].mxu0
        %4733 = vmatprep.mubr.f32.mxu0 0.0
        %4734 = vmatmul.mubr.f32.gmra.mrb[0].mxu0 %v458
        %v4735 = vpop.f32.mrb[0].mxu0
        %v4736 = vadd.f32 0.0, %v4735
        %v4737 = vpop.f32.mrb[0].mxu0
        %4738 = vdwg.mxu0
        %s4739 = scalar_lea.vmem %s3, 96
        %v4740 = vld [vmem:[%s4739] sm:$0xff]
        %v4741 = vld [vmem:[%s4739 + $0x8] sm:$0xff]
        %v4742 = vld [vmem:[%s4739 + $0x10] sm:$0xff]
        %v4743 = vld [vmem:[%s4739 + $0x18] sm:$0xff]
        %v4745 = vsel %vm363, %v4740, 0
        %v4748 = vsel %vm363, %v4741, 0
        %v4751 = vsel %vm363, %v4742, 0
        %v4754 = vsel %vm363, %v4743, 0
        %4756 = vmatprep.subr.mxu0 %v709
        %4757 = vmatpush1.msra.mxu0 %v707
        %4758 = vmatprep.subr.mxu0 0.0
        %4759 = vmatpush1.msra.mxu0 0.0
        %4760 = vmatprep.subr.mxu0 0.0
        %4761 = vmatpush1.msra.mxu0 0.0
        %4762 = vmatprep.subr.mxu0 0.0
        %4763 = vmatpush1.msra.mxu0 0.0
        %4764 = vmatprep.subr.mxu0 0.0
        %4765 = vmatpush1.msra.mxu0 0.0
        %4766 = vmatprep.subr.mxu0 0.0
        %4767 = vmatpush1.msra.mxu0 0.0
        %4768 = vmatprep.subr.mxu0 0.0
        %4769 = vmatpush1.msra.mxu0 0.0
        %4770 = vmatprep.subr.mxu0 0.0
        %4771 = vmatpush1.msra.mxu0 0.0
        %4772 = vmatprep.subr.mxu0 0.0
        %4773 = vmatpush1.msra.mxu0 0.0
        %4774 = vmatprep.subr.mxu0 0.0
        %4775 = vmatpush1.msra.mxu0 0.0
        %4776 = vmatprep.subr.mxu0 0.0
        %4777 = vmatpush1.msra.mxu0 0.0
        %4778 = vmatprep.subr.mxu0 0.0
        %4779 = vmatpush1.msra.mxu0 0.0
        %4780 = vmatprep.subr.mxu0 0.0
        %4781 = vmatpush1.msra.mxu0 0.0
        %4782 = vmatprep.subr.mxu0 0.0
        %4783 = vmatpush1.msra.mxu0 0.0
        %4784 = vmatprep.subr.mxu0 0.0
        %4785 = vmatpush1.msra.mxu0 0.0
        %4786 = vmatprep.subr.mxu0 0.0
        %4787 = vmatpush1.msra.mxu0 0.0
        %4788 = vmatprep.subr.mxu0 0.0
        %4789 = vmatpush1.msra.mxu0 0.0
        %4790 = vmatprep.subr.mxu0 0.0
        %4791 = vmatpush1.msra.mxu0 0.0
        %4792 = vmatprep.subr.mxu0 0.0
        %4793 = vmatpush1.msra.mxu0 0.0
        %4794 = vmatprep.subr.mxu0 0.0
        %4795 = vmatpush1.msra.mxu0 0.0
        %4796 = vmatprep.subr.mxu0 0.0
        %4797 = vmatpush1.msra.mxu0 0.0
        %4798 = vmatprep.subr.mxu0 0.0
        %4799 = vmatpush1.msra.mxu0 0.0
        %4800 = vmatprep.subr.mxu0 0.0
        %4801 = vmatpush1.msra.mxu0 0.0
        %4802 = vmatprep.subr.mxu0 0.0
        %4803 = vmatpush1.msra.mxu0 0.0
        %4804 = vmatprep.subr.mxu0 0.0
        %4805 = vmatpush1.msra.mxu0 0.0
        %4806 = vmatprep.subr.mxu0 0.0
        %4807 = vmatpush1.msra.mxu0 0.0
        %4808 = vmatprep.subr.mxu0 0.0
        %4809 = vmatpush1.msra.mxu0 0.0
        %4810 = vmatprep.subr.mxu0 0.0
        %4811 = vmatpush1.msra.mxu0 0.0
        %4812 = vmatprep.subr.mxu0 0.0
        %4813 = vmatpush1.msra.mxu0 0.0
        %4814 = vmatprep.subr.mxu0 0.0
        %4815 = vmatpush1.msra.mxu0 0.0
        %4816 = vmatprep.subr.mxu0 0.0
        %4817 = vmatpush1.msra.mxu0 0.0
        %4818 = vmatprep.subr.mxu0 0.0
        %4819 = vmatpush1.msra.mxu0 0.0
        %4820 = vmatprep.mubr.f32.mxu0 0.0
        %4821 = vmatmul.mubr.f32.gmra.mrb[0].mxu0 %v4745
        %v4822 = vpop.f32.mrb[0].mxu0
        %v4823 = vadd.f32 0.0, %v4822
        %v4824 = vpop.f32.mrb[0].mxu0
        %v4825 = vadd.f32 0.0, %v4824
        %4826 = vmatprep.mubr.f32.mxu0 0.0
        %4827 = vmatmul.mubr.f32.gmra.mrb[0].mxu0 %v4748
        %v4828 = vpop.f32.mrb[0].mxu0
        %v4829 = vadd.f32 0.0, %v4828
        %v4830 = vpop.f32.mrb[0].mxu0
        %v4831 = vadd.f32 0.0, %v4830
        %4832 = vmatprep.mubr.f32.mxu0 0.0
        %4833 = vmatmul.mubr.f32.gmra.mrb[0].mxu0 %v4751
        %v4834 = vpop.f32.mrb[0].mxu0
        %v4835 = vadd.f32 0.0, %v4834
        %v4836 = vpop.f32.mrb[0].mxu0
        %v4837 = vadd.f32 0.0, %v4836
        %4838 = vmatprep.mubr.f32.mxu0 0.0
        %4839 = vmatmul.mubr.f32.gmra.mrb[0].mxu0 %v4754
        %v4840 = vpop.f32.mrb[0].mxu0
        %v4841 = vadd.f32 0.0, %v4840
        %v4842 = vpop.f32.mrb[0].mxu0
        %v4843 = vadd.f32 0.0, %v4842
        %4844 = vdwg.mxu0
        %s4845 = scalar_lea.vmem %s4, 96
        %v4846 = vld [vmem:[%s4845] sm:$0xff]
        %v4847 = vld [vmem:[%s4845 + $0x8] sm:$0xff]
        %v4848 = vld [vmem:[%s4845 + $0x10] sm:$0xff]
        %v4849 = vld [vmem:[%s4845 + $0x18] sm:$0xff]
        %v4851 = vsel %vm363, %v4846, 0
        %v4854 = vsel %vm363, %v4847, 0
        %v4857 = vsel %vm363, %v4848, 0
        %v4860 = vsel %vm363, %v4849, 0
        %4862 = vmatprep.subr.mxu0 %v709
        %4863 = vmatpush1.msra.mxu0 %v707
        %4864 = vmatprep.subr.mxu0 0.0
        %4865 = vmatpush1.msra.mxu0 0.0
        %4866 = vmatprep.subr.mxu0 0.0
        %4867 = vmatpush1.msra.mxu0 0.0
        %4868 = vmatprep.subr.mxu0 0.0
        %4869 = vmatpush1.msra.mxu0 0.0
        %4870 = vmatprep.subr.mxu0 0.0
        %4871 = vmatpush1.msra.mxu0 0.0
        %4872 = vmatprep.subr.mxu0 0.0
        %4873 = vmatpush1.msra.mxu0 0.0
        %4874 = vmatprep.subr.mxu0 0.0
        %4875 = vmatpush1.msra.mxu0 0.0
        %4876 = vmatprep.subr.mxu0 0.0
        %4877 = vmatpush1.msra.mxu0 0.0
        %4878 = vmatprep.subr.mxu0 0.0
        %4879 = vmatpush1.msra.mxu0 0.0
        %4880 = vmatprep.subr.mxu0 0.0
        %4881 = vmatpush1.msra.mxu0 0.0
        %4882 = vmatprep.subr.mxu0 0.0
        %4883 = vmatpush1.msra.mxu0 0.0
        %4884 = vmatprep.subr.mxu0 0.0
        %4885 = vmatpush1.msra.mxu0 0.0
        %4886 = vmatprep.subr.mxu0 0.0
        %4887 = vmatpush1.msra.mxu0 0.0
        %4888 = vmatprep.subr.mxu0 0.0
        %4889 = vmatpush1.msra.mxu0 0.0
        %4890 = vmatprep.subr.mxu0 0.0
        %4891 = vmatpush1.msra.mxu0 0.0
        %4892 = vmatprep.subr.mxu0 0.0
        %4893 = vmatpush1.msra.mxu0 0.0
        %4894 = vmatprep.subr.mxu0 0.0
        %4895 = vmatpush1.msra.mxu0 0.0
        %4896 = vmatprep.subr.mxu0 0.0
        %4897 = vmatpush1.msra.mxu0 0.0
        %4898 = vmatprep.subr.mxu0 0.0
        %4899 = vmatpush1.msra.mxu0 0.0
        %4900 = vmatprep.subr.mxu0 0.0
        %4901 = vmatpush1.msra.mxu0 0.0
        %4902 = vmatprep.subr.mxu0 0.0
        %4903 = vmatpush1.msra.mxu0 0.0
        %4904 = vmatprep.subr.mxu0 0.0
        %4905 = vmatpush1.msra.mxu0 0.0
        %4906 = vmatprep.subr.mxu0 0.0
        %4907 = vmatpush1.msra.mxu0 0.0
        %4908 = vmatprep.subr.mxu0 0.0
        %4909 = vmatpush1.msra.mxu0 0.0
        %4910 = vmatprep.subr.mxu0 0.0
        %4911 = vmatpush1.msra.mxu0 0.0
        %4912 = vmatprep.subr.mxu0 0.0
        %4913 = vmatpush1.msra.mxu0 0.0
        %4914 = vmatprep.subr.mxu0 0.0
        %4915 = vmatpush1.msra.mxu0 0.0
        %4916 = vmatprep.subr.mxu0 0.0
        %4917 = vmatpush1.msra.mxu0 0.0
        %4918 = vmatprep.subr.mxu0 0.0
        %4919 = vmatpush1.msra.mxu0 0.0
        %4920 = vmatprep.subr.mxu0 0.0
        %4921 = vmatpush1.msra.mxu0 0.0
        %4922 = vmatprep.subr.mxu0 0.0
        %4923 = vmatpush1.msra.mxu0 0.0
        %4924 = vmatprep.subr.mxu0 0.0
        %4925 = vmatpush1.msra.mxu0 0.0
        %4926 = vmatprep.mubr.f32.mxu0 0.0
        %4927 = vmatmul.mubr.f32.gmra.mrb[0].mxu0 %v4851
        %v4928 = vpop.f32.mrb[0].mxu0
        %v4929 = vadd.f32 0.0, %v4928
        %v4930 = vpop.f32.mrb[0].mxu0
        %v4931 = vadd.f32 0.0, %v4930
        %4932 = vmatprep.mubr.f32.mxu0 0.0
        %4933 = vmatmul.mubr.f32.gmra.mrb[0].mxu0 %v4854
        %v4934 = vpop.f32.mrb[0].mxu0
        %v4935 = vadd.f32 0.0, %v4934
        %v4936 = vpop.f32.mrb[0].mxu0
        %v4937 = vadd.f32 0.0, %v4936
        %4938 = vmatprep.mubr.f32.mxu0 0.0
        %4939 = vmatmul.mubr.f32.gmra.mrb[0].mxu0 %v4857
        %v4940 = vpop.f32.mrb[0].mxu0
        %v4941 = vadd.f32 0.0, %v4940
        %v4942 = vpop.f32.mrb[0].mxu0
        %v4943 = vadd.f32 0.0, %v4942
        %4944 = vmatprep.mubr.f32.mxu0 0.0
        %4945 = vmatmul.mubr.f32.gmra.mrb[0].mxu0 %v4860
        %v4946 = vpop.f32.mrb[0].mxu0
        %v4947 = vadd.f32 0.0, %v4946
        %v4948 = vpop.f32.mrb[0].mxu0
        %v4949 = vadd.f32 0.0, %v4948
        %4950 = vdwg.mxu0
        %v4951 = vpack.c.bf16 %v4586, %v4581
        %v4952 = vpack.c.bf16 %v4596, %v4591
        %v4953 = vpack.c.bf16 %v4606, %v4601
        %v4954 = vpack.c.bf16 %v4616, %v4611
        %v4955 = vpack.c.bf16 %v4626, %v4621
        %v4956 = vpack.c.bf16 %v4636, %v4631
        %v4957 = vpack.c.bf16 %v4646, %v4641
        %v4958 = vpack.c.bf16 %v4656, %v4651
        %v4959 = vpack.c.bf16 %v4666, %v4661
        %v4960 = vpack.c.bf16 %v4676, %v4671
        %v4961 = vpack.c.bf16 %v4686, %v4681
        %v4962 = vpack.c.bf16 %v4696, %v4691
        %v4963 = vpack.c.bf16 %v4706, %v4701
        %v4964 = vpack.c.bf16 %v4716, %v4711
        %v4965 = vpack.c.bf16 %v4726, %v4721
        %v4966 = vpack.c.bf16 %v4736, %v4731
        %v4967 = vpack.c.bf16 %v4829, %v4823
        %v4968 = vpack.c.bf16 %v4831, %v4825
        %v4969 = vpack.c.bf16 %v4841, %v4835
        %v4970 = vpack.c.bf16 %v4843, %v4837
        %v4971 = vpack.c.bf16 %v4935, %v4929
        %v4972 = vpack.c.bf16 %v4937, %v4931
        %v4973 = vpack.c.bf16 %v4947, %v4941
        %v4974 = vpack.c.bf16 %v4949, %v4943
        %v4976 = vsel %vm929, %v4951, 0
        %v4979 = vsel %vm929, %v4952, 0
        %v4982 = vsel %vm929, %v4953, 0
        %v4985 = vsel %vm929, %v4954, 0
        %v4988 = vsel %vm929, %v4955, 0
        %v4991 = vsel %vm929, %v4956, 0
        %v4994 = vsel %vm929, %v4957, 0
        %v4997 = vsel %vm929, %v4958, 0
        %v5000 = vsel %vm929, %v4959, 0
        %v5003 = vsel %vm929, %v4960, 0
        %v5006 = vsel %vm929, %v4961, 0
        %v5009 = vsel %vm929, %v4962, 0
        %v5012 = vsel %vm929, %v4963, 0
        %v5015 = vsel %vm929, %v4964, 0
        %v5018 = vsel %vm929, %v4965, 0
        %v5021 = vsel %vm929, %v4966, 0
        %5023 = vmatprep.subr.bf16.mxu0 %v4968
        %5024 = vmatpush1.bf16.msra.mxu0 %v4967
        %5025 = vmatprep.subr.bf16.mxu0 %v4970
        %5026 = vmatpush1.bf16.msra.mxu0 %v4969
        %5027 = vmatprep.subr.bf16.mxu0 0
        %5028 = vmatpush1.bf16.msra.mxu0 0
        %5029 = vmatprep.subr.bf16.mxu0 0
        %5030 = vmatpush1.bf16.msra.mxu0 0
        %5031 = vmatprep.subr.bf16.mxu0 0
        %5032 = vmatpush1.bf16.msra.mxu0 0
        %5033 = vmatprep.subr.bf16.mxu0 0
        %5034 = vmatpush1.bf16.msra.mxu0 0
        %5035 = vmatprep.subr.bf16.mxu0 0
        %5036 = vmatpush1.bf16.msra.mxu0 0
        %5037 = vmatprep.subr.bf16.mxu0 0
        %5038 = vmatpush1.bf16.msra.mxu0 0
        %5039 = vmatprep.subr.bf16.mxu0 0
        %5040 = vmatpush1.bf16.msra.mxu0 0
        %5041 = vmatprep.subr.bf16.mxu0 0
        %5042 = vmatpush1.bf16.msra.mxu0 0
        %5043 = vmatprep.subr.bf16.mxu0 0
        %5044 = vmatpush1.bf16.msra.mxu0 0
        %5045 = vmatprep.subr.bf16.mxu0 0
        %5046 = vmatpush1.bf16.msra.mxu0 0
        %5047 = vmatprep.subr.bf16.mxu0 0
        %5048 = vmatpush1.bf16.msra.mxu0 0
        %5049 = vmatprep.subr.bf16.mxu0 0
        %5050 = vmatpush1.bf16.msra.mxu0 0
        %5051 = vmatprep.subr.bf16.mxu0 0
        %5052 = vmatpush1.bf16.msra.mxu0 0
        %5053 = vmatprep.subr.bf16.mxu0 0
        %5054 = vmatpush1.bf16.msra.mxu0 0
        %5055 = vmatprep.mubr.bf16.mxu0 0
        %5056 = vmatmul.mubr.bf16.gmra.mrb[0].mxu0 %v4976
        %v5057 = vpop.f32.mrb[0].mxu0
        %v5058 = vadd.f32 0.0, %v5057
        %v5059 = vpop.f32.mrb[0].mxu0
        %v5060 = vadd.f32 0.0, %v5059
        %v5061 = vpop.f32.mrb[0].mxu0
        %v5062 = vadd.f32 0.0, %v5061
        %v5063 = vpop.f32.mrb[0].mxu0
        %v5064 = vadd.f32 0.0, %v5063
        %5065 = vmatprep.mubr.bf16.mxu0 0
        %5066 = vmatmul.mubr.bf16.gmra.mrb[0].mxu0 %v4979
        %v5067 = vpop.f32.mrb[0].mxu0
        %v5068 = vadd.f32 0.0, %v5067
        %v5069 = vpop.f32.mrb[0].mxu0
        %v5070 = vadd.f32 0.0, %v5069
        %v5071 = vpop.f32.mrb[0].mxu0
        %v5072 = vadd.f32 0.0, %v5071
        %v5073 = vpop.f32.mrb[0].mxu0
        %v5074 = vadd.f32 0.0, %v5073
        %5075 = vmatprep.mubr.bf16.mxu0 0
        %5076 = vmatmul.mubr.bf16.gmra.mrb[0].mxu0 %v4982
        %v5077 = vpop.f32.mrb[0].mxu0
        %v5078 = vadd.f32 0.0, %v5077
        %v5079 = vpop.f32.mrb[0].mxu0
        %v5080 = vadd.f32 0.0, %v5079
        %v5081 = vpop.f32.mrb[0].mxu0
        %v5082 = vadd.f32 0.0, %v5081
        %v5083 = vpop.f32.mrb[0].mxu0
        %v5084 = vadd.f32 0.0, %v5083
        %5085 = vmatprep.mubr.bf16.mxu0 0
        %5086 = vmatmul.mubr.bf16.gmra.mrb[0].mxu0 %v4985
        %v5087 = vpop.f32.mrb[0].mxu0
        %v5088 = vadd.f32 0.0, %v5087
        %v5089 = vpop.f32.mrb[0].mxu0
        %v5090 = vadd.f32 0.0, %v5089
        %v5091 = vpop.f32.mrb[0].mxu0
        %v5092 = vadd.f32 0.0, %v5091
        %v5093 = vpop.f32.mrb[0].mxu0
        %v5094 = vadd.f32 0.0, %v5093
        %5095 = vmatprep.mubr.bf16.mxu0 0
        %5096 = vmatmul.mubr.bf16.gmra.mrb[0].mxu0 %v4988
        %v5097 = vpop.f32.mrb[0].mxu0
        %v5098 = vadd.f32 0.0, %v5097
        %v5099 = vpop.f32.mrb[0].mxu0
        %v5100 = vadd.f32 0.0, %v5099
        %v5101 = vpop.f32.mrb[0].mxu0
        %v5102 = vadd.f32 0.0, %v5101
        %v5103 = vpop.f32.mrb[0].mxu0
        %v5104 = vadd.f32 0.0, %v5103
        %5105 = vmatprep.mubr.bf16.mxu0 0
        %5106 = vmatmul.mubr.bf16.gmra.mrb[0].mxu0 %v4991
        %v5107 = vpop.f32.mrb[0].mxu0
        %v5108 = vadd.f32 0.0, %v5107
        %v5109 = vpop.f32.mrb[0].mxu0
        %v5110 = vadd.f32 0.0, %v5109
        %v5111 = vpop.f32.mrb[0].mxu0
        %v5112 = vadd.f32 0.0, %v5111
        %v5113 = vpop.f32.mrb[0].mxu0
        %v5114 = vadd.f32 0.0, %v5113
        %5115 = vmatprep.mubr.bf16.mxu0 0
        %5116 = vmatmul.mubr.bf16.gmra.mrb[0].mxu0 %v4994
        %v5117 = vpop.f32.mrb[0].mxu0
        %v5118 = vadd.f32 0.0, %v5117
        %v5119 = vpop.f32.mrb[0].mxu0
        %v5120 = vadd.f32 0.0, %v5119
        %v5121 = vpop.f32.mrb[0].mxu0
        %v5122 = vadd.f32 0.0, %v5121
        %v5123 = vpop.f32.mrb[0].mxu0
        %v5124 = vadd.f32 0.0, %v5123
        %5125 = vmatprep.mubr.bf16.mxu0 0
        %5126 = vmatmul.mubr.bf16.gmra.mrb[0].mxu0 %v4997
        %v5127 = vpop.f32.mrb[0].mxu0
        %v5128 = vadd.f32 0.0, %v5127
        %v5129 = vpop.f32.mrb[0].mxu0
        %v5130 = vadd.f32 0.0, %v5129
        %v5131 = vpop.f32.mrb[0].mxu0
        %v5132 = vadd.f32 0.0, %v5131
        %v5133 = vpop.f32.mrb[0].mxu0
        %v5134 = vadd.f32 0.0, %v5133
        %5135 = vmatprep.mubr.bf16.mxu0 0
        %5136 = vmatmul.mubr.bf16.gmra.mrb[0].mxu0 %v5000
        %v5137 = vpop.f32.mrb[0].mxu0
        %v5138 = vadd.f32 0.0, %v5137
        %v5139 = vpop.f32.mrb[0].mxu0
        %v5140 = vadd.f32 0.0, %v5139
        %v5141 = vpop.f32.mrb[0].mxu0
        %v5142 = vadd.f32 0.0, %v5141
        %v5143 = vpop.f32.mrb[0].mxu0
        %v5144 = vadd.f32 0.0, %v5143
        %5145 = vmatprep.mubr.bf16.mxu0 0
        %5146 = vmatmul.mubr.bf16.gmra.mrb[0].mxu0 %v5003
        %v5147 = vpop.f32.mrb[0].mxu0
        %v5148 = vadd.f32 0.0, %v5147
        %v5149 = vpop.f32.mrb[0].mxu0
        %v5150 = vadd.f32 0.0, %v5149
        %v5151 = vpop.f32.mrb[0].mxu0
        %v5152 = vadd.f32 0.0, %v5151
        %v5153 = vpop.f32.mrb[0].mxu0
        %v5154 = vadd.f32 0.0, %v5153
        %5155 = vmatprep.mubr.bf16.mxu0 0
        %5156 = vmatmul.mubr.bf16.gmra.mrb[0].mxu0 %v5006
        %v5157 = vpop.f32.mrb[0].mxu0
        %v5158 = vadd.f32 0.0, %v5157
        %v5159 = vpop.f32.mrb[0].mxu0
        %v5160 = vadd.f32 0.0, %v5159
        %v5161 = vpop.f32.mrb[0].mxu0
        %v5162 = vadd.f32 0.0, %v5161
        %v5163 = vpop.f32.mrb[0].mxu0
        %v5164 = vadd.f32 0.0, %v5163
        %5165 = vmatprep.mubr.bf16.mxu0 0
        %5166 = vmatmul.mubr.bf16.gmra.mrb[0].mxu0 %v5009
        %v5167 = vpop.f32.mrb[0].mxu0
        %v5168 = vadd.f32 0.0, %v5167
        %v5169 = vpop.f32.mrb[0].mxu0
        %v5170 = vadd.f32 0.0, %v5169
        %v5171 = vpop.f32.mrb[0].mxu0
        %v5172 = vadd.f32 0.0, %v5171
        %v5173 = vpop.f32.mrb[0].mxu0
        %v5174 = vadd.f32 0.0, %v5173
        %5175 = vmatprep.mubr.bf16.mxu0 0
        %5176 = vmatmul.mubr.bf16.gmra.mrb[0].mxu0 %v5012
        %v5177 = vpop.f32.mrb[0].mxu0
        %v5178 = vadd.f32 0.0, %v5177
        %v5179 = vpop.f32.mrb[0].mxu0
        %v5180 = vadd.f32 0.0, %v5179
        %v5181 = vpop.f32.mrb[0].mxu0
        %v5182 = vadd.f32 0.0, %v5181
        %v5183 = vpop.f32.mrb[0].mxu0
        %v5184 = vadd.f32 0.0, %v5183
        %5185 = vmatprep.mubr.bf16.mxu0 0
        %5186 = vmatmul.mubr.bf16.gmra.mrb[0].mxu0 %v5015
        %v5187 = vpop.f32.mrb[0].mxu0
        %v5188 = vadd.f32 0.0, %v5187
        %v5189 = vpop.f32.mrb[0].mxu0
        %v5190 = vadd.f32 0.0, %v5189
        %v5191 = vpop.f32.mrb[0].mxu0
        %v5192 = vadd.f32 0.0, %v5191
        %v5193 = vpop.f32.mrb[0].mxu0
        %v5194 = vadd.f32 0.0, %v5193
        %5195 = vmatprep.mubr.bf16.mxu0 0
        %5196 = vmatmul.mubr.bf16.gmra.mrb[0].mxu0 %v5018
        %v5197 = vpop.f32.mrb[0].mxu0
        %v5198 = vadd.f32 0.0, %v5197
        %v5199 = vpop.f32.mrb[0].mxu0
        %v5200 = vadd.f32 0.0, %v5199
        %v5201 = vpop.f32.mrb[0].mxu0
        %v5202 = vadd.f32 0.0, %v5201
        %v5203 = vpop.f32.mrb[0].mxu0
        %v5204 = vadd.f32 0.0, %v5203
        %5205 = vmatprep.mubr.bf16.mxu0 0
        %5206 = vmatmul.mubr.bf16.gmra.mrb[0].mxu0 %v5021
        %v5207 = vpop.f32.mrb[0].mxu0
        %v5208 = vadd.f32 0.0, %v5207
        %v5209 = vpop.f32.mrb[0].mxu0
        %v5210 = vadd.f32 0.0, %v5209
        %v5211 = vpop.f32.mrb[0].mxu0
        %v5212 = vadd.f32 0.0, %v5211
        %v5213 = vpop.f32.mrb[0].mxu0
        %v5214 = vadd.f32 0.0, %v5213
        %5215 = vdwg.mxu0
        %v5216 = vmax.f32 %v5058, %v5060
        %5217 = vmax.xlane.f32.xlu0 %v5216
        %v5218 = vpop.xlane.xlu0 %5217
        %v5219 = vmax.f32 %v5062, %v5064
        %5220 = vmax.xlane.f32.xlu0 %v5219
        %v5221 = vpop.xlane.xlu0 %5220
        %v5222 = vmax.f32 %v5068, %v5070
        %5223 = vmax.xlane.f32.xlu0 %v5222
        %v5224 = vpop.xlane.xlu0 %5223
        %v5225 = vmax.f32 %v5072, %v5074
        %5226 = vmax.xlane.f32.xlu0 %v5225
        %v5227 = vpop.xlane.xlu0 %5226
        %v5228 = vmax.f32 %v5078, %v5080
        %5229 = vmax.xlane.f32.xlu0 %v5228
        %v5230 = vpop.xlane.xlu0 %5229
        %v5231 = vmax.f32 %v5082, %v5084
        %5232 = vmax.xlane.f32.xlu0 %v5231
        %v5233 = vpop.xlane.xlu0 %5232
        %v5234 = vmax.f32 %v5088, %v5090
        %5235 = vmax.xlane.f32.xlu0 %v5234
        %v5236 = vpop.xlane.xlu0 %5235
        %v5237 = vmax.f32 %v5092, %v5094
        %5238 = vmax.xlane.f32.xlu0 %v5237
        %v5239 = vpop.xlane.xlu0 %5238
        %v5240 = vmax.f32 %v5098, %v5100
        %5241 = vmax.xlane.f32.xlu0 %v5240
        %v5242 = vpop.xlane.xlu0 %5241
        %v5243 = vmax.f32 %v5102, %v5104
        %5244 = vmax.xlane.f32.xlu0 %v5243
        %v5245 = vpop.xlane.xlu0 %5244
        %v5246 = vmax.f32 %v5108, %v5110
        %5247 = vmax.xlane.f32.xlu0 %v5246
        %v5248 = vpop.xlane.xlu0 %5247
        %v5249 = vmax.f32 %v5112, %v5114
        %5250 = vmax.xlane.f32.xlu0 %v5249
        %v5251 = vpop.xlane.xlu0 %5250
        %v5252 = vmax.f32 %v5118, %v5120
        %5253 = vmax.xlane.f32.xlu0 %v5252
        %v5254 = vpop.xlane.xlu0 %5253
        %v5255 = vmax.f32 %v5122, %v5124
        %5256 = vmax.xlane.f32.xlu0 %v5255
        %v5257 = vpop.xlane.xlu0 %5256
        %v5258 = vmax.f32 %v5128, %v5130
        %5259 = vmax.xlane.f32.xlu0 %v5258
        %v5260 = vpop.xlane.xlu0 %5259
        %v5261 = vmax.f32 %v5132, %v5134
        %5262 = vmax.xlane.f32.xlu0 %v5261
        %v5263 = vpop.xlane.xlu0 %5262
        %v5264 = vmax.f32 %v5138, %v5140
        %5265 = vmax.xlane.f32.xlu0 %v5264
        %v5266 = vpop.xlane.xlu0 %5265
        %v5267 = vmax.f32 %v5142, %v5144
        %5268 = vmax.xlane.f32.xlu0 %v5267
        %v5269 = vpop.xlane.xlu0 %5268
        %v5270 = vmax.f32 %v5148, %v5150
        %5271 = vmax.xlane.f32.xlu0 %v5270
        %v5272 = vpop.xlane.xlu0 %5271
        %v5273 = vmax.f32 %v5152, %v5154
        %5274 = vmax.xlane.f32.xlu0 %v5273
        %v5275 = vpop.xlane.xlu0 %5274
        %v5276 = vmax.f32 %v5158, %v5160
        %5277 = vmax.xlane.f32.xlu0 %v5276
        %v5278 = vpop.xlane.xlu0 %5277
        %v5279 = vmax.f32 %v5162, %v5164
        %5280 = vmax.xlane.f32.xlu0 %v5279
        %v5281 = vpop.xlane.xlu0 %5280
        %v5282 = vmax.f32 %v5168, %v5170
        %5283 = vmax.xlane.f32.xlu0 %v5282
        %v5284 = vpop.xlane.xlu0 %5283
        %v5285 = vmax.f32 %v5172, %v5174
        %5286 = vmax.xlane.f32.xlu0 %v5285
        %v5287 = vpop.xlane.xlu0 %5286
        %v5288 = vmax.f32 %v5178, %v5180
        %5289 = vmax.xlane.f32.xlu0 %v5288
        %v5290 = vpop.xlane.xlu0 %5289
        %v5291 = vmax.f32 %v5182, %v5184
        %5292 = vmax.xlane.f32.xlu0 %v5291
        %v5293 = vpop.xlane.xlu0 %5292
        %v5294 = vmax.f32 %v5188, %v5190
        %5295 = vmax.xlane.f32.xlu0 %v5294
        %v5296 = vpop.xlane.xlu0 %5295
        %v5297 = vmax.f32 %v5192, %v5194
        %5298 = vmax.xlane.f32.xlu0 %v5297
        %v5299 = vpop.xlane.xlu0 %5298
        %v5300 = vmax.f32 %v5198, %v5200
        %5301 = vmax.xlane.f32.xlu0 %v5300
        %v5302 = vpop.xlane.xlu0 %5301
        %v5303 = vmax.f32 %v5202, %v5204
        %5304 = vmax.xlane.f32.xlu0 %v5303
        %v5305 = vpop.xlane.xlu0 %5304
        %v5306 = vmax.f32 %v5208, %v5210
        %5307 = vmax.xlane.f32.xlu0 %v5306
        %v5308 = vpop.xlane.xlu0 %5307
        %v5309 = vmax.f32 %v5212, %v5214
        %5310 = vmax.xlane.f32.xlu0 %v5309
        %v5311 = vpop.xlane.xlu0 %5310
        %v5312 = vsub.f32 %v5058, %v5218
        %v5313 = vsub.f32 %v5060, %v5218
        %v5314 = vsub.f32 %v5062, %v5221
        %v5315 = vsub.f32 %v5064, %v5221
        %v5316 = vsub.f32 %v5068, %v5224
        %v5317 = vsub.f32 %v5070, %v5224
        %v5318 = vsub.f32 %v5072, %v5227
        %v5319 = vsub.f32 %v5074, %v5227
        %v5320 = vsub.f32 %v5078, %v5230
        %v5321 = vsub.f32 %v5080, %v5230
        %v5322 = vsub.f32 %v5082, %v5233
        %v5323 = vsub.f32 %v5084, %v5233
        %v5324 = vsub.f32 %v5088, %v5236
        %v5325 = vsub.f32 %v5090, %v5236
        %v5326 = vsub.f32 %v5092, %v5239
        %v5327 = vsub.f32 %v5094, %v5239
        %v5328 = vsub.f32 %v5098, %v5242
        %v5329 = vsub.f32 %v5100, %v5242
        %v5330 = vsub.f32 %v5102, %v5245
        %v5331 = vsub.f32 %v5104, %v5245
        %v5332 = vsub.f32 %v5108, %v5248
        %v5333 = vsub.f32 %v5110, %v5248
        %v5334 = vsub.f32 %v5112, %v5251
        %v5335 = vsub.f32 %v5114, %v5251
        %v5336 = vsub.f32 %v5118, %v5254
        %v5337 = vsub.f32 %v5120, %v5254
        %v5338 = vsub.f32 %v5122, %v5257
        %v5339 = vsub.f32 %v5124, %v5257
        %v5340 = vsub.f32 %v5128, %v5260
        %v5341 = vsub.f32 %v5130, %v5260
        %v5342 = vsub.f32 %v5132, %v5263
        %v5343 = vsub.f32 %v5134, %v5263
        %v5344 = vsub.f32 %v5138, %v5266
        %v5345 = vsub.f32 %v5140, %v5266
        %v5346 = vsub.f32 %v5142, %v5269
        %v5347 = vsub.f32 %v5144, %v5269
        %v5348 = vsub.f32 %v5148, %v5272
        %v5349 = vsub.f32 %v5150, %v5272
        %v5350 = vsub.f32 %v5152, %v5275
        %v5351 = vsub.f32 %v5154, %v5275
        %v5352 = vsub.f32 %v5158, %v5278
        %v5353 = vsub.f32 %v5160, %v5278
        %v5354 = vsub.f32 %v5162, %v5281
        %v5355 = vsub.f32 %v5164, %v5281
        %v5356 = vsub.f32 %v5168, %v5284
        %v5357 = vsub.f32 %v5170, %v5284
        %v5358 = vsub.f32 %v5172, %v5287
        %v5359 = vsub.f32 %v5174, %v5287
        %v5360 = vsub.f32 %v5178, %v5290
        %v5361 = vsub.f32 %v5180, %v5290
        %v5362 = vsub.f32 %v5182, %v5293
        %v5363 = vsub.f32 %v5184, %v5293
        %v5364 = vsub.f32 %v5188, %v5296
        %v5365 = vsub.f32 %v5190, %v5296
        %v5366 = vsub.f32 %v5192, %v5299
        %v5367 = vsub.f32 %v5194, %v5299
        %v5368 = vsub.f32 %v5198, %v5302
        %v5369 = vsub.f32 %v5200, %v5302
        %v5370 = vsub.f32 %v5202, %v5305
        %v5371 = vsub.f32 %v5204, %v5305
        %v5372 = vsub.f32 %v5208, %v5308
        %v5373 = vsub.f32 %v5210, %v5308
        %v5374 = vsub.f32 %v5212, %v5311
        %v5375 = vsub.f32 %v5214, %v5311
        %v5376 = vmul.f32 %v5312, 1.442695
        %v5377 = vpow.pop %v5376
        %v5378 = vmul.f32 %v5313, 1.442695
        %v5379 = vpow.pop %v5378
        %v5380 = vmul.f32 %v5314, 1.442695
        %v5381 = vpow.pop %v5380
        %v5382 = vmul.f32 %v5315, 1.442695
        %v5383 = vpow.pop %v5382
        %v5384 = vmul.f32 %v5316, 1.442695
        %v5385 = vpow.pop %v5384
        %v5386 = vmul.f32 %v5317, 1.442695
        %v5387 = vpow.pop %v5386
        %v5388 = vmul.f32 %v5318, 1.442695
        %v5389 = vpow.pop %v5388
        %v5390 = vmul.f32 %v5319, 1.442695
        %v5391 = vpow.pop %v5390
        %v5392 = vmul.f32 %v5320, 1.442695
        %v5393 = vpow.pop %v5392
        %v5394 = vmul.f32 %v5321, 1.442695
        %v5395 = vpow.pop %v5394
        %v5396 = vmul.f32 %v5322, 1.442695
        %v5397 = vpow.pop %v5396
        %v5398 = vmul.f32 %v5323, 1.442695
        %v5399 = vpow.pop %v5398
        %v5400 = vmul.f32 %v5324, 1.442695
        %v5401 = vpow.pop %v5400
        %v5402 = vmul.f32 %v5325, 1.442695
        %v5403 = vpow.pop %v5402
        %v5404 = vmul.f32 %v5326, 1.442695
        %v5405 = vpow.pop %v5404
        %v5406 = vmul.f32 %v5327, 1.442695
        %v5407 = vpow.pop %v5406
        %v5408 = vmul.f32 %v5328, 1.442695
        %v5409 = vpow.pop %v5408
        %v5410 = vmul.f32 %v5329, 1.442695
        %v5411 = vpow.pop %v5410
        %v5412 = vmul.f32 %v5330, 1.442695
        %v5413 = vpow.pop %v5412
        %v5414 = vmul.f32 %v5331, 1.442695
        %v5415 = vpow.pop %v5414
        %v5416 = vmul.f32 %v5332, 1.442695
        %v5417 = vpow.pop %v5416
        %v5418 = vmul.f32 %v5333, 1.442695
        %v5419 = vpow.pop %v5418
        %v5420 = vmul.f32 %v5334, 1.442695
        %v5421 = vpow.pop %v5420
        %v5422 = vmul.f32 %v5335, 1.442695
        %v5423 = vpow.pop %v5422
        %v5424 = vmul.f32 %v5336, 1.442695
        %v5425 = vpow.pop %v5424
        %v5426 = vmul.f32 %v5337, 1.442695
        %v5427 = vpow.pop %v5426
        %v5428 = vmul.f32 %v5338, 1.442695
        %v5429 = vpow.pop %v5428
        %v5430 = vmul.f32 %v5339, 1.442695
        %v5431 = vpow.pop %v5430
        %v5432 = vmul.f32 %v5340, 1.442695
        %v5433 = vpow.pop %v5432
        %v5434 = vmul.f32 %v5341, 1.442695
        %v5435 = vpow.pop %v5434
        %v5436 = vmul.f32 %v5342, 1.442695
        %v5437 = vpow.pop %v5436
        %v5438 = vmul.f32 %v5343, 1.442695
        %v5439 = vpow.pop %v5438
        %v5440 = vmul.f32 %v5344, 1.442695
        %v5441 = vpow.pop %v5440
        %v5442 = vmul.f32 %v5345, 1.442695
        %v5443 = vpow.pop %v5442
        %v5444 = vmul.f32 %v5346, 1.442695
        %v5445 = vpow.pop %v5444
        %v5446 = vmul.f32 %v5347, 1.442695
        %v5447 = vpow.pop %v5446
        %v5448 = vmul.f32 %v5348, 1.442695
        %v5449 = vpow.pop %v5448
        %v5450 = vmul.f32 %v5349, 1.442695
        %v5451 = vpow.pop %v5450
        %v5452 = vmul.f32 %v5350, 1.442695
        %v5453 = vpow.pop %v5452
        %v5454 = vmul.f32 %v5351, 1.442695
        %v5455 = vpow.pop %v5454
        %v5456 = vmul.f32 %v5352, 1.442695
        %v5457 = vpow.pop %v5456
        %v5458 = vmul.f32 %v5353, 1.442695
        %v5459 = vpow.pop %v5458
        %v5460 = vmul.f32 %v5354, 1.442695
        %v5461 = vpow.pop %v5460
        %v5462 = vmul.f32 %v5355, 1.442695
        %v5463 = vpow.pop %v5462
        %v5464 = vmul.f32 %v5356, 1.442695
        %v5465 = vpow.pop %v5464
        %v5466 = vmul.f32 %v5357, 1.442695
        %v5467 = vpow.pop %v5466
        %v5468 = vmul.f32 %v5358, 1.442695
        %v5469 = vpow.pop %v5468
        %v5470 = vmul.f32 %v5359, 1.442695
        %v5471 = vpow.pop %v5470
        %v5472 = vmul.f32 %v5360, 1.442695
        %v5473 = vpow.pop %v5472
        %v5474 = vmul.f32 %v5361, 1.442695
        %v5475 = vpow.pop %v5474
        %v5476 = vmul.f32 %v5362, 1.442695
        %v5477 = vpow.pop %v5476
        %v5478 = vmul.f32 %v5363, 1.442695
        %v5479 = vpow.pop %v5478
        %v5480 = vmul.f32 %v5364, 1.442695
        %v5481 = vpow.pop %v5480
        %v5482 = vmul.f32 %v5365, 1.442695
        %v5483 = vpow.pop %v5482
        %v5484 = vmul.f32 %v5366, 1.442695
        %v5485 = vpow.pop %v5484
        %v5486 = vmul.f32 %v5367, 1.442695
        %v5487 = vpow.pop %v5486
        %v5488 = vmul.f32 %v5368, 1.442695
        %v5489 = vpow.pop %v5488
        %v5490 = vmul.f32 %v5369, 1.442695
        %v5491 = vpow.pop %v5490
        %v5492 = vmul.f32 %v5370, 1.442695
        %v5493 = vpow.pop %v5492
        %v5494 = vmul.f32 %v5371, 1.442695
        %v5495 = vpow.pop %v5494
        %v5496 = vmul.f32 %v5372, 1.442695
        %v5497 = vpow.pop %v5496
        %v5498 = vmul.f32 %v5373, 1.442695
        %v5499 = vpow.pop %v5498
        %v5500 = vmul.f32 %v5374, 1.442695
        %v5501 = vpow.pop %v5500
        %v5502 = vmul.f32 %v5375, 1.442695
        %v5503 = vpow.pop %v5502
        %v5504 = vadd.f32 %v5377, %v5379
        %5505 = vadd.xlane.f32.xlu0 %v5504
        %v5506 = vpop.xlane.xlu0 %5505
        %v5507 = vadd.f32 %v5381, %v5383
        %5508 = vadd.xlane.f32.xlu0 %v5507
        %v5509 = vpop.xlane.xlu0 %5508
        %v5510 = vadd.f32 %v5385, %v5387
        %5511 = vadd.xlane.f32.xlu0 %v5510
        %v5512 = vpop.xlane.xlu0 %5511
        %v5513 = vadd.f32 %v5389, %v5391
        %5514 = vadd.xlane.f32.xlu0 %v5513
        %v5515 = vpop.xlane.xlu0 %5514
        %v5516 = vadd.f32 %v5393, %v5395
        %5517 = vadd.xlane.f32.xlu0 %v5516
        %v5518 = vpop.xlane.xlu0 %5517
        %v5519 = vadd.f32 %v5397, %v5399
        %5520 = vadd.xlane.f32.xlu0 %v5519
        %v5521 = vpop.xlane.xlu0 %5520
        %v5522 = vadd.f32 %v5401, %v5403
        %5523 = vadd.xlane.f32.xlu0 %v5522
        %v5524 = vpop.xlane.xlu0 %5523
        %v5525 = vadd.f32 %v5405, %v5407
        %5526 = vadd.xlane.f32.xlu0 %v5525
        %v5527 = vpop.xlane.xlu0 %5526
        %v5528 = vadd.f32 %v5409, %v5411
        %5529 = vadd.xlane.f32.xlu0 %v5528
        %v5530 = vpop.xlane.xlu0 %5529
        %v5531 = vadd.f32 %v5413, %v5415
        %5532 = vadd.xlane.f32.xlu0 %v5531
        %v5533 = vpop.xlane.xlu0 %5532
        %v5534 = vadd.f32 %v5417, %v5419
        %5535 = vadd.xlane.f32.xlu0 %v5534
        %v5536 = vpop.xlane.xlu0 %5535
        %v5537 = vadd.f32 %v5421, %v5423
        %5538 = vadd.xlane.f32.xlu0 %v5537
        %v5539 = vpop.xlane.xlu0 %5538
        %v5540 = vadd.f32 %v5425, %v5427
        %5541 = vadd.xlane.f32.xlu0 %v5540
        %v5542 = vpop.xlane.xlu0 %5541
        %v5543 = vadd.f32 %v5429, %v5431
        %5544 = vadd.xlane.f32.xlu0 %v5543
        %v5545 = vpop.xlane.xlu0 %5544
        %v5546 = vadd.f32 %v5433, %v5435
        %5547 = vadd.xlane.f32.xlu0 %v5546
        %v5548 = vpop.xlane.xlu0 %5547
        %v5549 = vadd.f32 %v5437, %v5439
        %5550 = vadd.xlane.f32.xlu0 %v5549
        %v5551 = vpop.xlane.xlu0 %5550
        %v5552 = vadd.f32 %v5441, %v5443
        %5553 = vadd.xlane.f32.xlu0 %v5552
        %v5554 = vpop.xlane.xlu0 %5553
        %v5555 = vadd.f32 %v5445, %v5447
        %5556 = vadd.xlane.f32.xlu0 %v5555
        %v5557 = vpop.xlane.xlu0 %5556
        %v5558 = vadd.f32 %v5449, %v5451
        %5559 = vadd.xlane.f32.xlu0 %v5558
        %v5560 = vpop.xlane.xlu0 %5559
        %v5561 = vadd.f32 %v5453, %v5455
        %5562 = vadd.xlane.f32.xlu0 %v5561
        %v5563 = vpop.xlane.xlu0 %5562
        %v5564 = vadd.f32 %v5457, %v5459
        %5565 = vadd.xlane.f32.xlu0 %v5564
        %v5566 = vpop.xlane.xlu0 %5565
        %v5567 = vadd.f32 %v5461, %v5463
        %5568 = vadd.xlane.f32.xlu0 %v5567
        %v5569 = vpop.xlane.xlu0 %5568
        %v5570 = vadd.f32 %v5465, %v5467
        %5571 = vadd.xlane.f32.xlu0 %v5570
        %v5572 = vpop.xlane.xlu0 %5571
        %v5573 = vadd.f32 %v5469, %v5471
        %5574 = vadd.xlane.f32.xlu0 %v5573
        %v5575 = vpop.xlane.xlu0 %5574
        %v5576 = vadd.f32 %v5473, %v5475
        %5577 = vadd.xlane.f32.xlu0 %v5576
        %v5578 = vpop.xlane.xlu0 %5577
        %v5579 = vadd.f32 %v5477, %v5479
        %5580 = vadd.xlane.f32.xlu0 %v5579
        %v5581 = vpop.xlane.xlu0 %5580
        %v5582 = vadd.f32 %v5481, %v5483
        %5583 = vadd.xlane.f32.xlu0 %v5582
        %v5584 = vpop.xlane.xlu0 %5583
        %v5585 = vadd.f32 %v5485, %v5487
        %5586 = vadd.xlane.f32.xlu0 %v5585
        %v5587 = vpop.xlane.xlu0 %5586
        %v5588 = vadd.f32 %v5489, %v5491
        %5589 = vadd.xlane.f32.xlu0 %v5588
        %v5590 = vpop.xlane.xlu0 %5589
        %v5591 = vadd.f32 %v5493, %v5495
        %5592 = vadd.xlane.f32.xlu0 %v5591
        %v5593 = vpop.xlane.xlu0 %5592
        %v5594 = vadd.f32 %v5497, %v5499
        %5595 = vadd.xlane.f32.xlu0 %v5594
        %v5596 = vpop.xlane.xlu0 %5595
        %v5597 = vadd.f32 %v5501, %v5503
        %5598 = vadd.xlane.f32.xlu0 %v5597
        %v5599 = vpop.xlane.xlu0 %5598
        %v5600 = vrcp.pop %v5506
        %v5601 = vrcp.pop %v5509
        %v5602 = vrcp.pop %v5512
        %v5603 = vrcp.pop %v5515
        %v5604 = vrcp.pop %v5518
        %v5605 = vrcp.pop %v5521
        %v5606 = vrcp.pop %v5524
        %v5607 = vrcp.pop %v5527
        %v5608 = vrcp.pop %v5530
        %v5609 = vrcp.pop %v5533
        %v5610 = vrcp.pop %v5536
        %v5611 = vrcp.pop %v5539
        %v5612 = vrcp.pop %v5542
        %v5613 = vrcp.pop %v5545
        %v5614 = vrcp.pop %v5548
        %v5615 = vrcp.pop %v5551
        %v5616 = vrcp.pop %v5554
        %v5617 = vrcp.pop %v5557
        %v5618 = vrcp.pop %v5560
        %v5619 = vrcp.pop %v5563
        %v5620 = vrcp.pop %v5566
        %v5621 = vrcp.pop %v5569
        %v5622 = vrcp.pop %v5572
        %v5623 = vrcp.pop %v5575
        %v5624 = vrcp.pop %v5578
        %v5625 = vrcp.pop %v5581
        %v5626 = vrcp.pop %v5584
        %v5627 = vrcp.pop %v5587
        %v5628 = vrcp.pop %v5590
        %v5629 = vrcp.pop %v5593
        %v5630 = vrcp.pop %v5596
        %v5631 = vrcp.pop %v5599
        %v5632 = vmul.f32 %v5377, %v5600
        %v5633 = vmul.f32 %v5379, %v5600
        %v5634 = vmul.f32 %v5381, %v5601
        %v5635 = vmul.f32 %v5383, %v5601
        %v5636 = vmul.f32 %v5385, %v5602
        %v5637 = vmul.f32 %v5387, %v5602
        %v5638 = vmul.f32 %v5389, %v5603
        %v5639 = vmul.f32 %v5391, %v5603
        %v5640 = vmul.f32 %v5393, %v5604
        %v5641 = vmul.f32 %v5395, %v5604
        %v5642 = vmul.f32 %v5397, %v5605
        %v5643 = vmul.f32 %v5399, %v5605
        %v5644 = vmul.f32 %v5401, %v5606
        %v5645 = vmul.f32 %v5403, %v5606
        %v5646 = vmul.f32 %v5405, %v5607
        %v5647 = vmul.f32 %v5407, %v5607
        %v5648 = vmul.f32 %v5409, %v5608
        %v5649 = vmul.f32 %v5411, %v5608
        %v5650 = vmul.f32 %v5413, %v5609
        %v5651 = vmul.f32 %v5415, %v5609
        %v5652 = vmul.f32 %v5417, %v5610
        %v5653 = vmul.f32 %v5419, %v5610
        %v5654 = vmul.f32 %v5421, %v5611
        %v5655 = vmul.f32 %v5423, %v5611
        %v5656 = vmul.f32 %v5425, %v5612
        %v5657 = vmul.f32 %v5427, %v5612
        %v5658 = vmul.f32 %v5429, %v5613
        %v5659 = vmul.f32 %v5431, %v5613
        %v5660 = vmul.f32 %v5433, %v5614
        %v5661 = vmul.f32 %v5435, %v5614
        %v5662 = vmul.f32 %v5437, %v5615
        %v5663 = vmul.f32 %v5439, %v5615
        %v5664 = vmul.f32 %v5441, %v5616
        %v5665 = vmul.f32 %v5443, %v5616
        %v5666 = vmul.f32 %v5445, %v5617
        %v5667 = vmul.f32 %v5447, %v5617
        %v5668 = vmul.f32 %v5449, %v5618
        %v5669 = vmul.f32 %v5451, %v5618
        %v5670 = vmul.f32 %v5453, %v5619
        %v5671 = vmul.f32 %v5455, %v5619
        %v5672 = vmul.f32 %v5457, %v5620
        %v5673 = vmul.f32 %v5459, %v5620
        %v5674 = vmul.f32 %v5461, %v5621
        %v5675 = vmul.f32 %v5463, %v5621
        %v5676 = vmul.f32 %v5465, %v5622
        %v5677 = vmul.f32 %v5467, %v5622
        %v5678 = vmul.f32 %v5469, %v5623
        %v5679 = vmul.f32 %v5471, %v5623
        %v5680 = vmul.f32 %v5473, %v5624
        %v5681 = vmul.f32 %v5475, %v5624
        %v5682 = vmul.f32 %v5477, %v5625
        %v5683 = vmul.f32 %v5479, %v5625
        %v5684 = vmul.f32 %v5481, %v5626
        %v5685 = vmul.f32 %v5483, %v5626
        %v5686 = vmul.f32 %v5485, %v5627
        %v5687 = vmul.f32 %v5487, %v5627
        %v5688 = vmul.f32 %v5489, %v5628
        %v5689 = vmul.f32 %v5491, %v5628
        %v5690 = vmul.f32 %v5493, %v5629
        %v5691 = vmul.f32 %v5495, %v5629
        %v5692 = vmul.f32 %v5497, %v5630
        %v5693 = vmul.f32 %v5499, %v5630
        %v5694 = vmul.f32 %v5501, %v5631
        %v5695 = vmul.f32 %v5503, %v5631
        %v5696 = vpack.c.bf16 %v5634, %v5632
        %v5697 = vpack.c.bf16 %v5635, %v5633
        %v5698 = vpack.c.bf16 %v5638, %v5636
        %v5699 = vpack.c.bf16 %v5639, %v5637
        %v5700 = vpack.c.bf16 %v5642, %v5640
        %v5701 = vpack.c.bf16 %v5643, %v5641
        %v5702 = vpack.c.bf16 %v5646, %v5644
        %v5703 = vpack.c.bf16 %v5647, %v5645
        %v5704 = vpack.c.bf16 %v5650, %v5648
        %v5705 = vpack.c.bf16 %v5651, %v5649
        %v5706 = vpack.c.bf16 %v5654, %v5652
        %v5707 = vpack.c.bf16 %v5655, %v5653
        %v5708 = vpack.c.bf16 %v5658, %v5656
        %v5709 = vpack.c.bf16 %v5659, %v5657
        %v5710 = vpack.c.bf16 %v5662, %v5660
        %v5711 = vpack.c.bf16 %v5663, %v5661
        %v5712 = vpack.c.bf16 %v5666, %v5664
        %v5713 = vpack.c.bf16 %v5667, %v5665
        %v5714 = vpack.c.bf16 %v5670, %v5668
        %v5715 = vpack.c.bf16 %v5671, %v5669
        %v5716 = vpack.c.bf16 %v5674, %v5672
        %v5717 = vpack.c.bf16 %v5675, %v5673
        %v5718 = vpack.c.bf16 %v5678, %v5676
        %v5719 = vpack.c.bf16 %v5679, %v5677
        %v5720 = vpack.c.bf16 %v5682, %v5680
        %v5721 = vpack.c.bf16 %v5683, %v5681
        %v5722 = vpack.c.bf16 %v5686, %v5684
        %v5723 = vpack.c.bf16 %v5687, %v5685
        %v5724 = vpack.c.bf16 %v5690, %v5688
        %v5725 = vpack.c.bf16 %v5691, %v5689
        %v5726 = vpack.c.bf16 %v5694, %v5692
        %v5727 = vpack.c.bf16 %v5695, %v5693
        %5728 = vmatprep.subr.bf16.mxu0 %v5697
        %5729 = vmatpush1.bf16.xpose.msra.mxu0 %v5696
        %5730 = vmatprep.subr.bf16.mxu0 %v5699
        %5731 = vmatpush1.bf16.xpose.msra.mxu0 %v5698
        %5732 = vmatprep.subr.bf16.mxu0 %v5701
        %5733 = vmatpush1.bf16.xpose.msra.mxu0 %v5700
        %5734 = vmatprep.subr.bf16.mxu0 %v5703
        %5735 = vmatpush1.bf16.xpose.msra.mxu0 %v5702
        %5736 = vmatprep.subr.bf16.mxu0 %v5705
        %5737 = vmatpush1.bf16.xpose.msra.mxu0 %v5704
        %5738 = vmatprep.subr.bf16.mxu0 %v5707
        %5739 = vmatpush1.bf16.xpose.msra.mxu0 %v5706
        %5740 = vmatprep.subr.bf16.mxu0 %v5709
        %5741 = vmatpush1.bf16.xpose.msra.mxu0 %v5708
        %5742 = vmatprep.subr.bf16.mxu0 %v5711
        %5743 = vmatpush1.bf16.xpose.msra.mxu0 %v5710
        %5744 = vmatprep.subr.bf16.mxu0 %v5713
        %5745 = vmatpush1.bf16.xpose.msra.mxu0 %v5712
        %5746 = vmatprep.subr.bf16.mxu0 %v5715
        %5747 = vmatpush1.bf16.xpose.msra.mxu0 %v5714
        %5748 = vmatprep.subr.bf16.mxu0 %v5717
        %5749 = vmatpush1.bf16.xpose.msra.mxu0 %v5716
        %5750 = vmatprep.subr.bf16.mxu0 %v5719
        %5751 = vmatpush1.bf16.xpose.msra.mxu0 %v5718
        %5752 = vmatprep.subr.bf16.mxu0 %v5721
        %5753 = vmatpush1.bf16.xpose.msra.mxu0 %v5720
        %5754 = vmatprep.subr.bf16.mxu0 %v5723
        %5755 = vmatpush1.bf16.xpose.msra.mxu0 %v5722
        %5756 = vmatprep.subr.bf16.mxu0 %v5725
        %5757 = vmatpush1.bf16.xpose.msra.mxu0 %v5724
        %5758 = vmatprep.subr.bf16.mxu0 %v5727
        %5759 = vmatpush1.bf16.xpose.msra.mxu0 %v5726
        %5760 = vmatprep.mubr.bf16.mxu0 %v4972
        %5761 = vmatmul.mubr.bf16.gmra.mrb[0].mxu0 %v4971
        %v5762 = vpop.f32.mrb[0].mxu0
        %v5763 = vadd.f32 0.0, %v5762
        %v5764 = vpop.f32.mrb[0].mxu0
        %v5765 = vadd.f32 0.0, %v5764
        %v5766 = vpop.f32.mrb[0].mxu0
        %v5767 = vadd.f32 0.0, %v5766
        %v5768 = vpop.f32.mrb[0].mxu0
        %v5769 = vadd.f32 0.0, %v5768
        %5770 = vmatprep.mubr.bf16.mxu0 %v4974
        %5771 = vmatmul.mubr.bf16.gmra.mrb[0].mxu0 %v4973
        %v5772 = vpop.f32.mrb[0].mxu0
        %v5773 = vadd.f32 0.0, %v5772
        %v5774 = vpop.f32.mrb[0].mxu0
        %v5775 = vadd.f32 0.0, %v5774
        %v5776 = vpop.f32.mrb[0].mxu0
        %v5777 = vadd.f32 0.0, %v5776
        %v5778 = vpop.f32.mrb[0].mxu0
        %v5779 = vadd.f32 0.0, %v5778
        %5780 = vdwg.mxu0
        %s5781 = scalar_lea.vmem %s5, 12
        %v5782 = vld [vmem:[%s5781] sm:$0xf]
        %v5784 = vsel %vm929, %v5782, 0
        %5786 = vmatprep.subr.mxu0 %v5765
        %5787 = vmatpush1.msra.mxu0 %v5763
        %5788 = vmatprep.subr.mxu0 %v5769
        %5789 = vmatpush1.msra.mxu0 %v5767
        %5790 = vmatprep.subr.mxu0 %v5775
        %5791 = vmatpush1.msra.mxu0 %v5773
        %5792 = vmatprep.subr.mxu0 %v5779
        %5793 = vmatpush1.msra.mxu0 %v5777
        %5794 = vmatprep.subr.mxu0 0.0
        %5795 = vmatpush1.msra.mxu0 0.0
        %5796 = vmatprep.subr.mxu0 0.0
        %5797 = vmatpush1.msra.mxu0 0.0
        %5798 = vmatprep.subr.mxu0 0.0
        %5799 = vmatpush1.msra.mxu0 0.0
        %5800 = vmatprep.subr.mxu0 0.0
        %5801 = vmatpush1.msra.mxu0 0.0
        %5802 = vmatprep.subr.mxu0 0.0
        %5803 = vmatpush1.msra.mxu0 0.0
        %5804 = vmatprep.subr.mxu0 0.0
        %5805 = vmatpush1.msra.mxu0 0.0
        %5806 = vmatprep.subr.mxu0 0.0
        %5807 = vmatpush1.msra.mxu0 0.0
        %5808 = vmatprep.subr.mxu0 0.0
        %5809 = vmatpush1.msra.mxu0 0.0
        %5810 = vmatprep.subr.mxu0 0.0
        %5811 = vmatpush1.msra.mxu0 0.0
        %5812 = vmatprep.subr.mxu0 0.0
        %5813 = vmatpush1.msra.mxu0 0.0
        %5814 = vmatprep.subr.mxu0 0.0
        %5815 = vmatpush1.msra.mxu0 0.0
        %5816 = vmatprep.subr.mxu0 0.0
        %5817 = vmatpush1.msra.mxu0 0.0
        %5818 = vmatprep.subr.mxu0 0.0
        %5819 = vmatpush1.msra.mxu0 0.0
        %5820 = vmatprep.subr.mxu0 0.0
        %5821 = vmatpush1.msra.mxu0 0.0
        %5822 = vmatprep.subr.mxu0 0.0
        %5823 = vmatpush1.msra.mxu0 0.0
        %5824 = vmatprep.subr.mxu0 0.0
        %5825 = vmatpush1.msra.mxu0 0.0
        %5826 = vmatprep.subr.mxu0 0.0
        %5827 = vmatpush1.msra.mxu0 0.0
        %5828 = vmatprep.subr.mxu0 0.0
        %5829 = vmatpush1.msra.mxu0 0.0
        %5830 = vmatprep.subr.mxu0 0.0
        %5831 = vmatpush1.msra.mxu0 0.0
        %5832 = vmatprep.subr.mxu0 0.0
        %5833 = vmatpush1.msra.mxu0 0.0
        %5834 = vmatprep.subr.mxu0 0.0
        %5835 = vmatpush1.msra.mxu0 0.0
        %5836 = vmatprep.subr.mxu0 0.0
        %5837 = vmatpush1.msra.mxu0 0.0
        %5838 = vmatprep.subr.mxu0 0.0
        %5839 = vmatpush1.msra.mxu0 0.0
        %5840 = vmatprep.subr.mxu0 0.0
        %5841 = vmatpush1.msra.mxu0 0.0
        %5842 = vmatprep.subr.mxu0 0.0
        %5843 = vmatpush1.msra.mxu0 0.0
        %5844 = vmatprep.subr.mxu0 0.0
        %5845 = vmatpush1.msra.mxu0 0.0
        %5846 = vmatprep.subr.mxu0 0.0
        %5847 = vmatpush1.msra.mxu0 0.0
        %5848 = vmatprep.subr.mxu0 0.0
        %5849 = vmatpush1.msra.mxu0 0.0
        %5850 = vmatprep.mubr.f32.mxu0 0.0
        %5851 = vmatmul.mubr.f32.gmra.mrb[0].mxu0 %v5784
        %v5852 = vpop.f32.mrb[0].mxu0
        %v5853 = vadd.f32 0.0, %v5852
        %v5854 = vpop.f32.mrb[0].mxu0
        %v5855 = vadd.f32 0.0, %v5854
        %5856 = vdwg.mxu0
        %v5857 = vadd.f32 %v4507, %v5853
        %v5858 = vadd.f32 %v4508, %v5855
        %v5859 = vld [vmem:[%s6] sm:$0xf]
        %5861 = vset.pattern.permute.xlu0 0
        %5862 = vperm.xlu0 %5861, %v5859
        %v5863 = vpop.permute.xlu0 %5862
        %v5865 = vadd.f32 %v5857, %v5863
        %v5866 = vadd.f32 %v5858, %v5863
        %v5869 = vcombine.low %v5865, %v5866
        %5871 = vst [vmem:[%s311] sm:$0xff] %v5869
        %s5872 = sand.u32 %s202, 1
        %s5873 = scalar_lea.sflag [#allocation3], %s5872
        %s5874 = sand.u32 %s202, 1
        %s5875 = smul.addr %s5874, 8
        %s5876 = scalar_lea.vmem [#allocation2], %s5875
        // Predicated region
        $region49: #{tpu_custom_call.1} parent=47 // pred_check
          %p5877 = pneg %p212
        $region50: #{tpu_custom_call.1} parent=47 // pred_check_branch
          %5879 = sbr.rel (%p5877) target = $region52
        $region51: #{tpu_custom_call.1} parent=47 // pred_region
          %s5880 = smul.u32 2, %s26
          %s5882 = ssub.s32 128, 128
          %5883 = vsyncadd %s5873, %s5882
          %s5884 = smul.addr %s25, 2
          %s5885 = sadd.s32 %s5880, %s5884
          %s5886 = smul.addr %s5885, 64
          %s5887 = scalar_lea.hbm %s7, %s5886
          %s5889 = sshll.u32 %s5876, 4
          %s5890 = int_to_ptr.vmem [resolvable:$true] %s5889
          %5892 = dma.vmem_to_hbm [thread:$0]  %s5890, 128, %s5887, %s5873
        $region52: #{tpu_custom_call.1} parent=47 // pred_fallthru
          _
      $region48: #{tpu_custom_call.1} parent=5 // pred_fallthru
        _
      %p5893 = scmp.le.s32.totalorder 2, %s16
      // Predicated region
      $region53: #{tpu_custom_call.1} parent=5 // pred_check
        %p5894 = pneg %p5893
      $region54: #{tpu_custom_call.1} parent=5 // pred_check_branch
        %5896 = sbr.rel (%p5894) target = $region56
      $region55: #{tpu_custom_call.1} parent=5 // pred_region
        %s5897 = ssub.s32 %s16, 2
        // Predicated region
        $region57: #{tpu_custom_call.1} parent=55 // pred_check
          %p5898 = pneg %p218
        $region58: #{tpu_custom_call.1} parent=55 // pred_check_branch
          %5900 = sbr.rel (%p5898) target = $region60
        $region59: #{tpu_custom_call.1} parent=55 // pred_region
          %s5901 = sand.u32 %s203, 1
          %s5902 = scalar_lea.sflag [#allocation3], %s5901
          %s5903 = sand.u32 %s203, 1
          %s5904 = smul.addr %s5903, 8
          %s5905 = scalar_lea.vmem [#allocation2], %s5904
          %5906 = dma.done %s5902, 128
        $region60: #{tpu_custom_call.1} parent=55 // pred_fallthru
          _
      $region56: #{tpu_custom_call.1} parent=5 // pred_fallthru
        _
    $region6: #{tpu_custom_call.1} parent=1 // loop_footer
      %s20 = sadd.s32 1, %s16
    $region7: #{tpu_custom_call.1} parent=1 // loop_footer_branch
      %15 = sbr.rel target = $region3
    $region8: #{tpu_custom_call.1} parent=1 // loop_exit
      _
    %5907 = vsyncpa [#allocation3], 1
    %s5908 = scalar_lea.sflag [#allocation3], 1
    %5909 = vsyncpa %s5908, 1

</llo_original>
